<compile_context>
chip_gen: v7x
topology: tpu7x:2x2x1
jax: 0.10.0
libtpu: 0.0.40
codegen_flags: <defaults>
</compile_context>

<pallas_src>
import functools
import math

import jax
import jax.numpy as jnp
from jax import lax
from jax.experimental import pallas as pl
from jax.experimental.pallas import tpu as pltpu

num_classes = 10
C1_PAD = 128          # lane-dense padding of conv1's output channels (6 -> 128)


# ----------------------------- Pallas kernels ------------------------------ #

def _conv1_pool_kernel(a_ref, w_ref, b_ref, o_ref):
    """Fused conv1 + bias + ReLU + 2x2 max-pool.

    a_ref: (2, 2, M1, 75)  phase-grouped im2col rows (rows ordered (n, yh, xh))
    w_ref: (75, C1_PAD)    conv1 weights, output channels zero-padded to 128
    b_ref: (1, C1_PAD)
    o_ref: (M1, C1_PAD)    pooled ReLU(conv1) activations (lane-dense store)
    """
    w = w_ref[...]
    b = b_ref[...]

    def phase(py, px):
        h = jnp.dot(a_ref[py, px], w, preferred_element_type=jnp.float32) + b
        return jnp.maximum(h, 0.0)

    # max over the four 2x2-pool phases == 2x2 max-pool of ReLU(conv1).
    o_ref[...] = jnp.maximum(jnp.maximum(phase(0, 0), phase(0, 1)),
                             jnp.maximum(phase(1, 0), phase(1, 1)))


def _conv2_pool_fc_kernel(a_ref, w2_ref, b2_ref, w1r_ref, fb1_ref,
                          fw2_ref, fb2_ref, fw3_ref, fb3_ref,
                          o_ref, p2_scr, *, nb):
    """Fused conv2 + bias + ReLU + 2x2 max-pool + fc1 + fc2 + fc3.

    a_ref : (2, 2, 25*nb, 150)  phase-grouped im2col rows, rows ordered (y,x,n)
    w2_ref: (150, 16), b2_ref: (1, 16)
    w1r_ref: (25, 16, 120)  fc1 weights regrouped per pooled spatial position
                            (PyTorch (c,h,w) flatten order folded in at init)
    fb1_ref: (1, 120), fw2_ref: (120, 84), fb2_ref: (1, 84)
    fw3_ref: (84, 10), fb3_ref: (1, 10)
    o_ref : (nb, 10)
    p2_scr: VMEM scratch (25*nb, 16) holding the pooled conv2 activations.
    """
    w2 = w2_ref[...]
    b2 = b2_ref[...]

    def phase(qy, qx):
        h = jnp.dot(a_ref[qy, qx], w2, preferred_element_type=jnp.float32) + b2
        return jnp.maximum(h, 0.0)

    # Pooled ReLU(conv2): rows ordered (y2h, x2h, n), 16 channels on lanes.
    p2_scr[...] = jnp.maximum(jnp.maximum(phase(0, 0), phase(0, 1)),
                              jnp.maximum(phase(1, 0), phase(1, 1)))

    # fc1: contract over the 25 pooled spatial positions x 16 channels.
    acc = jnp.dot(p2_scr[0:nb, :], w1r_ref[0],
                  preferred_element_type=jnp.float32) + fb1_ref[...]
    for hw in range(1, 25):
        acc = acc + jnp.dot(p2_scr[hw * nb:(hw + 1) * nb, :], w1r_ref[hw],
                            preferred_element_type=jnp.float32)
    h1 = jnp.maximum(acc, 0.0)                                     # (nb, 120)

    h2 = jnp.dot(h1, fw2_ref[...], preferred_element_type=jnp.float32)
    h2 = jnp.maximum(h2 + fb2_ref[...], 0.0)                       # (nb, 84)

    o_ref[...] = (jnp.dot(h2, fw3_ref[...], preferred_element_type=jnp.float32)
                  + fb3_ref[...])                                  # (nb, 10)


# ------------------- XLA glue: phase-grouped im2col ------------------------ #

def _phase_im2col_conv1(x):
    """x: (N,3,32,32) NCHW -> (2, 2, N*14*14, 75), K ordered (kh, kw, c)."""
    n = x.shape[0]
    pats = [x[:, :, i:i + 28, j:j + 28] for i in range(5) for j in range(5)]
    p = jnp.stack(pats, axis=0)                       # (25, N, 3, 28, 28)
    p = p.reshape(25, n, 3, 14, 2, 14, 2)             # (k, n, c, yh, py, xh, px)
    p = p.transpose(4, 6, 1, 3, 5, 0, 2)              # (py, px, n, yh, xh, k, c)
    return p.reshape(2, 2, n * 14 * 14, 75)


def _phase_im2col_conv2(p1):
    """p1: (N,14,14,6) NHWC -> (2, 2, 25*N, 150), rows ordered (y2h, x2h, n)."""
    n = p1.shape[0]
    pats = [p1[:, i:i + 10, j:j + 10, :] for i in range(5) for j in range(5)]
    q = jnp.stack(pats, axis=0)                       # (25, N, 10, 10, 6)
    q = q.reshape(25, n, 5, 2, 5, 2, 6)               # (k, n, y2h, qy, x2h, qx, c)
    q = q.transpose(3, 5, 2, 4, 1, 0, 6)              # (qy, qx, y2h, x2h, n, k, c)
    return q.reshape(2, 2, 25 * n, 150)


# ------------------------------- Parameters -------------------------------- #

def _init_linear(key, fan_in, fan_out):
    kw, kb = jax.random.split(key)
    bound = 1.0 / math.sqrt(fan_in)
    w = jax.random.uniform(kw, (fan_out, fan_in), jnp.float32, -bound, bound)
    b = jax.random.uniform(kb, (fan_out,), jnp.float32, -bound, bound)
    return w, b


def _init_conv(key, out_c, in_c, k):
    kw, kb = jax.random.split(key)
    fan_in = in_c * k * k
    bound = 1.0 / math.sqrt(fan_in)
    w = jax.random.uniform(kw, (out_c, in_c, k, k), jnp.float32, -bound, bound)
    b = jax.random.uniform(kb, (out_c,), jnp.float32, -bound, bound)
    return w, b


def init_params(key):
    ks = jax.random.split(key, 5)
    return {
        "conv1": _init_conv(ks[0], 6, 3, 5),
        "conv2": _init_conv(ks[1], 16, 6, 5),
        "fc1": _init_linear(ks[2], 16 * 5 * 5, 120),
        "fc2": _init_linear(ks[3], 120, 84),
        "fc3": _init_linear(ks[4], 84, num_classes),
    }


def prepare_params(params):
    """One-time repack of PyTorch-layout params into kernel-ready layouts."""
    w1, b1 = params["conv1"]        # (6,3,5,5), (6,)
    w2, b2 = params["conv2"]        # (16,6,5,5), (16,)
    f1w, f1b = params["fc1"]        # (120,400), (120,)
    f2w, f2b = params["fc2"]        # (84,120), (84,)
    f3w, f3b = params["fc3"]        # (10,84), (10,)

    # conv1 weight as (75, C1_PAD) matmul matrix, K ordered (kh, kw, c).
    w1m = jnp.transpose(w1, (2, 3, 1, 0)).reshape(75, 6)
    w1m = jnp.zeros((75, C1_PAD), jnp.float32).at[:, :6].set(w1m)
    b1v = jnp.zeros((1, C1_PAD), jnp.float32).at[0, :6].set(b1)

    # conv2 weight as (150, 16), K ordered (kh, kw, c).
    w2m = jnp.transpose(w2, (2, 3, 1, 0)).reshape(150, 16)
    b2v = b2.reshape(1, 16)

    # fc1 weights regrouped per pooled spatial position: (25, 16, 120).  This
    # folds PyTorch's (c, h, w) flatten order into the weights once, at init.
    w1r = jnp.transpose(f1w.reshape(120, 16, 5, 5), (2, 3, 1, 0)).reshape(25, 16, 120)
    fb1 = f1b.reshape(1, 120)

    fw2 = f2w.T                     # (120, 84) pre-transposed
    fb2 = f2b.reshape(1, 84)
    fw3 = f3w.T                     # (84, 10) pre-transposed
    fb3 = f3b.reshape(1, num_classes)
    return (w1m, b1v, w2m, b2v, w1r, fb1, fw2, fb2, fw3, fb3)


# --------------------------------- Forward --------------------------------- #

@jax.jit
def net_forward(kparams, x):
    (w1m, b1v, w2m, b2v, w1r, fb1, fw2, fb2, fw3, fb3) = kparams
    nb = x.shape[0]
    assert x.shape[1:] == (3, 32, 32)

    vmem = pl.BlockSpec(memory_space=pltpu.MemorySpace.VMEM)

    # Kernel 1: conv1 + bias + ReLU + 2x2 pool (lane-dense 128-ch output).
    a1 = _phase_im2col_conv1(x)                                   # (2,2,392,75)
    m1 = nb * 14 * 14
    pooled1 = pl.pallas_call(
        _conv1_pool_kernel,
        out_shape=jax.ShapeDtypeStruct((m1, C1_PAD), jnp.float32),
        in_specs=[vmem, vmem, vmem],
        out_specs=vmem,
    )(a1, w1m, b1v)

    # Tiny XLA glue: window extraction for conv2 (channels-last).
    p1 = pooled1[:, :6].reshape(nb, 14, 14, 6)
    a2 = _phase_im2col_conv2(p1)                                  # (2,2,50,150)

    # Kernel 2: conv2 + bias + ReLU + pool + fc1 + ReLU + fc2 + ReLU + fc3.
    kern2 = functools.partial(_conv2_pool_fc_kernel, nb=nb)
    out = pl.pallas_call(
        kern2,
        out_shape=jax.ShapeDtypeStruct((nb, num_classes), jnp.float32),
        in_specs=[vmem] * 9,
        out_specs=vmem,
        scratch_shapes=[pltpu.VMEM((25 * nb, 16), jnp.float32)],
    )(a2, w2m, b2v, w1r, fb1, fw2, fb2, fw3, fb3)
    return out


# -------------------------- Plain-XLA reference ----------------------------- #

def reference_forward(params, x):
    w1, b1 = params["conv1"]
    w2, b2 = params["conv2"]
    f1w, f1b = params["fc1"]
    f2w, f2b = params["fc2"]
    f3w, f3b = params["fc3"]
    hi = lax.Precision.HIGHEST

    def conv(z, w, b):
        y = lax.conv_general_dilated(z, w, (1, 1), "VALID",
                                     dimension_numbers=("NCHW", "OIHW", "NCHW"),
                                     precision=hi)
        return y + b[None, :, None, None]

    def pool(z):
        return lax.reduce_window(z, -jnp.inf, lax.max,
                                 (1, 1, 2, 2), (1, 1, 2, 2), "VALID")

    h = pool(jax.nn.relu(conv(x, w1, b1)))
    h = pool(jax.nn.relu(conv(h, w2, b2)))
    h = h.reshape(h.shape[0], -1)
    h = jax.nn.relu(jnp.dot(h, f1w.T, precision=hi) + f1b)
    h = jax.nn.relu(jnp.dot(h, f2w.T, precision=hi) + f2b)
    return jnp.dot(h, f3w.T, precision=hi) + f3b


if __name__ == "__main__":
    key = jax.random.PRNGKey(0)
    kx, kp = jax.random.split(key)
    x = jax.random.normal(kx, (2, 3, 32, 32), dtype=jnp.float32)

    params = init_params(kp)
    kparams = prepare_params(params)       # one-time weight repack ("at init")

    out = net_forward(kparams, x)
    out = jax.block_until_ready(out)
    assert out.shape == (2, num_classes)

    # Sanity check against a plain-XLA reference of the same module.
    ref = jax.block_until_ready(reference_forward(params, x))
    max_diff = float(jnp.max(jnp.abs(out - ref)))
    assert max_diff < 5e-2, f"mismatch vs reference: max |diff| = {max_diff}"

    print("KERNEL_OK")
</pallas_src>

<mosaic_0001>
module attributes {stable_mosaic.version = 11 : i64} {
  func.func @_conv1_pool_kernel(%arg0: memref<2x2x392x75xf32, #tpu.memory_space<vmem>>, %arg1: memref<75x128xf32, #tpu.memory_space<vmem>>, %arg2: memref<1x128xf32, #tpu.memory_space<vmem>>, %arg3: memref<392x128xf32, #tpu.memory_space<vmem>>) attributes {dimension_semantics = [], scalar_prefetch = 0 : i64, scratch_operands = 0 : i64, tpu.core_type = #tpu.core_type<tc>} {
    %c0 = arith.constant 0 : index
    %c0_0 = arith.constant 0 : index
    %0 = vector.load %arg1[%c0, %c0_0] : memref<75x128xf32, #tpu.memory_space<vmem>>, vector<75x128xf32>
    %c0_1 = arith.constant 0 : index
    %c0_2 = arith.constant 0 : index
    %1 = vector.load %arg2[%c0_1, %c0_2] : memref<1x128xf32, #tpu.memory_space<vmem>>, vector<1x128xf32>
    %c0_3 = arith.constant 0 : index
    %c0_4 = arith.constant 0 : index
    %c0_5 = arith.constant 0 : index
    %c0_6 = arith.constant 0 : index
    %2 = vector.load %arg0[%c0_3, %c0_4, %c0_5, %c0_6] : memref<2x2x392x75xf32, #tpu.memory_space<vmem>>, vector<1x1x392x75xf32>
    %3 = vector.shape_cast %2 : vector<1x1x392x75xf32> to vector<392x75xf32>
    %cst = arith.constant dense<0.000000e+00> : vector<392x128xf32>
    %4 = tpu.matmul %3, %0, %cst {dimension_numbers = #tpu.dot_dimension_numbers<[1], [0], [0], [1], [0, 0, 1, 1], [], []>} : vector<392x75xf32>, vector<75x128xf32>, vector<392x128xf32> -> vector<392x128xf32>
    %5 = vector.broadcast %1 : vector<1x128xf32> to vector<392x128xf32>
    %6 = arith.addf %4, %5 : vector<392x128xf32>
    %cst_7 = arith.constant 0.000000e+00 : f32
    %7 = vector.broadcast %cst_7 : f32 to vector<392x128xf32>
    %8 = arith.maximumf %6, %7 : vector<392x128xf32>
    %c0_8 = arith.constant 0 : index
    %c1 = arith.constant 1 : index
    %c0_9 = arith.constant 0 : index
    %c0_10 = arith.constant 0 : index
    %9 = vector.load %arg0[%c0_8, %c1, %c0_9, %c0_10] : memref<2x2x392x75xf32, #tpu.memory_space<vmem>>, vector<1x1x392x75xf32>
    %10 = vector.shape_cast %9 : vector<1x1x392x75xf32> to vector<392x75xf32>
    %cst_11 = arith.constant dense<0.000000e+00> : vector<392x128xf32>
    %11 = tpu.matmul %10, %0, %cst_11 {dimension_numbers = #tpu.dot_dimension_numbers<[1], [0], [0], [1], [0, 0, 1, 1], [], []>} : vector<392x75xf32>, vector<75x128xf32>, vector<392x128xf32> -> vector<392x128xf32>
    %12 = vector.broadcast %1 : vector<1x128xf32> to vector<392x128xf32>
    %13 = arith.addf %11, %12 : vector<392x128xf32>
    %cst_12 = arith.constant 0.000000e+00 : f32
    %14 = vector.broadcast %cst_12 : f32 to vector<392x128xf32>
    %15 = arith.maximumf %13, %14 : vector<392x128xf32>
    %16 = arith.maximumf %8, %15 : vector<392x128xf32>
    %c1_13 = arith.constant 1 : index
    %c0_14 = arith.constant 0 : index
    %c0_15 = arith.constant 0 : index
    %c0_16 = arith.constant 0 : index
    %17 = vector.load %arg0[%c1_13, %c0_14, %c0_15, %c0_16] : memref<2x2x392x75xf32, #tpu.memory_space<vmem>>, vector<1x1x392x75xf32>
    %18 = vector.shape_cast %17 : vector<1x1x392x75xf32> to vector<392x75xf32>
    %cst_17 = arith.constant dense<0.000000e+00> : vector<392x128xf32>
    %19 = tpu.matmul %18, %0, %cst_17 {dimension_numbers = #tpu.dot_dimension_numbers<[1], [0], [0], [1], [0, 0, 1, 1], [], []>} : vector<392x75xf32>, vector<75x128xf32>, vector<392x128xf32> -> vector<392x128xf32>
    %20 = vector.broadcast %1 : vector<1x128xf32> to vector<392x128xf32>
    %21 = arith.addf %19, %20 : vector<392x128xf32>
    %cst_18 = arith.constant 0.000000e+00 : f32
    %22 = vector.broadcast %cst_18 : f32 to vector<392x128xf32>
    %23 = arith.maximumf %21, %22 : vector<392x128xf32>
    %c1_19 = arith.constant 1 : index
    %c1_20 = arith.constant 1 : index
    %c0_21 = arith.constant 0 : index
    %c0_22 = arith.constant 0 : index
    %24 = vector.load %arg0[%c1_19, %c1_20, %c0_21, %c0_22] : memref<2x2x392x75xf32, #tpu.memory_space<vmem>>, vector<1x1x392x75xf32>
    %25 = vector.shape_cast %24 : vector<1x1x392x75xf32> to vector<392x75xf32>
    %cst_23 = arith.constant dense<0.000000e+00> : vector<392x128xf32>
    %26 = tpu.matmul %25, %0, %cst_23 {dimension_numbers = #tpu.dot_dimension_numbers<[1], [0], [0], [1], [0, 0, 1, 1], [], []>} : vector<392x75xf32>, vector<75x128xf32>, vector<392x128xf32> -> vector<392x128xf32>
    %27 = vector.broadcast %1 : vector<1x128xf32> to vector<392x128xf32>
    %28 = arith.addf %26, %27 : vector<392x128xf32>
    %cst_24 = arith.constant 0.000000e+00 : f32
    %29 = vector.broadcast %cst_24 : f32 to vector<392x128xf32>
    %30 = arith.maximumf %28, %29 : vector<392x128xf32>
    %31 = arith.maximumf %23, %30 : vector<392x128xf32>
    %32 = arith.maximumf %16, %31 : vector<392x128xf32>
    %c0_25 = arith.constant 0 : index
    %c0_26 = arith.constant 0 : index
    %33 = vector.load %arg3[%c0_25, %c0_26] : memref<392x128xf32, #tpu.memory_space<vmem>>, vector<392x128xf32>
    tpu.vector_store %arg3[%c0_25, %c0_26], %32 {strides = array<i32>} : memref<392x128xf32, #tpu.memory_space<vmem>>, vector<392x128xf32>,
    return
  }
}

module attributes {stable_mosaic.version = 11 : i64} {
  func.func @_conv2_pool_fc_kernel(%arg0: memref<2x2x50x150xf32, #tpu.memory_space<vmem>>, %arg1: memref<150x16xf32, #tpu.memory_space<vmem>>, %arg2: memref<1x16xf32, #tpu.memory_space<vmem>>, %arg3: memref<25x16x120xf32, #tpu.memory_space<vmem>>, %arg4: memref<1x120xf32, #tpu.memory_space<vmem>>, %arg5: memref<120x84xf32, #tpu.memory_space<vmem>>, %arg6: memref<1x84xf32, #tpu.memory_space<vmem>>, %arg7: memref<84x10xf32, #tpu.memory_space<vmem>>, %arg8: memref<1x10xf32, #tpu.memory_space<vmem>>, %arg9: memref<2x10xf32, #tpu.memory_space<vmem>>, %arg10: memref<50x16xf32, #tpu.memory_space<vmem>>) attributes {dimension_semantics = [], scalar_prefetch = 0 : i64, scratch_operands = 1 : i64, tpu.core_type = #tpu.core_type<tc>} {
    %c0 = arith.constant 0 : index
    %c0_0 = arith.constant 0 : index
    %0 = vector.load %arg1[%c0, %c0_0] : memref<150x16xf32, #tpu.memory_space<vmem>>, vector<150x16xf32>
    %c0_1 = arith.constant 0 : index
    %c0_2 = arith.constant 0 : index
    %1 = vector.load %arg2[%c0_1, %c0_2] : memref<1x16xf32, #tpu.memory_space<vmem>>, vector<1x16xf32>
    %c0_3 = arith.constant 0 : index
    %c0_4 = arith.constant 0 : index
    %c0_5 = arith.constant 0 : index
    %c0_6 = arith.constant 0 : index
    %2 = vector.load %arg0[%c0_3, %c0_4, %c0_5, %c0_6] : memref<2x2x50x150xf32, #tpu.memory_space<vmem>>, vector<1x1x50x150xf32>
    %3 = vector.shape_cast %2 : vector<1x1x50x150xf32> to vector<50x150xf32>
    %cst = arith.constant dense<0.000000e+00> : vector<50x16xf32>
    %4 = tpu.matmul %3, %0, %cst {dimension_numbers = #tpu.dot_dimension_numbers<[1], [0], [0], [1], [0, 0, 1, 1], [], []>} : vector<50x150xf32>, vector<150x16xf32>, vector<50x16xf32> -> vector<50x16xf32>
    %5 = vector.broadcast %1 : vector<1x16xf32> to vector<50x16xf32>
    %6 = arith.addf %4, %5 : vector<50x16xf32>
    %cst_7 = arith.constant 0.000000e+00 : f32
    %7 = vector.broadcast %cst_7 : f32 to vector<50x16xf32>
    %8 = arith.maximumf %6, %7 : vector<50x16xf32>
    %c0_8 = arith.constant 0 : index
    %c1 = arith.constant 1 : index
    %c0_9 = arith.constant 0 : index
    %c0_10 = arith.constant 0 : index
    %9 = vector.load %arg0[%c0_8, %c1, %c0_9, %c0_10] : memref<2x2x50x150xf32, #tpu.memory_space<vmem>>, vector<1x1x50x150xf32>
    %10 = vector.shape_cast %9 : vector<1x1x50x150xf32> to vector<50x150xf32>
    %cst_11 = arith.constant dense<0.000000e+00> : vector<50x16xf32>
    %11 = tpu.matmul %10, %0, %cst_11 {dimension_numbers = #tpu.dot_dimension_numbers<[1], [0], [0], [1], [0, 0, 1, 1], [], []>} : vector<50x150xf32>, vector<150x16xf32>, vector<50x16xf32> -> vector<50x16xf32>
    %12 = vector.broadcast %1 : vector<1x16xf32> to vector<50x16xf32>
    %13 = arith.addf %11, %12 : vector<50x16xf32>
    %cst_12 = arith.constant 0.000000e+00 : f32
    %14 = vector.broadcast %cst_12 : f32 to vector<50x16xf32>
    %15 = arith.maximumf %13, %14 : vector<50x16xf32>
    %16 = arith.maximumf %8, %15 : vector<50x16xf32>
    %c1_13 = arith.constant 1 : index
    %c0_14 = arith.constant 0 : index
    %c0_15 = arith.constant 0 : index
    %c0_16 = arith.constant 0 : index
    %17 = vector.load %arg0[%c1_13, %c0_14, %c0_15, %c0_16] : memref<2x2x50x150xf32, #tpu.memory_space<vmem>>, vector<1x1x50x150xf32>
    %18 = vector.shape_cast %17 : vector<1x1x50x150xf32> to vector<50x150xf32>
    %cst_17 = arith.constant dense<0.000000e+00> : vector<50x16xf32>
    %19 = tpu.matmul %18, %0, %cst_17 {dimension_numbers = #tpu.dot_dimension_numbers<[1], [0], [0], [1], [0, 0, 1, 1], [], []>} : vector<50x150xf32>, vector<150x16xf32>, vector<50x16xf32> -> vector<50x16xf32>
    %20 = vector.broadcast %1 : vector<1x16xf32> to vector<50x16xf32>
    %21 = arith.addf %19, %20 : vector<50x16xf32>
    %cst_18 = arith.constant 0.000000e+00 : f32
    %22 = vector.broadcast %cst_18 : f32 to vector<50x16xf32>
    %23 = arith.maximumf %21, %22 : vector<50x16xf32>
    %c1_19 = arith.constant 1 : index
    %c1_20 = arith.constant 1 : index
    %c0_21 = arith.constant 0 : index
    %c0_22 = arith.constant 0 : index
    %24 = vector.load %arg0[%c1_19, %c1_20, %c0_21, %c0_22] : memref<2x2x50x150xf32, #tpu.memory_space<vmem>>, vector<1x1x50x150xf32>
    %25 = vector.shape_cast %24 : vector<1x1x50x150xf32> to vector<50x150xf32>
    %cst_23 = arith.constant dense<0.000000e+00> : vector<50x16xf32>
    %26 = tpu.matmul %25, %0, %cst_23 {dimension_numbers = #tpu.dot_dimension_numbers<[1], [0], [0], [1], [0, 0, 1, 1], [], []>} : vector<50x150xf32>, vector<150x16xf32>, vector<50x16xf32> -> vector<50x16xf32>
    %27 = vector.broadcast %1 : vector<1x16xf32> to vector<50x16xf32>
    %28 = arith.addf %26, %27 : vector<50x16xf32>
    %cst_24 = arith.constant 0.000000e+00 : f32
    %29 = vector.broadcast %cst_24 : f32 to vector<50x16xf32>
    %30 = arith.maximumf %28, %29 : vector<50x16xf32>
    %31 = arith.maximumf %23, %30 : vector<50x16xf32>
    %32 = arith.maximumf %16, %31 : vector<50x16xf32>
    %c0_25 = arith.constant 0 : index
    %c0_26 = arith.constant 0 : index
    %33 = vector.load %arg10[%c0_25, %c0_26] : memref<50x16xf32, #tpu.memory_space<vmem>>, vector<50x16xf32>
    tpu.vector_store %arg10[%c0_25, %c0_26], %32 {strides = array<i32>} : memref<50x16xf32, #tpu.memory_space<vmem>>, vector<50x16xf32>,
    %c0_27 = arith.constant 0 : index
    %c0_28 = arith.constant 0 : index
    %34 = vector.load %arg10[%c0_27, %c0_28] : memref<50x16xf32, #tpu.memory_space<vmem>>, vector<2x16xf32>
    %c0_29 = arith.constant 0 : index
    %c0_30 = arith.constant 0 : index
    %c0_31 = arith.constant 0 : index
    %35 = vector.load %arg3[%c0_29, %c0_30, %c0_31] : memref<25x16x120xf32, #tpu.memory_space<vmem>>, vector<1x16x120xf32>
    %36 = vector.shape_cast %35 : vector<1x16x120xf32> to vector<16x120xf32>
    %cst_32 = arith.constant dense<0.000000e+00> : vector<2x120xf32>
    %37 = tpu.matmul %34, %36, %cst_32 {dimension_numbers = #tpu.dot_dimension_numbers<[1], [0], [0], [1], [0, 0, 1, 1], [], []>} : vector<2x16xf32>, vector<16x120xf32>, vector<2x120xf32> -> vector<2x120xf32>
    %c0_33 = arith.constant 0 : index
    %c0_34 = arith.constant 0 : index
    %38 = vector.load %arg4[%c0_33, %c0_34] : memref<1x120xf32, #tpu.memory_space<vmem>>, vector<1x120xf32>
    %39 = vector.broadcast %38 : vector<1x120xf32> to vector<2x120xf32>
    %40 = arith.addf %37, %39 : vector<2x120xf32>
    %c2 = arith.constant 2 : index
    %c0_35 = arith.constant 0 : index
    %41 = vector.load %arg10[%c2, %c0_35] : memref<50x16xf32, #tpu.memory_space<vmem>>, vector<2x16xf32>
    %c1_36 = arith.constant 1 : index
    %c0_37 = arith.constant 0 : index
    %c0_38 = arith.constant 0 : index
    %42 = vector.load %arg3[%c1_36, %c0_37, %c0_38] : memref<25x16x120xf32, #tpu.memory_space<vmem>>, vector<1x16x120xf32>
    %43 = vector.shape_cast %42 : vector<1x16x120xf32> to vector<16x120xf32>
    %cst_39 = arith.constant dense<0.000000e+00> : vector<2x120xf32>
    %44 = tpu.matmul %41, %43, %cst_39 {dimension_numbers = #tpu.dot_dimension_numbers<[1], [0], [0], [1], [0, 0, 1, 1], [], []>} : vector<2x16xf32>, vector<16x120xf32>, vector<2x120xf32> -> vector<2x120xf32>
    %45 = arith.addf %40, %44 : vector<2x120xf32>
    %c4 = arith.constant 4 : index
    %c0_40 = arith.constant 0 : index
    %46 = vector.load %arg10[%c4, %c0_40] : memref<50x16xf32, #tpu.memory_space<vmem>>, vector<2x16xf32>
    %c2_41 = arith.constant 2 : index
    %c0_42 = arith.constant 0 : index
    %c0_43 = arith.constant 0 : index
    %47 = vector.load %arg3[%c2_41, %c0_42, %c0_43] : memref<25x16x120xf32, #tpu.memory_space<vmem>>, vector<1x16x120xf32>
    %48 = vector.shape_cast %47 : vector<1x16x120xf32> to vector<16x120xf32>
    %cst_44 = arith.constant dense<0.000000e+00> : vector<2x120xf32>
    %49 = tpu.matmul %46, %48, %cst_44 {dimension_numbers = #tpu.dot_dimension_numbers<[1], [0], [0], [1], [0, 0, 1, 1], [], []>} : vector<2x16xf32>, vector<16x120xf32>, vector<2x120xf32> -> vector<2x120xf32>
    %50 = arith.addf %45, %49 : vector<2x120xf32>
    %c6 = arith.constant 6 : index
    %c0_45 = arith.constant 0 : index
    %51 = vector.load %arg10[%c6, %c0_45] : memref<50x16xf32, #tpu.memory_space<vmem>>, vector<2x16xf32>
    %c3 = arith.constant 3 : index
    %c0_46 = arith.constant 0 : index
    %c0_47 = arith.constant 0 : index
    %52 = vector.load %arg3[%c3, %c0_46, %c0_47] : memref<25x16x120xf32, #tpu.memory_space<vmem>>, vector<1x16x120xf32>
    %53 = vector.shape_cast %52 : vector<1x16x120xf32> to vector<16x120xf32>
    %cst_48 = arith.constant dense<0.000000e+00> : vector<2x120xf32>
    %54 = tpu.matmul %51, %53, %cst_48 {dimension_numbers = #tpu.dot_dimension_numbers<[1], [0], [0], [1], [0, 0, 1, 1], [], []>} : vector<2x16xf32>, vector<16x120xf32>, vector<2x120xf32> -> vector<2x120xf32>
    %55 = arith.addf %50, %54 : vector<2x120xf32>
    %c8 = arith.constant 8 : index
    %c0_49 = arith.constant 0 : index
    %56 = vector.load %arg10[%c8, %c0_49] : memref<50x16xf32, #tpu.memory_space<vmem>>, vector<2x16xf32>
    %c4_50 = arith.constant 4 : index
    %c0_51 = arith.constant 0 : index
    %c0_52 = arith.constant 0 : index
    %57 = vector.load %arg3[%c4_50, %c0_51, %c0_52] : memref<25x16x120xf32, #tpu.memory_space<vmem>>, vector<1x16x120xf32>
    %58 = vector.shape_cast %57 : vector<1x16x120xf32> to vector<16x120xf32>
    %cst_53 = arith.constant dense<0.000000e+00> : vector<2x120xf32>
    %59 = tpu.matmul %56, %58, %cst_53 {dimension_numbers = #tpu.dot_dimension_numbers<[1], [0], [0], [1], [0, 0, 1, 1], [], []>} : vector<2x16xf32>, vector<16x120xf32>, vector<2x120xf32> -> vector<2x120xf32>
    %60 = arith.addf %55, %59 : vector<2x120xf32>
    %c10 = arith.constant 10 : index
    %c0_54 = arith.constant 0 : index
    %61 = vector.load %arg10[%c10, %c0_54] : memref<50x16xf32, #tpu.memory_space<vmem>>, vector<2x16xf32>
    %c5 = arith.constant 5 : index
    %c0_55 = arith.constant 0 : index
    %c0_56 = arith.constant 0 : index
    %62 = vector.load %arg3[%c5, %c0_55, %c0_56] : memref<25x16x120xf32, #tpu.memory_space<vmem>>, vector<1x16x120xf32>
    %63 = vector.shape_cast %62 : vector<1x16x120xf32> to vector<16x120xf32>
    %cst_57 = arith.constant dense<0.000000e+00> : vector<2x120xf32>
    %64 = tpu.matmul %61, %63, %cst_57 {dimension_numbers = #tpu.dot_dimension_numbers<[1], [0], [0], [1], [0, 0, 1, 1], [], []>} : vector<2x16xf32>, vector<16x120xf32>, vector<2x120xf32> -> vector<2x120xf32>
    %65 = arith.addf %60, %64 : vector<2x120xf32>
    %c12 = arith.constant 12 : index
    %c0_58 = arith.constant 0 : index
    %66 = vector.load %arg10[%c12, %c0_58] : memref<50x16xf32, #tpu.memory_space<vmem>>, vector<2x16xf32>
    %c6_59 = arith.constant 6 : index
    %c0_60 = arith.constant 0 : index
    %c0_61 = arith.constant 0 : index
    %67 = vector.load %arg3[%c6_59, %c0_60, %c0_61] : memref<25x16x120xf32, #tpu.memory_space<vmem>>, vector<1x16x120xf32>
    %68 = vector.shape_cast %67 : vector<1x16x120xf32> to vector<16x120xf32>
    %cst_62 = arith.constant dense<0.000000e+00> : vector<2x120xf32>
    %69 = tpu.matmul %66, %68, %cst_62 {dimension_numbers = #tpu.dot_dimension_numbers<[1], [0], [0], [1], [0, 0, 1, 1], [], []>} : vector<2x16xf32>, vector<16x120xf32>, vector<2x120xf32> -> vector<2x120xf32>
    %70 = arith.addf %65, %69 : vector<2x120xf32>
    %c14 = arith.constant 14 : index
    %c0_63 = arith.constant 0 : index
    %71 = vector.load %arg10[%c14, %c0_63] : memref<50x16xf32, #tpu.memory_space<vmem>>, vector<2x16xf32>
    %c7 = arith.constant 7 : index
    %c0_64 = arith.constant 0 : index
    %c0_65 = arith.constant 0 : index
    %72 = vector.load %arg3[%c7, %c0_64, %c0_65] : memref<25x16x120xf32, #tpu.memory_space<vmem>>, vector<1x16x120xf32>
    %73 = vector.shape_cast %72 : vector<1x16x120xf32> to vector<16x120xf32>
    %cst_66 = arith.constant dense<0.000000e+00> : vector<2x120xf32>
    %74 = tpu.matmul %71, %73, %cst_66 {dimension_numbers = #tpu.dot_dimension_numbers<[1], [0], [0], [1], [0, 0, 1, 1], [], []>} : vector<2x16xf32>, vector<16x120xf32>, vector<2x120xf32> -> vector<2x120xf32>
    %75 = arith.addf %70, %74 : vector<2x120xf32>
    %c16 = arith.constant 16 : index
    %c0_67 = arith.constant 0 : index
    %76 = vector.load %arg10[%c16, %c0_67] : memref<50x16xf32, #tpu.memory_space<vmem>>, vector<2x16xf32>
    %c8_68 = arith.constant 8 : index
    %c0_69 = arith.constant 0 : index
    %c0_70 = arith.constant 0 : index
    %77 = vector.load %arg3[%c8_68, %c0_69, %c0_70] : memref<25x16x120xf32, #tpu.memory_space<vmem>>, vector<1x16x120xf32>
    %78 = vector.shape_cast %77 : vector<1x16x120xf32> to vector<16x120xf32>
    %cst_71 = arith.constant dense<0.000000e+00> : vector<2x120xf32>
    %79 = tpu.matmul %76, %78, %cst_71 {dimension_numbers = #tpu.dot_dimension_numbers<[1], [0], [0], [1], [0, 0, 1, 1], [], []>} : vector<2x16xf32>, vector<16x120xf32>, vector<2x120xf32> -> vector<2x120xf32>
    %80 = arith.addf %75, %79 : vector<2x120xf32>
    %c18 = arith.constant 18 : index
    %c0_72 = arith.constant 0 : index
    %81 = vector.load %arg10[%c18, %c0_72] : memref<50x16xf32, #tpu.memory_space<vmem>>, vector<2x16xf32>
    %c9 = arith.constant 9 : index
    %c0_73 = arith.constant 0 : index
    %c0_74 = arith.constant 0 : index
    %82 = vector.load %arg3[%c9, %c0_73, %c0_74] : memref<25x16x120xf32, #tpu.memory_space<vmem>>, vector<1x16x120xf32>
    %83 = vector.shape_cast %82 : vector<1x16x120xf32> to vector<16x120xf32>
    %cst_75 = arith.constant dense<0.000000e+00> : vector<2x120xf32>
    %84 = tpu.matmul %81, %83, %cst_75 {dimension_numbers = #tpu.dot_dimension_numbers<[1], [0], [0], [1], [0, 0, 1, 1], [], []>} : vector<2x16xf32>, vector<16x120xf32>, vector<2x120xf32> -> vector<2x120xf32>
    %85 = arith.addf %80, %84 : vector<2x120xf32>
    %c20 = arith.constant 20 : index
    %c0_76 = arith.constant 0 : index
    %86 = vector.load %arg10[%c20, %c0_76] : memref<50x16xf32, #tpu.memory_space<vmem>>, vector<2x16xf32>
    %c10_77 = arith.constant 10 : index
    %c0_78 = arith.constant 0 : index
    %c0_79 = arith.constant 0 : index
    %87 = vector.load %arg3[%c10_77, %c0_78, %c0_79] : memref<25x16x120xf32, #tpu.memory_space<vmem>>, vector<1x16x120xf32>
    %88 = vector.shape_cast %87 : vector<1x16x120xf32> to vector<16x120xf32>
    %cst_80 = arith.constant dense<0.000000e+00> : vector<2x120xf32>
    %89 = tpu.matmul %86, %88, %cst_80 {dimension_numbers = #tpu.dot_dimension_numbers<[1], [0], [0], [1], [0, 0, 1, 1], [], []>} : vector<2x16xf32>, vector<16x120xf32>, vector<2x120xf32> -> vector<2x120xf32>
    %90 = arith.addf %85, %89 : vector<2x120xf32>
    %c22 = arith.constant 22 : index
    %c0_81 = arith.constant 0 : index
    %91 = vector.load %arg10[%c22, %c0_81] : memref<50x16xf32, #tpu.memory_space<vmem>>, vector<2x16xf32>
    %c11 = arith.constant 11 : index
    %c0_82 = arith.constant 0 : index
    %c0_83 = arith.constant 0 : index
    %92 = vector.load %arg3[%c11, %c0_82, %c0_83] : memref<25x16x120xf32, #tpu.memory_space<vmem>>, vector<1x16x120xf32>
    %93 = vector.shape_cast %92 : vector<1x16x120xf32> to vector<16x120xf32>
    %cst_84 = arith.constant dense<0.000000e+00> : vector<2x120xf32>
    %94 = tpu.matmul %91, %93, %cst_84 {dimension_numbers = #tpu.dot_dimension_numbers<[1], [0], [0], [1], [0, 0, 1, 1], [], []>} : vector<2x16xf32>, vector<16x120xf32>, vector<2x120xf32> -> vector<2x120xf32>
    %95 = arith.addf %90, %94 : vector<2x120xf32>
    %c24 = arith.constant 24 : index
    %c0_85 = arith.constant 0 : index
    %96 = vector.load %arg10[%c24, %c0_85] : memref<50x16xf32, #tpu.memory_space<vmem>>, vector<2x16xf32>
    %c12_86 = arith.constant 12 : index
    %c0_87 = arith.constant 0 : index
    %c0_88 = arith.constant 0 : index
    %97 = vector.load %arg3[%c12_86, %c0_87, %c0_88] : memref<25x16x120xf32, #tpu.memory_space<vmem>>, vector<1x16x120xf32>
    %98 = vector.shape_cast %97 : vector<1x16x120xf32> to vector<16x120xf32>
    %cst_89 = arith.constant dense<0.000000e+00> : vector<2x120xf32>
    %99 = tpu.matmul %96, %98, %cst_89 {dimension_numbers = #tpu.dot_dimension_numbers<[1], [0], [0], [1], [0, 0, 1, 1], [], []>} : vector<2x16xf32>, vector<16x120xf32>, vector<2x120xf32> -> vector<2x120xf32>
    %100 = arith.addf %95, %99 : vector<2x120xf32>
    %c26 = arith.constant 26 : index
    %c0_90 = arith.constant 0 : index
    %101 = vector.load %arg10[%c26, %c0_90] : memref<50x16xf32, #tpu.memory_space<vmem>>, vector<2x16xf32>
    %c13 = arith.constant 13 : index
    %c0_91 = arith.constant 0 : index
    %c0_92 = arith.constant 0 : index
    %102 = vector.load %arg3[%c13, %c0_91, %c0_92] : memref<25x16x120xf32, #tpu.memory_space<vmem>>, vector<1x16x120xf32>
    %103 = vector.shape_cast %102 : vector<1x16x120xf32> to vector<16x120xf32>
    %cst_93 = arith.constant dense<0.000000e+00> : vector<2x120xf32>
    %104 = tpu.matmul %101, %103, %cst_93 {dimension_numbers = #tpu.dot_dimension_numbers<[1], [0], [0], [1], [0, 0, 1, 1], [], []>} : vector<2x16xf32>, vector<16x120xf32>, vector<2x120xf32> -> vector<2x120xf32>
    %105 = arith.addf %100, %104 : vector<2x120xf32>
    %c28 = arith.constant 28 : index
    %c0_94 = arith.constant 0 : index
    %106 = vector.load %arg10[%c28, %c0_94] : memref<50x16xf32, #tpu.memory_space<vmem>>, vector<2x16xf32>
    %c14_95 = arith.constant 14 : index
    %c0_96 = arith.constant 0 : index
    %c0_97 = arith.constant 0 : index
    %107 = vector.load %arg3[%c14_95, %c0_96, %c0_97] : memref<25x16x120xf32, #tpu.memory_space<vmem>>, vector<1x16x120xf32>
    %108 = vector.shape_cast %107 : vector<1x16x120xf32> to vector<16x120xf32>
    %cst_98 = arith.constant dense<0.000000e+00> : vector<2x120xf32>
    %109 = tpu.matmul %106, %108, %cst_98 {dimension_numbers = #tpu.dot_dimension_numbers<[1], [0], [0], [1], [0, 0, 1, 1], [], []>} : vector<2x16xf32>, vector<16x120xf32>, vector<2x120xf32> -> vector<2x120xf32>
    %110 = arith.addf %105, %109 : vector<2x120xf32>
    %c30 = arith.constant 30 : index
    %c0_99 = arith.constant 0 : index
    %111 = vector.load %arg10[%c30, %c0_99] : memref<50x16xf32, #tpu.memory_space<vmem>>, vector<2x16xf32>
    %c15 = arith.constant 15 : index
    %c0_100 = arith.constant 0 : index
    %c0_101 = arith.constant 0 : index
    %112 = vector.load %arg3[%c15, %c0_100, %c0_101] : memref<25x16x120xf32, #tpu.memory_space<vmem>>, vector<1x16x120xf32>
    %113 = vector.shape_cast %112 : vector<1x16x120xf32> to vector<16x120xf32>
    %cst_102 = arith.constant dense<0.000000e+00> : vector<2x120xf32>
    %114 = tpu.matmul %111, %113, %cst_102 {dimension_numbers = #tpu.dot_dimension_numbers<[1], [0], [0], [1], [0, 0, 1, 1], [], []>} : vector<2x16xf32>, vector<16x120xf32>, vector<2x120xf32> -> vector<2x120xf32>
    %115 = arith.addf %110, %114 : vector<2x120xf32>
    %c32 = arith.constant 32 : index
    %c0_103 = arith.constant 0 : index
    %116 = vector.load %arg10[%c32, %c0_103] : memref<50x16xf32, #tpu.memory_space<vmem>>, vector<2x16xf32>
    %c16_104 = arith.constant 16 : index
    %c0_105 = arith.constant 0 : index
    %c0_106 = arith.constant 0 : index
    %117 = vector.load %arg3[%c16_104, %c0_105, %c0_106] : memref<25x16x120xf32, #tpu.memory_space<vmem>>, vector<1x16x120xf32>
    %118 = vector.shape_cast %117 : vector<1x16x120xf32> to vector<16x120xf32>
    %cst_107 = arith.constant dense<0.000000e+00> : vector<2x120xf32>
    %119 = tpu.matmul %116, %118, %cst_107 {dimension_numbers = #tpu.dot_dimension_numbers<[1], [0], [0], [1], [0, 0, 1, 1], [], []>} : vector<2x16xf32>, vector<16x120xf32>, vector<2x120xf32> -> vector<2x120xf32>
    %120 = arith.addf %115, %119 : vector<2x120xf32>
    %c34 = arith.constant 34 : index
    %c0_108 = arith.constant 0 : index
    %121 = vector.load %arg10[%c34, %c0_108] : memref<50x16xf32, #tpu.memory_space<vmem>>, vector<2x16xf32>
    %c17 = arith.constant 17 : index
    %c0_109 = arith.constant 0 : index
    %c0_110 = arith.constant 0 : index
    %122 = vector.load %arg3[%c17, %c0_109, %c0_110] : memref<25x16x120xf32, #tpu.memory_space<vmem>>, vector<1x16x120xf32>
    %123 = vector.shape_cast %122 : vector<1x16x120xf32> to vector<16x120xf32>
    %cst_111 = arith.constant dense<0.000000e+00> : vector<2x120xf32>
    %124 = tpu.matmul %121, %123, %cst_111 {dimension_numbers = #tpu.dot_dimension_numbers<[1], [0], [0], [1], [0, 0, 1, 1], [], []>} : vector<2x16xf32>, vector<16x120xf32>, vector<2x120xf32> -> vector<2x120xf32>
    %125 = arith.addf %120, %124 : vector<2x120xf32>
    %c36 = arith.constant 36 : index
    %c0_112 = arith.constant 0 : index
    %126 = vector.load %arg10[%c36, %c0_112] : memref<50x16xf32, #tpu.memory_space<vmem>>, vector<2x16xf32>
    %c18_113 = arith.constant 18 : index
    %c0_114 = arith.constant 0 : index
    %c0_115 = arith.constant 0 : index
    %127 = vector.load %arg3[%c18_113, %c0_114, %c0_115] : memref<25x16x120xf32, #tpu.memory_space<vmem>>, vector<1x16x120xf32>
    %128 = vector.shape_cast %127 : vector<1x16x120xf32> to vector<16x120xf32>
    %cst_116 = arith.constant dense<0.000000e+00> : vector<2x120xf32>
    %129 = tpu.matmul %126, %128, %cst_116 {dimension_numbers = #tpu.dot_dimension_numbers<[1], [0], [0], [1], [0, 0, 1, 1], [], []>} : vector<2x16xf32>, vector<16x120xf32>, vector<2x120xf32> -> vector<2x120xf32>
    %130 = arith.addf %125, %129 : vector<2x120xf32>
    %c38 = arith.constant 38 : index
    %c0_117 = arith.constant 0 : index
    %131 = vector.load %arg10[%c38, %c0_117] : memref<50x16xf32, #tpu.memory_space<vmem>>, vector<2x16xf32>
    %c19 = arith.constant 19 : index
    %c0_118 = arith.constant 0 : index
    %c0_119 = arith.constant 0 : index
    %132 = vector.load %arg3[%c19, %c0_118, %c0_119] : memref<25x16x120xf32, #tpu.memory_space<vmem>>, vector<1x16x120xf32>
    %133 = vector.shape_cast %132 : vector<1x16x120xf32> to vector<16x120xf32>
    %cst_120 = arith.constant dense<0.000000e+00> : vector<2x120xf32>
    %134 = tpu.matmul %131, %133, %cst_120 {dimension_numbers = #tpu.dot_dimension_numbers<[1], [0], [0], [1], [0, 0, 1, 1], [], []>} : vector<2x16xf32>, vector<16x120xf32>, vector<2x120xf32> -> vector<2x120xf32>
    %135 = arith.addf %130, %134 : vector<2x120xf32>
    %c40 = arith.constant 40 : index
    %c0_121 = arith.constant 0 : index
    %136 = vector.load %arg10[%c40, %c0_121] : memref<50x16xf32, #tpu.memory_space<vmem>>, vector<2x16xf32>
    %c20_122 = arith.constant 20 : index
    %c0_123 = arith.constant 0 : index
    %c0_124 = arith.constant 0 : index
    %137 = vector.load %arg3[%c20_122, %c0_123, %c0_124] : memref<25x16x120xf32, #tpu.memory_space<vmem>>, vector<1x16x120xf32>
    %138 = vector.shape_cast %137 : vector<1x16x120xf32> to vector<16x120xf32>
    %cst_125 = arith.constant dense<0.000000e+00> : vector<2x120xf32>
    %139 = tpu.matmul %136, %138, %cst_125 {dimension_numbers = #tpu.dot_dimension_numbers<[1], [0], [0], [1], [0, 0, 1, 1], [], []>} : vector<2x16xf32>, vector<16x120xf32>, vector<2x120xf32> -> vector<2x120xf32>
    %140 = arith.addf %135, %139 : vector<2x120xf32>
    %c42 = arith.constant 42 : index
    %c0_126 = arith.constant 0 : index
    %141 = vector.load %arg10[%c42, %c0_126] : memref<50x16xf32, #tpu.memory_space<vmem>>, vector<2x16xf32>
    %c21 = arith.constant 21 : index
    %c0_127 = arith.constant 0 : index
    %c0_128 = arith.constant 0 : index
    %142 = vector.load %arg3[%c21, %c0_127, %c0_128] : memref<25x16x120xf32, #tpu.memory_space<vmem>>, vector<1x16x120xf32>
    %143 = vector.shape_cast %142 : vector<1x16x120xf32> to vector<16x120xf32>
    %cst_129 = arith.constant dense<0.000000e+00> : vector<2x120xf32>
    %144 = tpu.matmul %141, %143, %cst_129 {dimension_numbers = #tpu.dot_dimension_numbers<[1], [0], [0], [1], [0, 0, 1, 1], [], []>} : vector<2x16xf32>, vector<16x120xf32>, vector<2x120xf32> -> vector<2x120xf32>
    %145 = arith.addf %140, %144 : vector<2x120xf32>
    %c44 = arith.constant 44 : index
    %c0_130 = arith.constant 0 : index
    %146 = vector.load %arg10[%c44, %c0_130] : memref<50x16xf32, #tpu.memory_space<vmem>>, vector<2x16xf32>
    %c22_131 = arith.constant 22 : index
    %c0_132 = arith.constant 0 : index
    %c0_133 = arith.constant 0 : index
    %147 = vector.load %arg3[%c22_131, %c0_132, %c0_133] : memref<25x16x120xf32, #tpu.memory_space<vmem>>, vector<1x16x120xf32>
    %148 = vector.shape_cast %147 : vector<1x16x120xf32> to vector<16x120xf32>
    %cst_134 = arith.constant dense<0.000000e+00> : vector<2x120xf32>
    %149 = tpu.matmul %146, %148, %cst_134 {dimension_numbers = #tpu.dot_dimension_numbers<[1], [0], [0], [1], [0, 0, 1, 1], [], []>} : vector<2x16xf32>, vector<16x120xf32>, vector<2x120xf32> -> vector<2x120xf32>
    %150 = arith.addf %145, %149 : vector<2x120xf32>
    %c46 = arith.constant 46 : index
    %c0_135 = arith.constant 0 : index
    %151 = vector.load %arg10[%c46, %c0_135] : memref<50x16xf32, #tpu.memory_space<vmem>>, vector<2x16xf32>
    %c23 = arith.constant 23 : index
    %c0_136 = arith.constant 0 : index
    %c0_137 = arith.constant 0 : index
    %152 = vector.load %arg3[%c23, %c0_136, %c0_137] : memref<25x16x120xf32, #tpu.memory_space<vmem>>, vector<1x16x120xf32>
    %153 = vector.shape_cast %152 : vector<1x16x120xf32> to vector<16x120xf32>
    %cst_138 = arith.constant dense<0.000000e+00> : vector<2x120xf32>
    %154 = tpu.matmul %151, %153, %cst_138 {dimension_numbers = #tpu.dot_dimension_numbers<[1], [0], [0], [1], [0, 0, 1, 1], [], []>} : vector<2x16xf32>, vector<16x120xf32>, vector<2x120xf32> -> vector<2x120xf32>
    %155 = arith.addf %150, %154 : vector<2x120xf32>
    %c48 = arith.constant 48 : index
    %c0_139 = arith.constant 0 : index
    %156 = vector.load %arg10[%c48, %c0_139] : memref<50x16xf32, #tpu.memory_space<vmem>>, vector<2x16xf32>
    %c24_140 = arith.constant 24 : index
    %c0_141 = arith.constant 0 : index
    %c0_142 = arith.constant 0 : index
    %157 = vector.load %arg3[%c24_140, %c0_141, %c0_142] : memref<25x16x120xf32, #tpu.memory_space<vmem>>, vector<1x16x120xf32>
    %158 = vector.shape_cast %157 : vector<1x16x120xf32> to vector<16x120xf32>
    %cst_143 = arith.constant dense<0.000000e+00> : vector<2x120xf32>
    %159 = tpu.matmul %156, %158, %cst_143 {dimension_numbers = #tpu.dot_dimension_numbers<[1], [0], [0], [1], [0, 0, 1, 1], [], []>} : vector<2x16xf32>, vector<16x120xf32>, vector<2x120xf32> -> vector<2x120xf32>
    %160 = arith.addf %155, %159 : vector<2x120xf32>
    %cst_144 = arith.constant 0.000000e+00 : f32
    %161 = vector.broadcast %cst_144 : f32 to vector<2x120xf32>
    %162 = arith.maximumf %160, %161 : vector<2x120xf32>
    %c0_145 = arith.constant 0 : index
    %c0_146 = arith.constant 0 : index
    %163 = vector.load %arg5[%c0_145, %c0_146] : memref<120x84xf32, #tpu.memory_space<vmem>>, vector<120x84xf32>
    %cst_147 = arith.constant dense<0.000000e+00> : vector<2x84xf32>
    %164 = tpu.matmul %162, %163, %cst_147 {dimension_numbers = #tpu.dot_dimension_numbers<[1], [0], [0], [1], [0, 0, 1, 1], [], []>} : vector<2x120xf32>, vector<120x84xf32>, vector<2x84xf32> -> vector<2x84xf32>
    %c0_148 = arith.constant 0 : index
    %c0_149 = arith.constant 0 : index
    %165 = vector.load %arg6[%c0_148, %c0_149] : memref<1x84xf32, #tpu.memory_space<vmem>>, vector<1x84xf32>
    %166 = vector.broadcast %165 : vector<1x84xf32> to vector<2x84xf32>
    %167 = arith.addf %164, %166 : vector<2x84xf32>
    %cst_150 = arith.constant 0.000000e+00 : f32
    %168 = vector.broadcast %cst_150 : f32 to vector<2x84xf32>
    %169 = arith.maximumf %167, %168 : vector<2x84xf32>
    %c0_151 = arith.constant 0 : index
    %c0_152 = arith.constant 0 : index
    %170 = vector.load %arg7[%c0_151, %c0_152] : memref<84x10xf32, #tpu.memory_space<vmem>>, vector<84x10xf32>
    %cst_153 = arith.constant dense<0.000000e+00> : vector<2x10xf32>
    %171 = tpu.matmul %169, %170, %cst_153 {dimension_numbers = #tpu.dot_dimension_numbers<[1], [0], [0], [1], [0, 0, 1, 1], [], []>} : vector<2x84xf32>, vector<84x10xf32>, vector<2x10xf32> -> vector<2x10xf32>
    %c0_154 = arith.constant 0 : index
    %c0_155 = arith.constant 0 : index
    %172 = vector.load %arg8[%c0_154, %c0_155] : memref<1x10xf32, #tpu.memory_space<vmem>>, vector<1x10xf32>
    %173 = vector.broadcast %172 : vector<1x10xf32> to vector<2x10xf32>
    %174 = arith.addf %171, %173 : vector<2x10xf32>
    %c0_156 = arith.constant 0 : index
    %c0_157 = arith.constant 0 : index
    %175 = vector.load %arg9[%c0_156, %c0_157] : memref<2x10xf32, #tpu.memory_space<vmem>>, vector<2x10xf32>
    tpu.vector_store %arg9[%c0_156, %c0_157], %174 {strides = array<i32>} : memref<2x10xf32, #tpu.memory_space<vmem>>, vector<2x10xf32>,
    return
  }
}

</mosaic_0001>

<llo_original>
// kernel: net_forward.2
$region0: #{net_forward.2}
  #allocation0 [shape = 'u32[]', space=smem, size = 0x4, offset = 0x4, fixed_abs, tag = 'smem constant byte address 0x4 - core index']
  #allocation1 [shape = 'u32[144,128]{1,0:T(1,128)}', space=vmem, size = 0x12000, scoped, tag = 'internal scratch']
  %s0 = inlined_call_operand.vmem [shape: f32[2,2,392,75], index: 0, kind: input, shape index: {}]
  %s1 = inlined_call_operand.vmem [shape: f32[75,128], index: 1, kind: input, shape index: {}]
  %s2 = inlined_call_operand.vmem [shape: f32[1,128], index: 2, kind: input, shape index: {}]
  %s3 = inlined_call_operand.vmem [shape: f32[392,128], index: 3, kind: output, shape index: {}]
  %s4 = sld [smem:[#allocation0]]
  $region22: #{net_forward.2} parent=0
    _
  %s6 = ssub.s32 1, %s4
  %s7 = scalar_select 0, %s6, %s4
  // Predicated region
  $region2: #{net_forward.2} parent=0 // pred_check
    _
  $region3: #{net_forward.2} parent=0 // pred_check_branch
    %9 = sbr.rel (0) target = $region5
  $region4: #{net_forward.2} parent=0 // pred_region
    _
  $region5: #{net_forward.2} parent=0 // pred_fallthru
    _
  // Predicated region
  $region6: #{net_forward.2} parent=0 // pred_check
    _
  $region7: #{net_forward.2} parent=0 // pred_check_branch
    %11 = sbr.rel (0) target = $region9
  $region8: #{net_forward.2} parent=0 // pred_region
    _
  $region9: #{net_forward.2} parent=0 // pred_fallthru
    _
  // Predicated region
  $region10: #{net_forward.2} parent=0 // pred_check
    _
  $region11: #{net_forward.2} parent=0 // pred_check_branch
    %13 = sbr.rel (0) target = $region13
  $region12: #{net_forward.2} parent=0 // pred_region
    _
  $region13: #{net_forward.2} parent=0 // pred_fallthru
    _
  %v14 = vld [vmem:[%s1] sm:$0xff]
  %v15 = vld [vmem:[%s1 + $0x8] sm:$0xff]
  %v16 = vld [vmem:[%s1 + $0x10] sm:$0xff]
  %v17 = vld [vmem:[%s1 + $0x18] sm:$0xff]
  %v18 = vld [vmem:[%s1 + $0x20] sm:$0xff]
  %v19 = vld [vmem:[%s1 + $0x28] sm:$0xff]
  %v20 = vld [vmem:[%s1 + $0x30] sm:$0xff]
  %v21 = vld [vmem:[%s1 + $0x38] sm:$0xff]
  %v22 = vld [vmem:[%s1 + $0x40] sm:$0xff]
  %v23 = vld [vmem:[%s1 + $0x48] sm:$0x7]
  %v24 = vld [vmem:[%s2] sm:$0x1]
  %v25 = vld [vmem:[%s0] sm:$0xff]
  %v26 = vld [vmem:[%s0 + $0x8] sm:$0xff]
  %v27 = vld [vmem:[%s0 + $0x10] sm:$0xff]
  %v28 = vld [vmem:[%s0 + $0x18] sm:$0xff]
  %v29 = vld [vmem:[%s0 + $0x20] sm:$0xff]
  %v30 = vld [vmem:[%s0 + $0x28] sm:$0xff]
  %v31 = vld [vmem:[%s0 + $0x30] sm:$0xff]
  %v32 = vld [vmem:[%s0 + $0x38] sm:$0xff]
  %v33 = vld [vmem:[%s0 + $0x40] sm:$0xff]
  %v34 = vld [vmem:[%s0 + $0x48] sm:$0xff]
  %v35 = vld [vmem:[%s0 + $0x50] sm:$0xff]
  %v36 = vld [vmem:[%s0 + $0x58] sm:$0xff]
  %v37 = vld [vmem:[%s0 + $0x60] sm:$0xff]
  %v38 = vld [vmem:[%s0 + $0x68] sm:$0xff]
  %v39 = vld [vmem:[%s0 + $0x70] sm:$0xff]
  %v40 = vld [vmem:[%s0 + $0x78] sm:$0xff]
  %v41 = vld [vmem:[%s0 + $0x80] sm:$0xff]
  %v42 = vld [vmem:[%s0 + $0x88] sm:$0xff]
  %v43 = vld [vmem:[%s0 + $0x90] sm:$0xff]
  %v44 = vld [vmem:[%s0 + $0x98] sm:$0xff]
  %v45 = vld [vmem:[%s0 + $0xa0] sm:$0xff]
  %v46 = vld [vmem:[%s0 + $0xa8] sm:$0xff]
  %v47 = vld [vmem:[%s0 + $0xb0] sm:$0xff]
  %v48 = vld [vmem:[%s0 + $0xb8] sm:$0xff]
  %v49 = vld [vmem:[%s0 + $0xc0] sm:$0xff]
  %v50 = vld [vmem:[%s0 + $0xc8] sm:$0xff]
  %v51 = vld [vmem:[%s0 + $0xd0] sm:$0xff]
  %v52 = vld [vmem:[%s0 + $0xd8] sm:$0xff]
  %v53 = vld [vmem:[%s0 + $0xe0] sm:$0xff]
  %v54 = vld [vmem:[%s0 + $0xe8] sm:$0xff]
  %v55 = vld [vmem:[%s0 + $0xf0] sm:$0xff]
  %v56 = vld [vmem:[%s0 + $0xf8] sm:$0xff]
  %v57 = vld [vmem:[%s0 + $0x100] sm:$0xff]
  %v58 = vld [vmem:[%s0 + $0x108] sm:$0xff]
  %v59 = vld [vmem:[%s0 + $0x110] sm:$0xff]
  %v60 = vld [vmem:[%s0 + $0x118] sm:$0xff]
  %v61 = vld [vmem:[%s0 + $0x120] sm:$0xff]
  %v62 = vld [vmem:[%s0 + $0x128] sm:$0xff]
  %v63 = vld [vmem:[%s0 + $0x130] sm:$0xff]
  %v64 = vld [vmem:[%s0 + $0x138] sm:$0xff]
  %v65 = vld [vmem:[%s0 + $0x140] sm:$0xff]
  %v66 = vld [vmem:[%s0 + $0x148] sm:$0xff]
  %v67 = vld [vmem:[%s0 + $0x150] sm:$0xff]
  %v68 = vld [vmem:[%s0 + $0x158] sm:$0xff]
  %v69 = vld [vmem:[%s0 + $0x160] sm:$0xff]
  %v70 = vld [vmem:[%s0 + $0x168] sm:$0xff]
  %v71 = vld [vmem:[%s0 + $0x170] sm:$0xff]
  %v72 = vld [vmem:[%s0 + $0x178] sm:$0xff]
  %v73 = vld [vmem:[%s0 + $0x180] sm:$0xff]
  %v75 = vlaneseq
  %v76 = vshrl.u32 %v75, 7
  %v77 = vsub.s32 0, %v76
  %v78 = vrot.slane %v24, %v77
  %vm80 = vcmask 613376
  %v82 = vsel %vm80, %v25, 0
  %v85 = vsel %vm80, %v26, 0
  %v88 = vsel %vm80, %v27, 0
  %v91 = vsel %vm80, %v28, 0
  %v94 = vsel %vm80, %v29, 0
  %v97 = vsel %vm80, %v30, 0
  %v100 = vsel %vm80, %v31, 0
  %v103 = vsel %vm80, %v32, 0
  %v106 = vsel %vm80, %v33, 0
  %v109 = vsel %vm80, %v34, 0
  %v112 = vsel %vm80, %v35, 0
  %v115 = vsel %vm80, %v36, 0
  %v118 = vsel %vm80, %v37, 0
  %v121 = vsel %vm80, %v38, 0
  %v124 = vsel %vm80, %v39, 0
  %v127 = vsel %vm80, %v40, 0
  %v130 = vsel %vm80, %v41, 0
  %v133 = vsel %vm80, %v42, 0
  %v136 = vsel %vm80, %v43, 0
  %v139 = vsel %vm80, %v44, 0
  %v142 = vsel %vm80, %v45, 0
  %v145 = vsel %vm80, %v46, 0
  %v148 = vsel %vm80, %v47, 0
  %v151 = vsel %vm80, %v48, 0
  %v154 = vsel %vm80, %v49, 0
  %v157 = vsel %vm80, %v50, 0
  %v160 = vsel %vm80, %v51, 0
  %v163 = vsel %vm80, %v52, 0
  %v166 = vsel %vm80, %v53, 0
  %v169 = vsel %vm80, %v54, 0
  %v172 = vsel %vm80, %v55, 0
  %v175 = vsel %vm80, %v56, 0
  %v178 = vsel %vm80, %v57, 0
  %v181 = vsel %vm80, %v58, 0
  %v184 = vsel %vm80, %v59, 0
  %v187 = vsel %vm80, %v60, 0
  %v190 = vsel %vm80, %v61, 0
  %v193 = vsel %vm80, %v62, 0
  %v196 = vsel %vm80, %v63, 0
  %v199 = vsel %vm80, %v64, 0
  %v202 = vsel %vm80, %v65, 0
  %v205 = vsel %vm80, %v66, 0
  %v208 = vsel %vm80, %v67, 0
  %v211 = vsel %vm80, %v68, 0
  %v214 = vsel %vm80, %v69, 0
  %v217 = vsel %vm80, %v70, 0
  %v220 = vsel %vm80, %v71, 0
  %v223 = vsel %vm80, %v72, 0
  %v226 = vsel %vm80, %v73, 0
  %vm228 = vcmask 1042432
  %v230 = vsel %vm228, %v23, 0
  %232 = vmatprep.subr.mxu0 0.0
  %233 = vmatpush1.msra.mxu0 %v14
  %234 = vmatprep.subr.mxu0 0.0
  %235 = vmatpush1.msra.mxu0 %v15
  %236 = vmatprep.subr.mxu0 0.0
  %237 = vmatpush1.msra.mxu0 %v16
  %238 = vmatprep.subr.mxu0 0.0
  %239 = vmatpush1.msra.mxu0 %v17
  %240 = vmatprep.subr.mxu0 0.0
  %241 = vmatpush1.msra.mxu0 %v18
  %242 = vmatprep.subr.mxu0 0.0
  %243 = vmatpush1.msra.mxu0 %v19
  %244 = vmatprep.subr.mxu0 0.0
  %245 = vmatpush1.msra.mxu0 %v20
  %246 = vmatprep.subr.mxu0 0.0
  %247 = vmatpush1.msra.mxu0 %v21
  %248 = vmatprep.subr.mxu0 0.0
  %249 = vmatpush1.msra.mxu0 %v22
  %250 = vmatprep.subr.mxu0 0.0
  %251 = vmatpush1.msra.mxu0 %v230
  %252 = vmatprep.subr.mxu0 0.0
  %253 = vmatpush1.msra.mxu0 0.0
  %254 = vmatprep.subr.mxu0 0.0
  %255 = vmatpush1.msra.mxu0 0.0
  %256 = vmatprep.subr.mxu0 0.0
  %257 = vmatpush1.msra.mxu0 0.0
  %258 = vmatprep.subr.mxu0 0.0
  %259 = vmatpush1.msra.mxu0 0.0
  %260 = vmatprep.subr.mxu0 0.0
  %261 = vmatpush1.msra.mxu0 0.0
  %262 = vmatprep.subr.mxu0 0.0
  %263 = vmatpush1.msra.mxu0 0.0
  %264 = vmatprep.subr.mxu0 0.0
  %265 = vmatpush1.msra.mxu0 0.0
  %266 = vmatprep.subr.mxu0 0.0
  %267 = vmatpush1.msra.mxu0 0.0
  %268 = vmatprep.subr.mxu0 0.0
  %269 = vmatpush1.msra.mxu0 0.0
  %270 = vmatprep.subr.mxu0 0.0
  %271 = vmatpush1.msra.mxu0 0.0
  %272 = vmatprep.subr.mxu0 0.0
  %273 = vmatpush1.msra.mxu0 0.0
  %274 = vmatprep.subr.mxu0 0.0
  %275 = vmatpush1.msra.mxu0 0.0
  %276 = vmatprep.subr.mxu0 0.0
  %277 = vmatpush1.msra.mxu0 0.0
  %278 = vmatprep.subr.mxu0 0.0
  %279 = vmatpush1.msra.mxu0 0.0
  %280 = vmatprep.subr.mxu0 0.0
  %281 = vmatpush1.msra.mxu0 0.0
  %282 = vmatprep.subr.mxu0 0.0
  %283 = vmatpush1.msra.mxu0 0.0
  %284 = vmatprep.subr.mxu0 0.0
  %285 = vmatpush1.msra.mxu0 0.0
  %286 = vmatprep.subr.mxu0 0.0
  %287 = vmatpush1.msra.mxu0 0.0
  %288 = vmatprep.subr.mxu0 0.0
  %289 = vmatpush1.msra.mxu0 0.0
  %290 = vmatprep.subr.mxu0 0.0
  %291 = vmatpush1.msra.mxu0 0.0
  %292 = vmatprep.subr.mxu0 0.0
  %293 = vmatpush1.msra.mxu0 0.0
  %294 = vmatprep.subr.mxu0 0.0
  %295 = vmatpush1.msra.mxu0 0.0
  %296 = vmatprep.mubr.f32.mxu0 0.0
  %297 = vmatmul.mubr.f32.gmra.mrb[0].mxu0 %v82
  %v298 = vpop.f32.mrb[0].mxu0
  %v299 = vadd.f32 %v78, %v298
  %v300 = vpop.f32.mrb[0].mxu0
  %301 = vmatprep.mubr.f32.mxu0 0.0
  %302 = vmatmul.mubr.f32.gmra.mrb[0].mxu0 %v85
  %v303 = vpop.f32.mrb[0].mxu0
  %v304 = vadd.f32 %v78, %v303
  %v305 = vpop.f32.mrb[0].mxu0
  %306 = vmatprep.mubr.f32.mxu0 0.0
  %307 = vmatmul.mubr.f32.gmra.mrb[0].mxu0 %v88
  %v308 = vpop.f32.mrb[0].mxu0
  %v309 = vadd.f32 %v78, %v308
  %v310 = vpop.f32.mrb[0].mxu0
  %311 = vmatprep.mubr.f32.mxu0 0.0
  %312 = vmatmul.mubr.f32.gmra.mrb[0].mxu0 %v91
  %v313 = vpop.f32.mrb[0].mxu0
  %v314 = vadd.f32 %v78, %v313
  %v315 = vpop.f32.mrb[0].mxu0
  %316 = vmatprep.mubr.f32.mxu0 0.0
  %317 = vmatmul.mubr.f32.gmra.mrb[0].mxu0 %v94
  %v318 = vpop.f32.mrb[0].mxu0
  %v319 = vadd.f32 %v78, %v318
  %v320 = vpop.f32.mrb[0].mxu0
  %321 = vmatprep.mubr.f32.mxu0 0.0
  %322 = vmatmul.mubr.f32.gmra.mrb[0].mxu0 %v97
  %v323 = vpop.f32.mrb[0].mxu0
  %v324 = vadd.f32 %v78, %v323
  %v325 = vpop.f32.mrb[0].mxu0
  %326 = vmatprep.mubr.f32.mxu0 0.0
  %327 = vmatmul.mubr.f32.gmra.mrb[0].mxu0 %v100
  %v328 = vpop.f32.mrb[0].mxu0
  %v329 = vadd.f32 %v78, %v328
  %v330 = vpop.f32.mrb[0].mxu0
  %331 = vmatprep.mubr.f32.mxu0 0.0
  %332 = vmatmul.mubr.f32.gmra.mrb[0].mxu0 %v103
  %v333 = vpop.f32.mrb[0].mxu0
  %v334 = vadd.f32 %v78, %v333
  %v335 = vpop.f32.mrb[0].mxu0
  %336 = vmatprep.mubr.f32.mxu0 0.0
  %337 = vmatmul.mubr.f32.gmra.mrb[0].mxu0 %v106
  %v338 = vpop.f32.mrb[0].mxu0
  %v339 = vadd.f32 %v78, %v338
  %v340 = vpop.f32.mrb[0].mxu0
  %341 = vmatprep.mubr.f32.mxu0 0.0
  %342 = vmatmul.mubr.f32.gmra.mrb[0].mxu0 %v109
  %v343 = vpop.f32.mrb[0].mxu0
  %v344 = vadd.f32 %v78, %v343
  %v345 = vpop.f32.mrb[0].mxu0
  %346 = vmatprep.mubr.f32.mxu0 0.0
  %347 = vmatmul.mubr.f32.gmra.mrb[0].mxu0 %v112
  %v348 = vpop.f32.mrb[0].mxu0
  %v349 = vadd.f32 %v78, %v348
  %v350 = vpop.f32.mrb[0].mxu0
  %351 = vmatprep.mubr.f32.mxu0 0.0
  %352 = vmatmul.mubr.f32.gmra.mrb[0].mxu0 %v115
  %v353 = vpop.f32.mrb[0].mxu0
  %v354 = vadd.f32 %v78, %v353
  %v355 = vpop.f32.mrb[0].mxu0
  %356 = vmatprep.mubr.f32.mxu0 0.0
  %357 = vmatmul.mubr.f32.gmra.mrb[0].mxu0 %v118
  %v358 = vpop.f32.mrb[0].mxu0
  %v359 = vadd.f32 %v78, %v358
  %v360 = vpop.f32.mrb[0].mxu0
  %361 = vmatprep.mubr.f32.mxu0 0.0
  %362 = vmatmul.mubr.f32.gmra.mrb[0].mxu0 %v121
  %v363 = vpop.f32.mrb[0].mxu0
  %v364 = vadd.f32 %v78, %v363
  %v365 = vpop.f32.mrb[0].mxu0
  %366 = vmatprep.mubr.f32.mxu0 0.0
  %367 = vmatmul.mubr.f32.gmra.mrb[0].mxu0 %v124
  %v368 = vpop.f32.mrb[0].mxu0
  %v369 = vadd.f32 %v78, %v368
  %v370 = vpop.f32.mrb[0].mxu0
  %371 = vmatprep.mubr.f32.mxu0 0.0
  %372 = vmatmul.mubr.f32.gmra.mrb[0].mxu0 %v127
  %v373 = vpop.f32.mrb[0].mxu0
  %v374 = vadd.f32 %v78, %v373
  %v375 = vpop.f32.mrb[0].mxu0
  %376 = vmatprep.mubr.f32.mxu0 0.0
  %377 = vmatmul.mubr.f32.gmra.mrb[0].mxu0 %v130
  %v378 = vpop.f32.mrb[0].mxu0
  %v379 = vadd.f32 %v78, %v378
  %v380 = vpop.f32.mrb[0].mxu0
  %381 = vmatprep.mubr.f32.mxu0 0.0
  %382 = vmatmul.mubr.f32.gmra.mrb[0].mxu0 %v133
  %v383 = vpop.f32.mrb[0].mxu0
  %v384 = vadd.f32 %v78, %v383
  %v385 = vpop.f32.mrb[0].mxu0
  %386 = vmatprep.mubr.f32.mxu0 0.0
  %387 = vmatmul.mubr.f32.gmra.mrb[0].mxu0 %v136
  %v388 = vpop.f32.mrb[0].mxu0
  %v389 = vadd.f32 %v78, %v388
  %v390 = vpop.f32.mrb[0].mxu0
  %391 = vmatprep.mubr.f32.mxu0 0.0
  %392 = vmatmul.mubr.f32.gmra.mrb[0].mxu0 %v139
  %v393 = vpop.f32.mrb[0].mxu0
  %v394 = vadd.f32 %v78, %v393
  %v395 = vpop.f32.mrb[0].mxu0
  %396 = vmatprep.mubr.f32.mxu0 0.0
  %397 = vmatmul.mubr.f32.gmra.mrb[0].mxu0 %v142
  %v398 = vpop.f32.mrb[0].mxu0
  %v399 = vadd.f32 %v78, %v398
  %v400 = vpop.f32.mrb[0].mxu0
  %401 = vmatprep.mubr.f32.mxu0 0.0
  %402 = vmatmul.mubr.f32.gmra.mrb[0].mxu0 %v145
  %v403 = vpop.f32.mrb[0].mxu0
  %v404 = vadd.f32 %v78, %v403
  %v405 = vpop.f32.mrb[0].mxu0
  %406 = vmatprep.mubr.f32.mxu0 0.0
  %407 = vmatmul.mubr.f32.gmra.mrb[0].mxu0 %v148
  %v408 = vpop.f32.mrb[0].mxu0
  %v409 = vadd.f32 %v78, %v408
  %v410 = vpop.f32.mrb[0].mxu0
  %411 = vmatprep.mubr.f32.mxu0 0.0
  %412 = vmatmul.mubr.f32.gmra.mrb[0].mxu0 %v151
  %v413 = vpop.f32.mrb[0].mxu0
  %v414 = vadd.f32 %v78, %v413
  %v415 = vpop.f32.mrb[0].mxu0
  %416 = vmatprep.mubr.f32.mxu0 0.0
  %417 = vmatmul.mubr.f32.gmra.mrb[0].mxu0 %v154
  %v418 = vpop.f32.mrb[0].mxu0
  %v419 = vadd.f32 %v78, %v418
  %v420 = vpop.f32.mrb[0].mxu0
  %421 = vmatprep.mubr.f32.mxu0 0.0
  %422 = vmatmul.mubr.f32.gmra.mrb[0].mxu0 %v157
  %v423 = vpop.f32.mrb[0].mxu0
  %v424 = vadd.f32 %v78, %v423
  %v425 = vpop.f32.mrb[0].mxu0
  %426 = vmatprep.mubr.f32.mxu0 0.0
  %427 = vmatmul.mubr.f32.gmra.mrb[0].mxu0 %v160
  %v428 = vpop.f32.mrb[0].mxu0
  %v429 = vadd.f32 %v78, %v428
  %v430 = vpop.f32.mrb[0].mxu0
  %431 = vmatprep.mubr.f32.mxu0 0.0
  %432 = vmatmul.mubr.f32.gmra.mrb[0].mxu0 %v163
  %v433 = vpop.f32.mrb[0].mxu0
  %v434 = vadd.f32 %v78, %v433
  %v435 = vpop.f32.mrb[0].mxu0
  %436 = vmatprep.mubr.f32.mxu0 0.0
  %437 = vmatmul.mubr.f32.gmra.mrb[0].mxu0 %v166
  %v438 = vpop.f32.mrb[0].mxu0
  %v439 = vadd.f32 %v78, %v438
  %v440 = vpop.f32.mrb[0].mxu0
  %441 = vmatprep.mubr.f32.mxu0 0.0
  %442 = vmatmul.mubr.f32.gmra.mrb[0].mxu0 %v169
  %v443 = vpop.f32.mrb[0].mxu0
  %v444 = vadd.f32 %v78, %v443
  %v445 = vpop.f32.mrb[0].mxu0
  %446 = vmatprep.mubr.f32.mxu0 0.0
  %447 = vmatmul.mubr.f32.gmra.mrb[0].mxu0 %v172
  %v448 = vpop.f32.mrb[0].mxu0
  %v449 = vadd.f32 %v78, %v448
  %v450 = vpop.f32.mrb[0].mxu0
  %451 = vmatprep.mubr.f32.mxu0 0.0
  %452 = vmatmul.mubr.f32.gmra.mrb[0].mxu0 %v175
  %v453 = vpop.f32.mrb[0].mxu0
  %v454 = vadd.f32 %v78, %v453
  %v455 = vpop.f32.mrb[0].mxu0
  %456 = vmatprep.mubr.f32.mxu0 0.0
  %457 = vmatmul.mubr.f32.gmra.mrb[0].mxu0 %v178
  %v458 = vpop.f32.mrb[0].mxu0
  %v459 = vadd.f32 %v78, %v458
  %v460 = vpop.f32.mrb[0].mxu0
  %461 = vmatprep.mubr.f32.mxu0 0.0
  %462 = vmatmul.mubr.f32.gmra.mrb[0].mxu0 %v181
  %v463 = vpop.f32.mrb[0].mxu0
  %v464 = vadd.f32 %v78, %v463
  %v465 = vpop.f32.mrb[0].mxu0
  %466 = vmatprep.mubr.f32.mxu0 0.0
  %467 = vmatmul.mubr.f32.gmra.mrb[0].mxu0 %v184
  %v468 = vpop.f32.mrb[0].mxu0
  %v469 = vadd.f32 %v78, %v468
  %v470 = vpop.f32.mrb[0].mxu0
  %471 = vmatprep.mubr.f32.mxu0 0.0
  %472 = vmatmul.mubr.f32.gmra.mrb[0].mxu0 %v187
  %v473 = vpop.f32.mrb[0].mxu0
  %v474 = vadd.f32 %v78, %v473
  %v475 = vpop.f32.mrb[0].mxu0
  %476 = vmatprep.mubr.f32.mxu0 0.0
  %477 = vmatmul.mubr.f32.gmra.mrb[0].mxu0 %v190
  %v478 = vpop.f32.mrb[0].mxu0
  %v479 = vadd.f32 %v78, %v478
  %v480 = vpop.f32.mrb[0].mxu0
  %481 = vmatprep.mubr.f32.mxu0 0.0
  %482 = vmatmul.mubr.f32.gmra.mrb[0].mxu0 %v193
  %v483 = vpop.f32.mrb[0].mxu0
  %v484 = vadd.f32 %v78, %v483
  %v485 = vpop.f32.mrb[0].mxu0
  %486 = vmatprep.mubr.f32.mxu0 0.0
  %487 = vmatmul.mubr.f32.gmra.mrb[0].mxu0 %v196
  %v488 = vpop.f32.mrb[0].mxu0
  %v489 = vadd.f32 %v78, %v488
  %v490 = vpop.f32.mrb[0].mxu0
  %491 = vmatprep.mubr.f32.mxu0 0.0
  %492 = vmatmul.mubr.f32.gmra.mrb[0].mxu0 %v199
  %v493 = vpop.f32.mrb[0].mxu0
  %v494 = vadd.f32 %v78, %v493
  %v495 = vpop.f32.mrb[0].mxu0
  %496 = vmatprep.mubr.f32.mxu0 0.0
  %497 = vmatmul.mubr.f32.gmra.mrb[0].mxu0 %v202
  %v498 = vpop.f32.mrb[0].mxu0
  %v499 = vadd.f32 %v78, %v498
  %v500 = vpop.f32.mrb[0].mxu0
  %501 = vmatprep.mubr.f32.mxu0 0.0
  %502 = vmatmul.mubr.f32.gmra.mrb[0].mxu0 %v205
  %v503 = vpop.f32.mrb[0].mxu0
  %v504 = vadd.f32 %v78, %v503
  %v505 = vpop.f32.mrb[0].mxu0
  %506 = vmatprep.mubr.f32.mxu0 0.0
  %507 = vmatmul.mubr.f32.gmra.mrb[0].mxu0 %v208
  %v508 = vpop.f32.mrb[0].mxu0
  %v509 = vadd.f32 %v78, %v508
  %v510 = vpop.f32.mrb[0].mxu0
  %511 = vmatprep.mubr.f32.mxu0 0.0
  %512 = vmatmul.mubr.f32.gmra.mrb[0].mxu0 %v211
  %v513 = vpop.f32.mrb[0].mxu0
  %v514 = vadd.f32 %v78, %v513
  %v515 = vpop.f32.mrb[0].mxu0
  %516 = vmatprep.mubr.f32.mxu0 0.0
  %517 = vmatmul.mubr.f32.gmra.mrb[0].mxu0 %v214
  %v518 = vpop.f32.mrb[0].mxu0
  %v519 = vadd.f32 %v78, %v518
  %v520 = vpop.f32.mrb[0].mxu0
  %521 = vmatprep.mubr.f32.mxu0 0.0
  %522 = vmatmul.mubr.f32.gmra.mrb[0].mxu0 %v217
  %v523 = vpop.f32.mrb[0].mxu0
  %v524 = vadd.f32 %v78, %v523
  %v525 = vpop.f32.mrb[0].mxu0
  %526 = vmatprep.mubr.f32.mxu0 0.0
  %527 = vmatmul.mubr.f32.gmra.mrb[0].mxu0 %v220
  %v528 = vpop.f32.mrb[0].mxu0
  %v529 = vadd.f32 %v78, %v528
  %v530 = vpop.f32.mrb[0].mxu0
  %531 = vmatprep.mubr.f32.mxu0 0.0
  %532 = vmatmul.mubr.f32.gmra.mrb[0].mxu0 %v223
  %v533 = vpop.f32.mrb[0].mxu0
  %v534 = vadd.f32 %v78, %v533
  %v535 = vpop.f32.mrb[0].mxu0
  %536 = vmatprep.mubr.f32.mxu0 0.0
  %537 = vmatmul.mubr.f32.gmra.mrb[0].mxu0 %v226
  %v538 = vpop.f32.mrb[0].mxu0
  %v539 = vadd.f32 %v78, %v538
  %v540 = vpop.f32.mrb[0].mxu0
  %541 = vdwg.mxu0
  %v542 = vmax.f32 %v299, 0.0
  %v543 = vmax.f32 %v304, 0.0
  %v544 = vmax.f32 %v309, 0.0
  %v545 = vmax.f32 %v314, 0.0
  %v546 = vmax.f32 %v319, 0.0
  %v547 = vmax.f32 %v324, 0.0
  %v548 = vmax.f32 %v329, 0.0
  %v549 = vmax.f32 %v334, 0.0
  %v550 = vmax.f32 %v339, 0.0
  %v551 = vmax.f32 %v344, 0.0
  %v552 = vmax.f32 %v349, 0.0
  %v553 = vmax.f32 %v354, 0.0
  %v554 = vmax.f32 %v359, 0.0
  %v555 = vmax.f32 %v364, 0.0
  %v556 = vmax.f32 %v369, 0.0
  %v557 = vmax.f32 %v374, 0.0
  %v558 = vmax.f32 %v379, 0.0
  %v559 = vmax.f32 %v384, 0.0
  %v560 = vmax.f32 %v389, 0.0
  %v561 = vmax.f32 %v394, 0.0
  %v562 = vmax.f32 %v399, 0.0
  %v563 = vmax.f32 %v404, 0.0
  %v564 = vmax.f32 %v409, 0.0
  %v565 = vmax.f32 %v414, 0.0
  %v566 = vmax.f32 %v419, 0.0
  %v567 = vmax.f32 %v424, 0.0
  %v568 = vmax.f32 %v429, 0.0
  %v569 = vmax.f32 %v434, 0.0
  %v570 = vmax.f32 %v439, 0.0
  %v571 = vmax.f32 %v444, 0.0
  %v572 = vmax.f32 %v449, 0.0
  %v573 = vmax.f32 %v454, 0.0
  %v574 = vmax.f32 %v459, 0.0
  %v575 = vmax.f32 %v464, 0.0
  %v576 = vmax.f32 %v469, 0.0
  %v577 = vmax.f32 %v474, 0.0
  %v578 = vmax.f32 %v479, 0.0
  %v579 = vmax.f32 %v484, 0.0
  %v580 = vmax.f32 %v489, 0.0
  %v581 = vmax.f32 %v494, 0.0
  %v582 = vmax.f32 %v499, 0.0
  %v583 = vmax.f32 %v504, 0.0
  %v584 = vmax.f32 %v509, 0.0
  %v585 = vmax.f32 %v514, 0.0
  %v586 = vmax.f32 %v519, 0.0
  %v587 = vmax.f32 %v524, 0.0
  %v588 = vmax.f32 %v529, 0.0
  %v589 = vmax.f32 %v534, 0.0
  %v590 = vmax.f32 %v539, 0.0
  %s591 = scalar_lea.vmem %s0, 392
  %v592 = vld [vmem:[%s591] sm:$0xff]
  %v593 = vld [vmem:[%s591 + $0x8] sm:$0xff]
  %v594 = vld [vmem:[%s591 + $0x10] sm:$0xff]
  %v595 = vld [vmem:[%s591 + $0x18] sm:$0xff]
  %v596 = vld [vmem:[%s591 + $0x20] sm:$0xff]
  %v597 = vld [vmem:[%s591 + $0x28] sm:$0xff]
  %v598 = vld [vmem:[%s591 + $0x30] sm:$0xff]
  %v599 = vld [vmem:[%s591 + $0x38] sm:$0xff]
  %v600 = vld [vmem:[%s591 + $0x40] sm:$0xff]
  %v601 = vld [vmem:[%s591 + $0x48] sm:$0xff]
  %v602 = vld [vmem:[%s591 + $0x50] sm:$0xff]
  %v603 = vld [vmem:[%s591 + $0x58] sm:$0xff]
  %v604 = vld [vmem:[%s591 + $0x60] sm:$0xff]
  %v605 = vld [vmem:[%s591 + $0x68] sm:$0xff]
  %v606 = vld [vmem:[%s591 + $0x70] sm:$0xff]
  %v607 = vld [vmem:[%s591 + $0x78] sm:$0xff]
  %v608 = vld [vmem:[%s591 + $0x80] sm:$0xff]
  %v609 = vld [vmem:[%s591 + $0x88] sm:$0xff]
  %v610 = vld [vmem:[%s591 + $0x90] sm:$0xff]
  %v611 = vld [vmem:[%s591 + $0x98] sm:$0xff]
  %v612 = vld [vmem:[%s591 + $0xa0] sm:$0xff]
  %v613 = vld [vmem:[%s591 + $0xa8] sm:$0xff]
  %v614 = vld [vmem:[%s591 + $0xb0] sm:$0xff]
  %v615 = vld [vmem:[%s591 + $0xb8] sm:$0xff]
  %v616 = vld [vmem:[%s591 + $0xc0] sm:$0xff]
  %v617 = vld [vmem:[%s591 + $0xc8] sm:$0xff]
  %v618 = vld [vmem:[%s591 + $0xd0] sm:$0xff]
  %v619 = vld [vmem:[%s591 + $0xd8] sm:$0xff]
  %v620 = vld [vmem:[%s591 + $0xe0] sm:$0xff]
  %v621 = vld [vmem:[%s591 + $0xe8] sm:$0xff]
  %v622 = vld [vmem:[%s591 + $0xf0] sm:$0xff]
  %v623 = vld [vmem:[%s591 + $0xf8] sm:$0xff]
  %v624 = vld [vmem:[%s591 + $0x100] sm:$0xff]
  %v625 = vld [vmem:[%s591 + $0x108] sm:$0xff]
  %v626 = vld [vmem:[%s591 + $0x110] sm:$0xff]
  %v627 = vld [vmem:[%s591 + $0x118] sm:$0xff]
  %v628 = vld [vmem:[%s591 + $0x120] sm:$0xff]
  %v629 = vld [vmem:[%s591 + $0x128] sm:$0xff]
  %v630 = vld [vmem:[%s591 + $0x130] sm:$0xff]
  %v631 = vld [vmem:[%s591 + $0x138] sm:$0xff]
  %v632 = vld [vmem:[%s591 + $0x140] sm:$0xff]
  %v633 = vld [vmem:[%s591 + $0x148] sm:$0xff]
  %v634 = vld [vmem:[%s591 + $0x150] sm:$0xff]
  %v635 = vld [vmem:[%s591 + $0x158] sm:$0xff]
  %v636 = vld [vmem:[%s591 + $0x160] sm:$0xff]
  %v637 = vld [vmem:[%s591 + $0x168] sm:$0xff]
  %v638 = vld [vmem:[%s591 + $0x170] sm:$0xff]
  %v639 = vld [vmem:[%s591 + $0x178] sm:$0xff]
  %v640 = vld [vmem:[%s591 + $0x180] sm:$0xff]
  %v642 = vsel %vm80, %v592, 0
  %v645 = vsel %vm80, %v593, 0
  %v648 = vsel %vm80, %v594, 0
  %v651 = vsel %vm80, %v595, 0
  %v654 = vsel %vm80, %v596, 0
  %v657 = vsel %vm80, %v597, 0
  %v660 = vsel %vm80, %v598, 0
  %v663 = vsel %vm80, %v599, 0
  %v666 = vsel %vm80, %v600, 0
  %v669 = vsel %vm80, %v601, 0
  %v672 = vsel %vm80, %v602, 0
  %v675 = vsel %vm80, %v603, 0
  %v678 = vsel %vm80, %v604, 0
  %v681 = vsel %vm80, %v605, 0
  %v684 = vsel %vm80, %v606, 0
  %v687 = vsel %vm80, %v607, 0
  %v690 = vsel %vm80, %v608, 0
  %v693 = vsel %vm80, %v609, 0
  %v696 = vsel %vm80, %v610, 0
  %v699 = vsel %vm80, %v611, 0
  %v702 = vsel %vm80, %v612, 0
  %v705 = vsel %vm80, %v613, 0
  %v708 = vsel %vm80, %v614, 0
  %v711 = vsel %vm80, %v615, 0
  %v714 = vsel %vm80, %v616, 0
  %v717 = vsel %vm80, %v617, 0
  %v720 = vsel %vm80, %v618, 0
  %v723 = vsel %vm80, %v619, 0
  %v726 = vsel %vm80, %v620, 0
  %v729 = vsel %vm80, %v621, 0
  %v732 = vsel %vm80, %v622, 0
  %v735 = vsel %vm80, %v623, 0
  %v738 = vsel %vm80, %v624, 0
  %v741 = vsel %vm80, %v625, 0
  %v744 = vsel %vm80, %v626, 0
  %v747 = vsel %vm80, %v627, 0
  %v750 = vsel %vm80, %v628, 0
  %v753 = vsel %vm80, %v629, 0
  %v756 = vsel %vm80, %v630, 0
  %v759 = vsel %vm80, %v631, 0
  %v762 = vsel %vm80, %v632, 0
  %v765 = vsel %vm80, %v633, 0
  %v768 = vsel %vm80, %v634, 0
  %v771 = vsel %vm80, %v635, 0
  %v774 = vsel %vm80, %v636, 0
  %v777 = vsel %vm80, %v637, 0
  %v780 = vsel %vm80, %v638, 0
  %v783 = vsel %vm80, %v639, 0
  %v786 = vsel %vm80, %v640, 0
  %788 = vmatprep.subr.mxu0 0.0
  %789 = vmatpush1.msra.mxu0 %v14
  %790 = vmatprep.subr.mxu0 0.0
  %791 = vmatpush1.msra.mxu0 %v15
  %792 = vmatprep.subr.mxu0 0.0
  %793 = vmatpush1.msra.mxu0 %v16
  %794 = vmatprep.subr.mxu0 0.0
  %795 = vmatpush1.msra.mxu0 %v17
  %796 = vmatprep.subr.mxu0 0.0
  %797 = vmatpush1.msra.mxu0 %v18
  %798 = vmatprep.subr.mxu0 0.0
  %799 = vmatpush1.msra.mxu0 %v19
  %800 = vmatprep.subr.mxu0 0.0
  %801 = vmatpush1.msra.mxu0 %v20
  %802 = vmatprep.subr.mxu0 0.0
  %803 = vmatpush1.msra.mxu0 %v21
  %804 = vmatprep.subr.mxu0 0.0
  %805 = vmatpush1.msra.mxu0 %v22
  %806 = vmatprep.subr.mxu0 0.0
  %807 = vmatpush1.msra.mxu0 %v230
  %808 = vmatprep.subr.mxu0 0.0
  %809 = vmatpush1.msra.mxu0 0.0
  %810 = vmatprep.subr.mxu0 0.0
  %811 = vmatpush1.msra.mxu0 0.0
  %812 = vmatprep.subr.mxu0 0.0
  %813 = vmatpush1.msra.mxu0 0.0
  %814 = vmatprep.subr.mxu0 0.0
  %815 = vmatpush1.msra.mxu0 0.0
  %816 = vmatprep.subr.mxu0 0.0
  %817 = vmatpush1.msra.mxu0 0.0
  %818 = vmatprep.subr.mxu0 0.0
  %819 = vmatpush1.msra.mxu0 0.0
  %820 = vmatprep.subr.mxu0 0.0
  %821 = vmatpush1.msra.mxu0 0.0
  %822 = vmatprep.subr.mxu0 0.0
  %823 = vmatpush1.msra.mxu0 0.0
  %824 = vmatprep.subr.mxu0 0.0
  %825 = vmatpush1.msra.mxu0 0.0
  %826 = vmatprep.subr.mxu0 0.0
  %827 = vmatpush1.msra.mxu0 0.0
  %828 = vmatprep.subr.mxu0 0.0
  %829 = vmatpush1.msra.mxu0 0.0
  %830 = vmatprep.subr.mxu0 0.0
  %831 = vmatpush1.msra.mxu0 0.0
  %832 = vmatprep.subr.mxu0 0.0
  %833 = vmatpush1.msra.mxu0 0.0
  %834 = vmatprep.subr.mxu0 0.0
  %835 = vmatpush1.msra.mxu0 0.0
  %836 = vmatprep.subr.mxu0 0.0
  %837 = vmatpush1.msra.mxu0 0.0
  %838 = vmatprep.subr.mxu0 0.0
  %839 = vmatpush1.msra.mxu0 0.0
  %840 = vmatprep.subr.mxu0 0.0
  %841 = vmatpush1.msra.mxu0 0.0
  %842 = vmatprep.subr.mxu0 0.0
  %843 = vmatpush1.msra.mxu0 0.0
  %844 = vmatprep.subr.mxu0 0.0
  %845 = vmatpush1.msra.mxu0 0.0
  %846 = vmatprep.subr.mxu0 0.0
  %847 = vmatpush1.msra.mxu0 0.0
  %848 = vmatprep.subr.mxu0 0.0
  %849 = vmatpush1.msra.mxu0 0.0
  %850 = vmatprep.subr.mxu0 0.0
  %851 = vmatpush1.msra.mxu0 0.0
  %852 = vmatprep.mubr.f32.mxu0 0.0
  %853 = vmatmul.mubr.f32.gmra.mrb[0].mxu0 %v642
  %v854 = vpop.f32.mrb[0].mxu0
  %v855 = vadd.f32 %v78, %v854
  %v856 = vpop.f32.mrb[0].mxu0
  %857 = vmatprep.mubr.f32.mxu0 0.0
  %858 = vmatmul.mubr.f32.gmra.mrb[0].mxu0 %v645
  %v859 = vpop.f32.mrb[0].mxu0
  %v860 = vadd.f32 %v78, %v859
  %v861 = vpop.f32.mrb[0].mxu0
  %862 = vmatprep.mubr.f32.mxu0 0.0
  %863 = vmatmul.mubr.f32.gmra.mrb[0].mxu0 %v648
  %v864 = vpop.f32.mrb[0].mxu0
  %v865 = vadd.f32 %v78, %v864
  %v866 = vpop.f32.mrb[0].mxu0
  %867 = vmatprep.mubr.f32.mxu0 0.0
  %868 = vmatmul.mubr.f32.gmra.mrb[0].mxu0 %v651
  %v869 = vpop.f32.mrb[0].mxu0
  %v870 = vadd.f32 %v78, %v869
  %v871 = vpop.f32.mrb[0].mxu0
  %872 = vmatprep.mubr.f32.mxu0 0.0
  %873 = vmatmul.mubr.f32.gmra.mrb[0].mxu0 %v654
  %v874 = vpop.f32.mrb[0].mxu0
  %v875 = vadd.f32 %v78, %v874
  %v876 = vpop.f32.mrb[0].mxu0
  %877 = vmatprep.mubr.f32.mxu0 0.0
  %878 = vmatmul.mubr.f32.gmra.mrb[0].mxu0 %v657
  %v879 = vpop.f32.mrb[0].mxu0
  %v880 = vadd.f32 %v78, %v879
  %v881 = vpop.f32.mrb[0].mxu0
  %882 = vmatprep.mubr.f32.mxu0 0.0
  %883 = vmatmul.mubr.f32.gmra.mrb[0].mxu0 %v660
  %v884 = vpop.f32.mrb[0].mxu0
  %v885 = vadd.f32 %v78, %v884
  %v886 = vpop.f32.mrb[0].mxu0
  %887 = vmatprep.mubr.f32.mxu0 0.0
  %888 = vmatmul.mubr.f32.gmra.mrb[0].mxu0 %v663
  %v889 = vpop.f32.mrb[0].mxu0
  %v890 = vadd.f32 %v78, %v889
  %v891 = vpop.f32.mrb[0].mxu0
  %892 = vmatprep.mubr.f32.mxu0 0.0
  %893 = vmatmul.mubr.f32.gmra.mrb[0].mxu0 %v666
  %v894 = vpop.f32.mrb[0].mxu0
  %v895 = vadd.f32 %v78, %v894
  %v896 = vpop.f32.mrb[0].mxu0
  %897 = vmatprep.mubr.f32.mxu0 0.0
  %898 = vmatmul.mubr.f32.gmra.mrb[0].mxu0 %v669
  %v899 = vpop.f32.mrb[0].mxu0
  %v900 = vadd.f32 %v78, %v899
  %v901 = vpop.f32.mrb[0].mxu0
  %902 = vmatprep.mubr.f32.mxu0 0.0
  %903 = vmatmul.mubr.f32.gmra.mrb[0].mxu0 %v672
  %v904 = vpop.f32.mrb[0].mxu0
  %v905 = vadd.f32 %v78, %v904
  %v906 = vpop.f32.mrb[0].mxu0
  %907 = vmatprep.mubr.f32.mxu0 0.0
  %908 = vmatmul.mubr.f32.gmra.mrb[0].mxu0 %v675
  %v909 = vpop.f32.mrb[0].mxu0
  %v910 = vadd.f32 %v78, %v909
  %v911 = vpop.f32.mrb[0].mxu0
  %912 = vmatprep.mubr.f32.mxu0 0.0
  %913 = vmatmul.mubr.f32.gmra.mrb[0].mxu0 %v678
  %v914 = vpop.f32.mrb[0].mxu0
  %v915 = vadd.f32 %v78, %v914
  %v916 = vpop.f32.mrb[0].mxu0
  %917 = vmatprep.mubr.f32.mxu0 0.0
  %918 = vmatmul.mubr.f32.gmra.mrb[0].mxu0 %v681
  %v919 = vpop.f32.mrb[0].mxu0
  %v920 = vadd.f32 %v78, %v919
  %v921 = vpop.f32.mrb[0].mxu0
  %922 = vmatprep.mubr.f32.mxu0 0.0
  %923 = vmatmul.mubr.f32.gmra.mrb[0].mxu0 %v684
  %v924 = vpop.f32.mrb[0].mxu0
  %v925 = vadd.f32 %v78, %v924
  %v926 = vpop.f32.mrb[0].mxu0
  %927 = vmatprep.mubr.f32.mxu0 0.0
  %928 = vmatmul.mubr.f32.gmra.mrb[0].mxu0 %v687
  %v929 = vpop.f32.mrb[0].mxu0
  %v930 = vadd.f32 %v78, %v929
  %v931 = vpop.f32.mrb[0].mxu0
  %932 = vmatprep.mubr.f32.mxu0 0.0
  %933 = vmatmul.mubr.f32.gmra.mrb[0].mxu0 %v690
  %v934 = vpop.f32.mrb[0].mxu0
  %v935 = vadd.f32 %v78, %v934
  %v936 = vpop.f32.mrb[0].mxu0
  %937 = vmatprep.mubr.f32.mxu0 0.0
  %938 = vmatmul.mubr.f32.gmra.mrb[0].mxu0 %v693
  %v939 = vpop.f32.mrb[0].mxu0
  %v940 = vadd.f32 %v78, %v939
  %v941 = vpop.f32.mrb[0].mxu0
  %942 = vmatprep.mubr.f32.mxu0 0.0
  %943 = vmatmul.mubr.f32.gmra.mrb[0].mxu0 %v696
  %v944 = vpop.f32.mrb[0].mxu0
  %v945 = vadd.f32 %v78, %v944
  %v946 = vpop.f32.mrb[0].mxu0
  %947 = vmatprep.mubr.f32.mxu0 0.0
  %948 = vmatmul.mubr.f32.gmra.mrb[0].mxu0 %v699
  %v949 = vpop.f32.mrb[0].mxu0
  %v950 = vadd.f32 %v78, %v949
  %v951 = vpop.f32.mrb[0].mxu0
  %952 = vmatprep.mubr.f32.mxu0 0.0
  %953 = vmatmul.mubr.f32.gmra.mrb[0].mxu0 %v702
  %v954 = vpop.f32.mrb[0].mxu0
  %v955 = vadd.f32 %v78, %v954
  %v956 = vpop.f32.mrb[0].mxu0
  %957 = vmatprep.mubr.f32.mxu0 0.0
  %958 = vmatmul.mubr.f32.gmra.mrb[0].mxu0 %v705
  %v959 = vpop.f32.mrb[0].mxu0
  %v960 = vadd.f32 %v78, %v959
  %v961 = vpop.f32.mrb[0].mxu0
  %962 = vmatprep.mubr.f32.mxu0 0.0
  %963 = vmatmul.mubr.f32.gmra.mrb[0].mxu0 %v708
  %v964 = vpop.f32.mrb[0].mxu0
  %v965 = vadd.f32 %v78, %v964
  %v966 = vpop.f32.mrb[0].mxu0
  %967 = vmatprep.mubr.f32.mxu0 0.0
  %968 = vmatmul.mubr.f32.gmra.mrb[0].mxu0 %v711
  %v969 = vpop.f32.mrb[0].mxu0
  %v970 = vadd.f32 %v78, %v969
  %v971 = vpop.f32.mrb[0].mxu0
  %972 = vmatprep.mubr.f32.mxu0 0.0
  %973 = vmatmul.mubr.f32.gmra.mrb[0].mxu0 %v714
  %v974 = vpop.f32.mrb[0].mxu0
  %v975 = vadd.f32 %v78, %v974
  %v976 = vpop.f32.mrb[0].mxu0
  %977 = vmatprep.mubr.f32.mxu0 0.0
  %978 = vmatmul.mubr.f32.gmra.mrb[0].mxu0 %v717
  %v979 = vpop.f32.mrb[0].mxu0
  %v980 = vadd.f32 %v78, %v979
  %v981 = vpop.f32.mrb[0].mxu0
  %982 = vmatprep.mubr.f32.mxu0 0.0
  %983 = vmatmul.mubr.f32.gmra.mrb[0].mxu0 %v720
  %v984 = vpop.f32.mrb[0].mxu0
  %v985 = vadd.f32 %v78, %v984
  %v986 = vpop.f32.mrb[0].mxu0
  %987 = vmatprep.mubr.f32.mxu0 0.0
  %988 = vmatmul.mubr.f32.gmra.mrb[0].mxu0 %v723
  %v989 = vpop.f32.mrb[0].mxu0
  %v990 = vadd.f32 %v78, %v989
  %v991 = vpop.f32.mrb[0].mxu0
  %992 = vmatprep.mubr.f32.mxu0 0.0
  %993 = vmatmul.mubr.f32.gmra.mrb[0].mxu0 %v726
  %v994 = vpop.f32.mrb[0].mxu0
  %v995 = vadd.f32 %v78, %v994
  %v996 = vpop.f32.mrb[0].mxu0
  %997 = vmatprep.mubr.f32.mxu0 0.0
  %998 = vmatmul.mubr.f32.gmra.mrb[0].mxu0 %v729
  %v999 = vpop.f32.mrb[0].mxu0
  %v1000 = vadd.f32 %v78, %v999
  %v1001 = vpop.f32.mrb[0].mxu0
  %1002 = vmatprep.mubr.f32.mxu0 0.0
  %1003 = vmatmul.mubr.f32.gmra.mrb[0].mxu0 %v732
  %v1004 = vpop.f32.mrb[0].mxu0
  %v1005 = vadd.f32 %v78, %v1004
  %v1006 = vpop.f32.mrb[0].mxu0
  %1007 = vmatprep.mubr.f32.mxu0 0.0
  %1008 = vmatmul.mubr.f32.gmra.mrb[0].mxu0 %v735
  %v1009 = vpop.f32.mrb[0].mxu0
  %v1010 = vadd.f32 %v78, %v1009
  %v1011 = vpop.f32.mrb[0].mxu0
  %1012 = vmatprep.mubr.f32.mxu0 0.0
  %1013 = vmatmul.mubr.f32.gmra.mrb[0].mxu0 %v738
  %v1014 = vpop.f32.mrb[0].mxu0
  %v1015 = vadd.f32 %v78, %v1014
  %v1016 = vpop.f32.mrb[0].mxu0
  %1017 = vmatprep.mubr.f32.mxu0 0.0
  %1018 = vmatmul.mubr.f32.gmra.mrb[0].mxu0 %v741
  %v1019 = vpop.f32.mrb[0].mxu0
  %v1020 = vadd.f32 %v78, %v1019
  %v1021 = vpop.f32.mrb[0].mxu0
  %1022 = vmatprep.mubr.f32.mxu0 0.0
  %1023 = vmatmul.mubr.f32.gmra.mrb[0].mxu0 %v744
  %v1024 = vpop.f32.mrb[0].mxu0
  %v1025 = vadd.f32 %v78, %v1024
  %v1026 = vpop.f32.mrb[0].mxu0
  %1027 = vmatprep.mubr.f32.mxu0 0.0
  %1028 = vmatmul.mubr.f32.gmra.mrb[0].mxu0 %v747
  %v1029 = vpop.f32.mrb[0].mxu0
  %v1030 = vadd.f32 %v78, %v1029
  %v1031 = vpop.f32.mrb[0].mxu0
  %1032 = vmatprep.mubr.f32.mxu0 0.0
  %1033 = vmatmul.mubr.f32.gmra.mrb[0].mxu0 %v750
  %v1034 = vpop.f32.mrb[0].mxu0
  %v1035 = vadd.f32 %v78, %v1034
  %v1036 = vpop.f32.mrb[0].mxu0
  %1037 = vmatprep.mubr.f32.mxu0 0.0
  %1038 = vmatmul.mubr.f32.gmra.mrb[0].mxu0 %v753
  %v1039 = vpop.f32.mrb[0].mxu0
  %v1040 = vadd.f32 %v78, %v1039
  %v1041 = vpop.f32.mrb[0].mxu0
  %1042 = vmatprep.mubr.f32.mxu0 0.0
  %1043 = vmatmul.mubr.f32.gmra.mrb[0].mxu0 %v756
  %v1044 = vpop.f32.mrb[0].mxu0
  %v1045 = vadd.f32 %v78, %v1044
  %v1046 = vpop.f32.mrb[0].mxu0
  %1047 = vmatprep.mubr.f32.mxu0 0.0
  %1048 = vmatmul.mubr.f32.gmra.mrb[0].mxu0 %v759
  %v1049 = vpop.f32.mrb[0].mxu0
  %v1050 = vadd.f32 %v78, %v1049
  %v1051 = vpop.f32.mrb[0].mxu0
  %1052 = vmatprep.mubr.f32.mxu0 0.0
  %1053 = vmatmul.mubr.f32.gmra.mrb[0].mxu0 %v762
  %v1054 = vpop.f32.mrb[0].mxu0
  %v1055 = vadd.f32 %v78, %v1054
  %v1056 = vpop.f32.mrb[0].mxu0
  %1057 = vmatprep.mubr.f32.mxu0 0.0
  %1058 = vmatmul.mubr.f32.gmra.mrb[0].mxu0 %v765
  %v1059 = vpop.f32.mrb[0].mxu0
  %v1060 = vadd.f32 %v78, %v1059
  %v1061 = vpop.f32.mrb[0].mxu0
  %1062 = vmatprep.mubr.f32.mxu0 0.0
  %1063 = vmatmul.mubr.f32.gmra.mrb[0].mxu0 %v768
  %v1064 = vpop.f32.mrb[0].mxu0
  %v1065 = vadd.f32 %v78, %v1064
  %v1066 = vpop.f32.mrb[0].mxu0
  %1067 = vmatprep.mubr.f32.mxu0 0.0
  %1068 = vmatmul.mubr.f32.gmra.mrb[0].mxu0 %v771
  %v1069 = vpop.f32.mrb[0].mxu0
  %v1070 = vadd.f32 %v78, %v1069
  %v1071 = vpop.f32.mrb[0].mxu0
  %1072 = vmatprep.mubr.f32.mxu0 0.0
  %1073 = vmatmul.mubr.f32.gmra.mrb[0].mxu0 %v774
  %v1074 = vpop.f32.mrb[0].mxu0
  %v1075 = vadd.f32 %v78, %v1074
  %v1076 = vpop.f32.mrb[0].mxu0
  %1077 = vmatprep.mubr.f32.mxu0 0.0
  %1078 = vmatmul.mubr.f32.gmra.mrb[0].mxu0 %v777
  %v1079 = vpop.f32.mrb[0].mxu0
  %v1080 = vadd.f32 %v78, %v1079
  %v1081 = vpop.f32.mrb[0].mxu0
  %1082 = vmatprep.mubr.f32.mxu0 0.0
  %1083 = vmatmul.mubr.f32.gmra.mrb[0].mxu0 %v780
  %v1084 = vpop.f32.mrb[0].mxu0
  %v1085 = vadd.f32 %v78, %v1084
  %v1086 = vpop.f32.mrb[0].mxu0
  %1087 = vmatprep.mubr.f32.mxu0 0.0
  %1088 = vmatmul.mubr.f32.gmra.mrb[0].mxu0 %v783
  %v1089 = vpop.f32.mrb[0].mxu0
  %v1090 = vadd.f32 %v78, %v1089
  %v1091 = vpop.f32.mrb[0].mxu0
  %1092 = vmatprep.mubr.f32.mxu0 0.0
  %1093 = vmatmul.mubr.f32.gmra.mrb[0].mxu0 %v786
  %v1094 = vpop.f32.mrb[0].mxu0
  %v1095 = vadd.f32 %v78, %v1094
  %v1096 = vpop.f32.mrb[0].mxu0
  %1097 = vdwg.mxu0
  %v1098 = vmax.f32 %v855, 0.0
  %v1099 = vmax.f32 %v860, 0.0
  %v1100 = vmax.f32 %v865, 0.0
  %v1101 = vmax.f32 %v870, 0.0
  %v1102 = vmax.f32 %v875, 0.0
  %v1103 = vmax.f32 %v880, 0.0
  %v1104 = vmax.f32 %v885, 0.0
  %v1105 = vmax.f32 %v890, 0.0
  %v1106 = vmax.f32 %v895, 0.0
  %v1107 = vmax.f32 %v900, 0.0
  %v1108 = vmax.f32 %v905, 0.0
  %v1109 = vmax.f32 %v910, 0.0
  %v1110 = vmax.f32 %v915, 0.0
  %v1111 = vmax.f32 %v920, 0.0
  %v1112 = vmax.f32 %v925, 0.0
  %v1113 = vmax.f32 %v930, 0.0
  %v1114 = vmax.f32 %v935, 0.0
  %v1115 = vmax.f32 %v940, 0.0
  %v1116 = vmax.f32 %v945, 0.0
  %v1117 = vmax.f32 %v950, 0.0
  %v1118 = vmax.f32 %v955, 0.0
  %v1119 = vmax.f32 %v960, 0.0
  %v1120 = vmax.f32 %v965, 0.0
  %v1121 = vmax.f32 %v970, 0.0
  %v1122 = vmax.f32 %v975, 0.0
  %v1123 = vmax.f32 %v980, 0.0
  %v1124 = vmax.f32 %v985, 0.0
  %v1125 = vmax.f32 %v990, 0.0
  %v1126 = vmax.f32 %v995, 0.0
  %v1127 = vmax.f32 %v1000, 0.0
  %v1128 = vmax.f32 %v1005, 0.0
  %v1129 = vmax.f32 %v1010, 0.0
  %v1130 = vmax.f32 %v1015, 0.0
  %v1131 = vmax.f32 %v1020, 0.0
  %v1132 = vmax.f32 %v1025, 0.0
  %v1133 = vmax.f32 %v1030, 0.0
  %v1134 = vmax.f32 %v1035, 0.0
  %v1135 = vmax.f32 %v1040, 0.0
  %v1136 = vmax.f32 %v1045, 0.0
  %v1137 = vmax.f32 %v1050, 0.0
  %v1138 = vmax.f32 %v1055, 0.0
  %v1139 = vmax.f32 %v1060, 0.0
  %v1140 = vmax.f32 %v1065, 0.0
  %v1141 = vmax.f32 %v1070, 0.0
  %v1142 = vmax.f32 %v1075, 0.0
  %v1143 = vmax.f32 %v1080, 0.0
  %v1144 = vmax.f32 %v1085, 0.0
  %v1145 = vmax.f32 %v1090, 0.0
  %v1146 = vmax.f32 %v1095, 0.0
  %v1147 = vmax.f32 %v542, %v1098
  %v1148 = vmax.f32 %v543, %v1099
  %v1149 = vmax.f32 %v544, %v1100
  %v1150 = vmax.f32 %v545, %v1101
  %v1151 = vmax.f32 %v546, %v1102
  %v1152 = vmax.f32 %v547, %v1103
  %v1153 = vmax.f32 %v548, %v1104
  %v1154 = vmax.f32 %v549, %v1105
  %v1155 = vmax.f32 %v550, %v1106
  %v1156 = vmax.f32 %v551, %v1107
  %v1157 = vmax.f32 %v552, %v1108
  %v1158 = vmax.f32 %v553, %v1109
  %v1159 = vmax.f32 %v554, %v1110
  %v1160 = vmax.f32 %v555, %v1111
  %v1161 = vmax.f32 %v556, %v1112
  %v1162 = vmax.f32 %v557, %v1113
  %v1163 = vmax.f32 %v558, %v1114
  %v1164 = vmax.f32 %v559, %v1115
  %v1165 = vmax.f32 %v560, %v1116
  %v1166 = vmax.f32 %v561, %v1117
  %v1167 = vmax.f32 %v562, %v1118
  %v1168 = vmax.f32 %v563, %v1119
  %v1169 = vmax.f32 %v564, %v1120
  %v1170 = vmax.f32 %v565, %v1121
  %v1171 = vmax.f32 %v566, %v1122
  %v1172 = vmax.f32 %v567, %v1123
  %v1173 = vmax.f32 %v568, %v1124
  %v1174 = vmax.f32 %v569, %v1125
  %v1175 = vmax.f32 %v570, %v1126
  %v1176 = vmax.f32 %v571, %v1127
  %v1177 = vmax.f32 %v572, %v1128
  %v1178 = vmax.f32 %v573, %v1129
  %v1179 = vmax.f32 %v574, %v1130
  %v1180 = vmax.f32 %v575, %v1131
  %v1181 = vmax.f32 %v576, %v1132
  %v1182 = vmax.f32 %v577, %v1133
  %v1183 = vmax.f32 %v578, %v1134
  %v1184 = vmax.f32 %v579, %v1135
  %v1185 = vmax.f32 %v580, %v1136
  %v1186 = vmax.f32 %v581, %v1137
  %v1187 = vmax.f32 %v582, %v1138
  %v1188 = vmax.f32 %v583, %v1139
  %v1189 = vmax.f32 %v584, %v1140
  %v1190 = vmax.f32 %v585, %v1141
  %v1191 = vmax.f32 %v586, %v1142
  %v1192 = vmax.f32 %v587, %v1143
  %v1193 = vmax.f32 %v588, %v1144
  %v1194 = vmax.f32 %v589, %v1145
  %v1195 = vmax.f32 %v590, %v1146
  %s1196 = scalar_lea.vmem %s0, 784
  %v1197 = vld [vmem:[%s1196] sm:$0xff]
  %v1198 = vld [vmem:[%s1196 + $0x8] sm:$0xff]
  %v1199 = vld [vmem:[%s1196 + $0x10] sm:$0xff]
  %v1200 = vld [vmem:[%s1196 + $0x18] sm:$0xff]
  %v1201 = vld [vmem:[%s1196 + $0x20] sm:$0xff]
  %v1202 = vld [vmem:[%s1196 + $0x28] sm:$0xff]
  %v1203 = vld [vmem:[%s1196 + $0x30] sm:$0xff]
  %v1204 = vld [vmem:[%s1196 + $0x38] sm:$0xff]
  %v1205 = vld [vmem:[%s1196 + $0x40] sm:$0xff]
  %v1206 = vld [vmem:[%s1196 + $0x48] sm:$0xff]
  %v1207 = vld [vmem:[%s1196 + $0x50] sm:$0xff]
  %v1208 = vld [vmem:[%s1196 + $0x58] sm:$0xff]
  %v1209 = vld [vmem:[%s1196 + $0x60] sm:$0xff]
  %v1210 = vld [vmem:[%s1196 + $0x68] sm:$0xff]
  %v1211 = vld [vmem:[%s1196 + $0x70] sm:$0xff]
  %v1212 = vld [vmem:[%s1196 + $0x78] sm:$0xff]
  %v1213 = vld [vmem:[%s1196 + $0x80] sm:$0xff]
  %v1214 = vld [vmem:[%s1196 + $0x88] sm:$0xff]
  %v1215 = vld [vmem:[%s1196 + $0x90] sm:$0xff]
  %v1216 = vld [vmem:[%s1196 + $0x98] sm:$0xff]
  %v1217 = vld [vmem:[%s1196 + $0xa0] sm:$0xff]
  %v1218 = vld [vmem:[%s1196 + $0xa8] sm:$0xff]
  %v1219 = vld [vmem:[%s1196 + $0xb0] sm:$0xff]
  %v1220 = vld [vmem:[%s1196 + $0xb8] sm:$0xff]
  %v1221 = vld [vmem:[%s1196 + $0xc0] sm:$0xff]
  %v1222 = vld [vmem:[%s1196 + $0xc8] sm:$0xff]
  %v1223 = vld [vmem:[%s1196 + $0xd0] sm:$0xff]
  %v1224 = vld [vmem:[%s1196 + $0xd8] sm:$0xff]
  %v1225 = vld [vmem:[%s1196 + $0xe0] sm:$0xff]
  %v1226 = vld [vmem:[%s1196 + $0xe8] sm:$0xff]
  %v1227 = vld [vmem:[%s1196 + $0xf0] sm:$0xff]
  %v1228 = vld [vmem:[%s1196 + $0xf8] sm:$0xff]
  %v1229 = vld [vmem:[%s1196 + $0x100] sm:$0xff]
  %v1230 = vld [vmem:[%s1196 + $0x108] sm:$0xff]
  %v1231 = vld [vmem:[%s1196 + $0x110] sm:$0xff]
  %v1232 = vld [vmem:[%s1196 + $0x118] sm:$0xff]
  %v1233 = vld [vmem:[%s1196 + $0x120] sm:$0xff]
  %v1234 = vld [vmem:[%s1196 + $0x128] sm:$0xff]
  %v1235 = vld [vmem:[%s1196 + $0x130] sm:$0xff]
  %v1236 = vld [vmem:[%s1196 + $0x138] sm:$0xff]
  %v1237 = vld [vmem:[%s1196 + $0x140] sm:$0xff]
  %v1238 = vld [vmem:[%s1196 + $0x148] sm:$0xff]
  %v1239 = vld [vmem:[%s1196 + $0x150] sm:$0xff]
  %v1240 = vld [vmem:[%s1196 + $0x158] sm:$0xff]
  %v1241 = vld [vmem:[%s1196 + $0x160] sm:$0xff]
  %v1242 = vld [vmem:[%s1196 + $0x168] sm:$0xff]
  %v1243 = vld [vmem:[%s1196 + $0x170] sm:$0xff]
  %v1244 = vld [vmem:[%s1196 + $0x178] sm:$0xff]
  %v1245 = vld [vmem:[%s1196 + $0x180] sm:$0xff]
  %v1247 = vsel %vm80, %v1197, 0
  %v1250 = vsel %vm80, %v1198, 0
  %v1253 = vsel %vm80, %v1199, 0
  %v1256 = vsel %vm80, %v1200, 0
  %v1259 = vsel %vm80, %v1201, 0
  %v1262 = vsel %vm80, %v1202, 0
  %v1265 = vsel %vm80, %v1203, 0
  %v1268 = vsel %vm80, %v1204, 0
  %v1271 = vsel %vm80, %v1205, 0
  %v1274 = vsel %vm80, %v1206, 0
  %v1277 = vsel %vm80, %v1207, 0
  %v1280 = vsel %vm80, %v1208, 0
  %v1283 = vsel %vm80, %v1209, 0
  %v1286 = vsel %vm80, %v1210, 0
  %v1289 = vsel %vm80, %v1211, 0
  %v1292 = vsel %vm80, %v1212, 0
  %v1295 = vsel %vm80, %v1213, 0
  %v1298 = vsel %vm80, %v1214, 0
  %v1301 = vsel %vm80, %v1215, 0
  %v1304 = vsel %vm80, %v1216, 0
  %v1307 = vsel %vm80, %v1217, 0
  %v1310 = vsel %vm80, %v1218, 0
  %v1313 = vsel %vm80, %v1219, 0
  %v1316 = vsel %vm80, %v1220, 0
  %v1319 = vsel %vm80, %v1221, 0
  %v1322 = vsel %vm80, %v1222, 0
  %v1325 = vsel %vm80, %v1223, 0
  %v1328 = vsel %vm80, %v1224, 0
  %v1331 = vsel %vm80, %v1225, 0
  %v1334 = vsel %vm80, %v1226, 0
  %v1337 = vsel %vm80, %v1227, 0
  %v1340 = vsel %vm80, %v1228, 0
  %v1343 = vsel %vm80, %v1229, 0
  %v1346 = vsel %vm80, %v1230, 0
  %v1349 = vsel %vm80, %v1231, 0
  %v1352 = vsel %vm80, %v1232, 0
  %v1355 = vsel %vm80, %v1233, 0
  %v1358 = vsel %vm80, %v1234, 0
  %v1361 = vsel %vm80, %v1235, 0
  %v1364 = vsel %vm80, %v1236, 0
  %v1367 = vsel %vm80, %v1237, 0
  %v1370 = vsel %vm80, %v1238, 0
  %v1373 = vsel %vm80, %v1239, 0
  %v1376 = vsel %vm80, %v1240, 0
  %v1379 = vsel %vm80, %v1241, 0
  %v1382 = vsel %vm80, %v1242, 0
  %v1385 = vsel %vm80, %v1243, 0
  %v1388 = vsel %vm80, %v1244, 0
  %v1391 = vsel %vm80, %v1245, 0
  %1393 = vmatprep.subr.mxu0 0.0
  %1394 = vmatpush1.msra.mxu0 %v14
  %1395 = vmatprep.subr.mxu0 0.0
  %1396 = vmatpush1.msra.mxu0 %v15
  %1397 = vmatprep.subr.mxu0 0.0
  %1398 = vmatpush1.msra.mxu0 %v16
  %1399 = vmatprep.subr.mxu0 0.0
  %1400 = vmatpush1.msra.mxu0 %v17
  %1401 = vmatprep.subr.mxu0 0.0
  %1402 = vmatpush1.msra.mxu0 %v18
  %1403 = vmatprep.subr.mxu0 0.0
  %1404 = vmatpush1.msra.mxu0 %v19
  %1405 = vmatprep.subr.mxu0 0.0
  %1406 = vmatpush1.msra.mxu0 %v20
  %1407 = vmatprep.subr.mxu0 0.0
  %1408 = vmatpush1.msra.mxu0 %v21
  %1409 = vmatprep.subr.mxu0 0.0
  %1410 = vmatpush1.msra.mxu0 %v22
  %1411 = vmatprep.subr.mxu0 0.0
  %1412 = vmatpush1.msra.mxu0 %v230
  %1413 = vmatprep.subr.mxu0 0.0
  %1414 = vmatpush1.msra.mxu0 0.0
  %1415 = vmatprep.subr.mxu0 0.0
  %1416 = vmatpush1.msra.mxu0 0.0
  %1417 = vmatprep.subr.mxu0 0.0
  %1418 = vmatpush1.msra.mxu0 0.0
  %1419 = vmatprep.subr.mxu0 0.0
  %1420 = vmatpush1.msra.mxu0 0.0
  %1421 = vmatprep.subr.mxu0 0.0
  %1422 = vmatpush1.msra.mxu0 0.0
  %1423 = vmatprep.subr.mxu0 0.0
  %1424 = vmatpush1.msra.mxu0 0.0
  %1425 = vmatprep.subr.mxu0 0.0
  %1426 = vmatpush1.msra.mxu0 0.0
  %1427 = vmatprep.subr.mxu0 0.0
  %1428 = vmatpush1.msra.mxu0 0.0
  %1429 = vmatprep.subr.mxu0 0.0
  %1430 = vmatpush1.msra.mxu0 0.0
  %1431 = vmatprep.subr.mxu0 0.0
  %1432 = vmatpush1.msra.mxu0 0.0
  %1433 = vmatprep.subr.mxu0 0.0
  %1434 = vmatpush1.msra.mxu0 0.0
  %1435 = vmatprep.subr.mxu0 0.0
  %1436 = vmatpush1.msra.mxu0 0.0
  %1437 = vmatprep.subr.mxu0 0.0
  %1438 = vmatpush1.msra.mxu0 0.0
  %1439 = vmatprep.subr.mxu0 0.0
  %1440 = vmatpush1.msra.mxu0 0.0
  %1441 = vmatprep.subr.mxu0 0.0
  %1442 = vmatpush1.msra.mxu0 0.0
  %1443 = vmatprep.subr.mxu0 0.0
  %1444 = vmatpush1.msra.mxu0 0.0
  %1445 = vmatprep.subr.mxu0 0.0
  %1446 = vmatpush1.msra.mxu0 0.0
  %1447 = vmatprep.subr.mxu0 0.0
  %1448 = vmatpush1.msra.mxu0 0.0
  %1449 = vmatprep.subr.mxu0 0.0
  %1450 = vmatpush1.msra.mxu0 0.0
  %1451 = vmatprep.subr.mxu0 0.0
  %1452 = vmatpush1.msra.mxu0 0.0
  %1453 = vmatprep.subr.mxu0 0.0
  %1454 = vmatpush1.msra.mxu0 0.0
  %1455 = vmatprep.subr.mxu0 0.0
  %1456 = vmatpush1.msra.mxu0 0.0
  %1457 = vmatprep.mubr.f32.mxu0 0.0
  %1458 = vmatmul.mubr.f32.gmra.mrb[0].mxu0 %v1247
  %v1459 = vpop.f32.mrb[0].mxu0
  %v1460 = vadd.f32 %v78, %v1459
  %v1461 = vpop.f32.mrb[0].mxu0
  %1462 = vmatprep.mubr.f32.mxu0 0.0
  %1463 = vmatmul.mubr.f32.gmra.mrb[0].mxu0 %v1250
  %v1464 = vpop.f32.mrb[0].mxu0
  %v1465 = vadd.f32 %v78, %v1464
  %v1466 = vpop.f32.mrb[0].mxu0
  %1467 = vmatprep.mubr.f32.mxu0 0.0
  %1468 = vmatmul.mubr.f32.gmra.mrb[0].mxu0 %v1253
  %v1469 = vpop.f32.mrb[0].mxu0
  %v1470 = vadd.f32 %v78, %v1469
  %v1471 = vpop.f32.mrb[0].mxu0
  %1472 = vmatprep.mubr.f32.mxu0 0.0
  %1473 = vmatmul.mubr.f32.gmra.mrb[0].mxu0 %v1256
  %v1474 = vpop.f32.mrb[0].mxu0
  %v1475 = vadd.f32 %v78, %v1474
  %v1476 = vpop.f32.mrb[0].mxu0
  %1477 = vmatprep.mubr.f32.mxu0 0.0
  %1478 = vmatmul.mubr.f32.gmra.mrb[0].mxu0 %v1259
  %v1479 = vpop.f32.mrb[0].mxu0
  %v1480 = vadd.f32 %v78, %v1479
  %v1481 = vpop.f32.mrb[0].mxu0
  %1482 = vmatprep.mubr.f32.mxu0 0.0
  %1483 = vmatmul.mubr.f32.gmra.mrb[0].mxu0 %v1262
  %v1484 = vpop.f32.mrb[0].mxu0
  %v1485 = vadd.f32 %v78, %v1484
  %v1486 = vpop.f32.mrb[0].mxu0
  %1487 = vmatprep.mubr.f32.mxu0 0.0
  %1488 = vmatmul.mubr.f32.gmra.mrb[0].mxu0 %v1265
  %v1489 = vpop.f32.mrb[0].mxu0
  %v1490 = vadd.f32 %v78, %v1489
  %v1491 = vpop.f32.mrb[0].mxu0
  %1492 = vmatprep.mubr.f32.mxu0 0.0
  %1493 = vmatmul.mubr.f32.gmra.mrb[0].mxu0 %v1268
  %v1494 = vpop.f32.mrb[0].mxu0
  %v1495 = vadd.f32 %v78, %v1494
  %v1496 = vpop.f32.mrb[0].mxu0
  %1497 = vmatprep.mubr.f32.mxu0 0.0
  %1498 = vmatmul.mubr.f32.gmra.mrb[0].mxu0 %v1271
  %v1499 = vpop.f32.mrb[0].mxu0
  %v1500 = vadd.f32 %v78, %v1499
  %v1501 = vpop.f32.mrb[0].mxu0
  %1502 = vmatprep.mubr.f32.mxu0 0.0
  %1503 = vmatmul.mubr.f32.gmra.mrb[0].mxu0 %v1274
  %v1504 = vpop.f32.mrb[0].mxu0
  %v1505 = vadd.f32 %v78, %v1504
  %v1506 = vpop.f32.mrb[0].mxu0
  %1507 = vmatprep.mubr.f32.mxu0 0.0
  %1508 = vmatmul.mubr.f32.gmra.mrb[0].mxu0 %v1277
  %v1509 = vpop.f32.mrb[0].mxu0
  %v1510 = vadd.f32 %v78, %v1509
  %v1511 = vpop.f32.mrb[0].mxu0
  %1512 = vmatprep.mubr.f32.mxu0 0.0
  %1513 = vmatmul.mubr.f32.gmra.mrb[0].mxu0 %v1280
  %v1514 = vpop.f32.mrb[0].mxu0
  %v1515 = vadd.f32 %v78, %v1514
  %v1516 = vpop.f32.mrb[0].mxu0
  %1517 = vmatprep.mubr.f32.mxu0 0.0
  %1518 = vmatmul.mubr.f32.gmra.mrb[0].mxu0 %v1283
  %v1519 = vpop.f32.mrb[0].mxu0
  %v1520 = vadd.f32 %v78, %v1519
  %v1521 = vpop.f32.mrb[0].mxu0
  %1522 = vmatprep.mubr.f32.mxu0 0.0
  %1523 = vmatmul.mubr.f32.gmra.mrb[0].mxu0 %v1286
  %v1524 = vpop.f32.mrb[0].mxu0
  %v1525 = vadd.f32 %v78, %v1524
  %v1526 = vpop.f32.mrb[0].mxu0
  %1527 = vmatprep.mubr.f32.mxu0 0.0
  %1528 = vmatmul.mubr.f32.gmra.mrb[0].mxu0 %v1289
  %v1529 = vpop.f32.mrb[0].mxu0
  %v1530 = vadd.f32 %v78, %v1529
  %v1531 = vpop.f32.mrb[0].mxu0
  %1532 = vmatprep.mubr.f32.mxu0 0.0
  %1533 = vmatmul.mubr.f32.gmra.mrb[0].mxu0 %v1292
  %v1534 = vpop.f32.mrb[0].mxu0
  %v1535 = vadd.f32 %v78, %v1534
  %v1536 = vpop.f32.mrb[0].mxu0
  %1537 = vmatprep.mubr.f32.mxu0 0.0
  %1538 = vmatmul.mubr.f32.gmra.mrb[0].mxu0 %v1295
  %v1539 = vpop.f32.mrb[0].mxu0
  %v1540 = vadd.f32 %v78, %v1539
  %v1541 = vpop.f32.mrb[0].mxu0
  %1542 = vmatprep.mubr.f32.mxu0 0.0
  %1543 = vmatmul.mubr.f32.gmra.mrb[0].mxu0 %v1298
  %v1544 = vpop.f32.mrb[0].mxu0
  %v1545 = vadd.f32 %v78, %v1544
  %v1546 = vpop.f32.mrb[0].mxu0
  %1547 = vmatprep.mubr.f32.mxu0 0.0
  %1548 = vmatmul.mubr.f32.gmra.mrb[0].mxu0 %v1301
  %v1549 = vpop.f32.mrb[0].mxu0
  %v1550 = vadd.f32 %v78, %v1549
  %v1551 = vpop.f32.mrb[0].mxu0
  %1552 = vmatprep.mubr.f32.mxu0 0.0
  %1553 = vmatmul.mubr.f32.gmra.mrb[0].mxu0 %v1304
  %v1554 = vpop.f32.mrb[0].mxu0
  %v1555 = vadd.f32 %v78, %v1554
  %v1556 = vpop.f32.mrb[0].mxu0
  %1557 = vmatprep.mubr.f32.mxu0 0.0
  %1558 = vmatmul.mubr.f32.gmra.mrb[0].mxu0 %v1307
  %v1559 = vpop.f32.mrb[0].mxu0
  %v1560 = vadd.f32 %v78, %v1559
  %v1561 = vpop.f32.mrb[0].mxu0
  %1562 = vmatprep.mubr.f32.mxu0 0.0
  %1563 = vmatmul.mubr.f32.gmra.mrb[0].mxu0 %v1310
  %v1564 = vpop.f32.mrb[0].mxu0
  %v1565 = vadd.f32 %v78, %v1564
  %v1566 = vpop.f32.mrb[0].mxu0
  %1567 = vmatprep.mubr.f32.mxu0 0.0
  %1568 = vmatmul.mubr.f32.gmra.mrb[0].mxu0 %v1313
  %v1569 = vpop.f32.mrb[0].mxu0
  %v1570 = vadd.f32 %v78, %v1569
  %v1571 = vpop.f32.mrb[0].mxu0
  %1572 = vmatprep.mubr.f32.mxu0 0.0
  %1573 = vmatmul.mubr.f32.gmra.mrb[0].mxu0 %v1316
  %v1574 = vpop.f32.mrb[0].mxu0
  %v1575 = vadd.f32 %v78, %v1574
  %v1576 = vpop.f32.mrb[0].mxu0
  %1577 = vmatprep.mubr.f32.mxu0 0.0
  %1578 = vmatmul.mubr.f32.gmra.mrb[0].mxu0 %v1319
  %v1579 = vpop.f32.mrb[0].mxu0
  %v1580 = vadd.f32 %v78, %v1579
  %v1581 = vpop.f32.mrb[0].mxu0
  %1582 = vmatprep.mubr.f32.mxu0 0.0
  %1583 = vmatmul.mubr.f32.gmra.mrb[0].mxu0 %v1322
  %v1584 = vpop.f32.mrb[0].mxu0
  %v1585 = vadd.f32 %v78, %v1584
  %v1586 = vpop.f32.mrb[0].mxu0
  %1587 = vmatprep.mubr.f32.mxu0 0.0
  %1588 = vmatmul.mubr.f32.gmra.mrb[0].mxu0 %v1325
  %v1589 = vpop.f32.mrb[0].mxu0
  %v1590 = vadd.f32 %v78, %v1589
  %v1591 = vpop.f32.mrb[0].mxu0
  %1592 = vmatprep.mubr.f32.mxu0 0.0
  %1593 = vmatmul.mubr.f32.gmra.mrb[0].mxu0 %v1328
  %v1594 = vpop.f32.mrb[0].mxu0
  %v1595 = vadd.f32 %v78, %v1594
  %v1596 = vpop.f32.mrb[0].mxu0
  %1597 = vmatprep.mubr.f32.mxu0 0.0
  %1598 = vmatmul.mubr.f32.gmra.mrb[0].mxu0 %v1331
  %v1599 = vpop.f32.mrb[0].mxu0
  %v1600 = vadd.f32 %v78, %v1599
  %v1601 = vpop.f32.mrb[0].mxu0
  %1602 = vmatprep.mubr.f32.mxu0 0.0
  %1603 = vmatmul.mubr.f32.gmra.mrb[0].mxu0 %v1334
  %v1604 = vpop.f32.mrb[0].mxu0
  %v1605 = vadd.f32 %v78, %v1604
  %v1606 = vpop.f32.mrb[0].mxu0
  %1607 = vmatprep.mubr.f32.mxu0 0.0
  %1608 = vmatmul.mubr.f32.gmra.mrb[0].mxu0 %v1337
  %v1609 = vpop.f32.mrb[0].mxu0
  %v1610 = vadd.f32 %v78, %v1609
  %v1611 = vpop.f32.mrb[0].mxu0
  %1612 = vmatprep.mubr.f32.mxu0 0.0
  %1613 = vmatmul.mubr.f32.gmra.mrb[0].mxu0 %v1340
  %v1614 = vpop.f32.mrb[0].mxu0
  %v1615 = vadd.f32 %v78, %v1614
  %v1616 = vpop.f32.mrb[0].mxu0
  %1617 = vmatprep.mubr.f32.mxu0 0.0
  %1618 = vmatmul.mubr.f32.gmra.mrb[0].mxu0 %v1343
  %v1619 = vpop.f32.mrb[0].mxu0
  %v1620 = vadd.f32 %v78, %v1619
  %v1621 = vpop.f32.mrb[0].mxu0
  %1622 = vmatprep.mubr.f32.mxu0 0.0
  %1623 = vmatmul.mubr.f32.gmra.mrb[0].mxu0 %v1346
  %v1624 = vpop.f32.mrb[0].mxu0
  %v1625 = vadd.f32 %v78, %v1624
  %v1626 = vpop.f32.mrb[0].mxu0
  %1627 = vmatprep.mubr.f32.mxu0 0.0
  %1628 = vmatmul.mubr.f32.gmra.mrb[0].mxu0 %v1349
  %v1629 = vpop.f32.mrb[0].mxu0
  %v1630 = vadd.f32 %v78, %v1629
  %v1631 = vpop.f32.mrb[0].mxu0
  %1632 = vmatprep.mubr.f32.mxu0 0.0
  %1633 = vmatmul.mubr.f32.gmra.mrb[0].mxu0 %v1352
  %v1634 = vpop.f32.mrb[0].mxu0
  %v1635 = vadd.f32 %v78, %v1634
  %v1636 = vpop.f32.mrb[0].mxu0
  %1637 = vmatprep.mubr.f32.mxu0 0.0
  %1638 = vmatmul.mubr.f32.gmra.mrb[0].mxu0 %v1355
  %v1639 = vpop.f32.mrb[0].mxu0
  %v1640 = vadd.f32 %v78, %v1639
  %v1641 = vpop.f32.mrb[0].mxu0
  %1642 = vmatprep.mubr.f32.mxu0 0.0
  %1643 = vmatmul.mubr.f32.gmra.mrb[0].mxu0 %v1358
  %v1644 = vpop.f32.mrb[0].mxu0
  %v1645 = vadd.f32 %v78, %v1644
  %v1646 = vpop.f32.mrb[0].mxu0
  %1647 = vmatprep.mubr.f32.mxu0 0.0
  %1648 = vmatmul.mubr.f32.gmra.mrb[0].mxu0 %v1361
  %v1649 = vpop.f32.mrb[0].mxu0
  %v1650 = vadd.f32 %v78, %v1649
  %v1651 = vpop.f32.mrb[0].mxu0
  %1652 = vmatprep.mubr.f32.mxu0 0.0
  %1653 = vmatmul.mubr.f32.gmra.mrb[0].mxu0 %v1364
  %v1654 = vpop.f32.mrb[0].mxu0
  %v1655 = vadd.f32 %v78, %v1654
  %v1656 = vpop.f32.mrb[0].mxu0
  %1657 = vmatprep.mubr.f32.mxu0 0.0
  %1658 = vmatmul.mubr.f32.gmra.mrb[0].mxu0 %v1367
  %v1659 = vpop.f32.mrb[0].mxu0
  %v1660 = vadd.f32 %v78, %v1659
  %v1661 = vpop.f32.mrb[0].mxu0
  %1662 = vmatprep.mubr.f32.mxu0 0.0
  %1663 = vmatmul.mubr.f32.gmra.mrb[0].mxu0 %v1370
  %v1664 = vpop.f32.mrb[0].mxu0
  %v1665 = vadd.f32 %v78, %v1664
  %v1666 = vpop.f32.mrb[0].mxu0
  %1667 = vmatprep.mubr.f32.mxu0 0.0
  %1668 = vmatmul.mubr.f32.gmra.mrb[0].mxu0 %v1373
  %v1669 = vpop.f32.mrb[0].mxu0
  %v1670 = vadd.f32 %v78, %v1669
  %v1671 = vpop.f32.mrb[0].mxu0
  %1672 = vmatprep.mubr.f32.mxu0 0.0
  %1673 = vmatmul.mubr.f32.gmra.mrb[0].mxu0 %v1376
  %v1674 = vpop.f32.mrb[0].mxu0
  %v1675 = vadd.f32 %v78, %v1674
  %v1676 = vpop.f32.mrb[0].mxu0
  %1677 = vmatprep.mubr.f32.mxu0 0.0
  %1678 = vmatmul.mubr.f32.gmra.mrb[0].mxu0 %v1379
  %v1679 = vpop.f32.mrb[0].mxu0
  %v1680 = vadd.f32 %v78, %v1679
  %v1681 = vpop.f32.mrb[0].mxu0
  %1682 = vmatprep.mubr.f32.mxu0 0.0
  %1683 = vmatmul.mubr.f32.gmra.mrb[0].mxu0 %v1382
  %v1684 = vpop.f32.mrb[0].mxu0
  %v1685 = vadd.f32 %v78, %v1684
  %v1686 = vpop.f32.mrb[0].mxu0
  %1687 = vmatprep.mubr.f32.mxu0 0.0
  %1688 = vmatmul.mubr.f32.gmra.mrb[0].mxu0 %v1385
  %v1689 = vpop.f32.mrb[0].mxu0
  %v1690 = vadd.f32 %v78, %v1689
  %v1691 = vpop.f32.mrb[0].mxu0
  %1692 = vmatprep.mubr.f32.mxu0 0.0
  %1693 = vmatmul.mubr.f32.gmra.mrb[0].mxu0 %v1388
  %v1694 = vpop.f32.mrb[0].mxu0
  %v1695 = vadd.f32 %v78, %v1694
  %v1696 = vpop.f32.mrb[0].mxu0
  %1697 = vmatprep.mubr.f32.mxu0 0.0
  %1698 = vmatmul.mubr.f32.gmra.mrb[0].mxu0 %v1391
  %v1699 = vpop.f32.mrb[0].mxu0
  %v1700 = vadd.f32 %v78, %v1699
  %v1701 = vpop.f32.mrb[0].mxu0
  %1702 = vdwg.mxu0
  %v1703 = vmax.f32 %v1460, 0.0
  %v1704 = vmax.f32 %v1465, 0.0
  %v1705 = vmax.f32 %v1470, 0.0
  %v1706 = vmax.f32 %v1475, 0.0
  %v1707 = vmax.f32 %v1480, 0.0
  %v1708 = vmax.f32 %v1485, 0.0
  %v1709 = vmax.f32 %v1490, 0.0
  %v1710 = vmax.f32 %v1495, 0.0
  %v1711 = vmax.f32 %v1500, 0.0
  %v1712 = vmax.f32 %v1505, 0.0
  %v1713 = vmax.f32 %v1510, 0.0
  %v1714 = vmax.f32 %v1515, 0.0
  %v1715 = vmax.f32 %v1520, 0.0
  %v1716 = vmax.f32 %v1525, 0.0
  %v1717 = vmax.f32 %v1530, 0.0
  %v1718 = vmax.f32 %v1535, 0.0
  %v1719 = vmax.f32 %v1540, 0.0
  %v1720 = vmax.f32 %v1545, 0.0
  %v1721 = vmax.f32 %v1550, 0.0
  %v1722 = vmax.f32 %v1555, 0.0
  %v1723 = vmax.f32 %v1560, 0.0
  %v1724 = vmax.f32 %v1565, 0.0
  %v1725 = vmax.f32 %v1570, 0.0
  %v1726 = vmax.f32 %v1575, 0.0
  %v1727 = vmax.f32 %v1580, 0.0
  %v1728 = vmax.f32 %v1585, 0.0
  %v1729 = vmax.f32 %v1590, 0.0
  %v1730 = vmax.f32 %v1595, 0.0
  %v1731 = vmax.f32 %v1600, 0.0
  %v1732 = vmax.f32 %v1605, 0.0
  %v1733 = vmax.f32 %v1610, 0.0
  %v1734 = vmax.f32 %v1615, 0.0
  %v1735 = vmax.f32 %v1620, 0.0
  %v1736 = vmax.f32 %v1625, 0.0
  %v1737 = vmax.f32 %v1630, 0.0
  %v1738 = vmax.f32 %v1635, 0.0
  %v1739 = vmax.f32 %v1640, 0.0
  %v1740 = vmax.f32 %v1645, 0.0
  %v1741 = vmax.f32 %v1650, 0.0
  %v1742 = vmax.f32 %v1655, 0.0
  %v1743 = vmax.f32 %v1660, 0.0
  %v1744 = vmax.f32 %v1665, 0.0
  %v1745 = vmax.f32 %v1670, 0.0
  %v1746 = vmax.f32 %v1675, 0.0
  %v1747 = vmax.f32 %v1680, 0.0
  %v1748 = vmax.f32 %v1685, 0.0
  %v1749 = vmax.f32 %v1690, 0.0
  %v1750 = vmax.f32 %v1695, 0.0
  %v1751 = vmax.f32 %v1700, 0.0
  %s1752 = scalar_lea.vmem %s0, 1176
  %v1753 = vld [vmem:[%s1752] sm:$0xff]
  %v1754 = vld [vmem:[%s1752 + $0x8] sm:$0xff]
  %v1755 = vld [vmem:[%s1752 + $0x10] sm:$0xff]
  %v1756 = vld [vmem:[%s1752 + $0x18] sm:$0xff]
  %v1757 = vld [vmem:[%s1752 + $0x20] sm:$0xff]
  %v1758 = vld [vmem:[%s1752 + $0x28] sm:$0xff]
  %v1759 = vld [vmem:[%s1752 + $0x30] sm:$0xff]
  %v1760 = vld [vmem:[%s1752 + $0x38] sm:$0xff]
  %v1761 = vld [vmem:[%s1752 + $0x40] sm:$0xff]
  %v1762 = vld [vmem:[%s1752 + $0x48] sm:$0xff]
  %v1763 = vld [vmem:[%s1752 + $0x50] sm:$0xff]
  %v1764 = vld [vmem:[%s1752 + $0x58] sm:$0xff]
  %v1765 = vld [vmem:[%s1752 + $0x60] sm:$0xff]
  %v1766 = vld [vmem:[%s1752 + $0x68] sm:$0xff]
  %v1767 = vld [vmem:[%s1752 + $0x70] sm:$0xff]
  %v1768 = vld [vmem:[%s1752 + $0x78] sm:$0xff]
  %v1769 = vld [vmem:[%s1752 + $0x80] sm:$0xff]
  %v1770 = vld [vmem:[%s1752 + $0x88] sm:$0xff]
  %v1771 = vld [vmem:[%s1752 + $0x90] sm:$0xff]
  %v1772 = vld [vmem:[%s1752 + $0x98] sm:$0xff]
  %v1773 = vld [vmem:[%s1752 + $0xa0] sm:$0xff]
  %v1774 = vld [vmem:[%s1752 + $0xa8] sm:$0xff]
  %v1775 = vld [vmem:[%s1752 + $0xb0] sm:$0xff]
  %v1776 = vld [vmem:[%s1752 + $0xb8] sm:$0xff]
  %v1777 = vld [vmem:[%s1752 + $0xc0] sm:$0xff]
  %v1778 = vld [vmem:[%s1752 + $0xc8] sm:$0xff]
  %v1779 = vld [vmem:[%s1752 + $0xd0] sm:$0xff]
  %v1780 = vld [vmem:[%s1752 + $0xd8] sm:$0xff]
  %v1781 = vld [vmem:[%s1752 + $0xe0] sm:$0xff]
  %v1782 = vld [vmem:[%s1752 + $0xe8] sm:$0xff]
  %v1783 = vld [vmem:[%s1752 + $0xf0] sm:$0xff]
  %v1784 = vld [vmem:[%s1752 + $0xf8] sm:$0xff]
  %v1785 = vld [vmem:[%s1752 + $0x100] sm:$0xff]
  %v1786 = vld [vmem:[%s1752 + $0x108] sm:$0xff]
  %v1787 = vld [vmem:[%s1752 + $0x110] sm:$0xff]
  %v1788 = vld [vmem:[%s1752 + $0x118] sm:$0xff]
  %v1789 = vld [vmem:[%s1752 + $0x120] sm:$0xff]
  %v1790 = vld [vmem:[%s1752 + $0x128] sm:$0xff]
  %v1791 = vld [vmem:[%s1752 + $0x130] sm:$0xff]
  %v1792 = vld [vmem:[%s1752 + $0x138] sm:$0xff]
  %v1793 = vld [vmem:[%s1752 + $0x140] sm:$0xff]
  %v1794 = vld [vmem:[%s1752 + $0x148] sm:$0xff]
  %v1795 = vld [vmem:[%s1752 + $0x150] sm:$0xff]
  %v1796 = vld [vmem:[%s1752 + $0x158] sm:$0xff]
  %v1797 = vld [vmem:[%s1752 + $0x160] sm:$0xff]
  %v1798 = vld [vmem:[%s1752 + $0x168] sm:$0xff]
  %v1799 = vld [vmem:[%s1752 + $0x170] sm:$0xff]
  %v1800 = vld [vmem:[%s1752 + $0x178] sm:$0xff]
  %v1801 = vld [vmem:[%s1752 + $0x180] sm:$0xff]
  %v1803 = vsel %vm80, %v1753, 0
  %v1806 = vsel %vm80, %v1754, 0
  %v1809 = vsel %vm80, %v1755, 0
  %v1812 = vsel %vm80, %v1756, 0
  %v1815 = vsel %vm80, %v1757, 0
  %v1818 = vsel %vm80, %v1758, 0
  %v1821 = vsel %vm80, %v1759, 0
  %v1824 = vsel %vm80, %v1760, 0
  %v1827 = vsel %vm80, %v1761, 0
  %v1830 = vsel %vm80, %v1762, 0
  %v1833 = vsel %vm80, %v1763, 0
  %v1836 = vsel %vm80, %v1764, 0
  %v1839 = vsel %vm80, %v1765, 0
  %v1842 = vsel %vm80, %v1766, 0
  %v1845 = vsel %vm80, %v1767, 0
  %v1848 = vsel %vm80, %v1768, 0
  %v1851 = vsel %vm80, %v1769, 0
  %v1854 = vsel %vm80, %v1770, 0
  %v1857 = vsel %vm80, %v1771, 0
  %v1860 = vsel %vm80, %v1772, 0
  %v1863 = vsel %vm80, %v1773, 0
  %v1866 = vsel %vm80, %v1774, 0
  %v1869 = vsel %vm80, %v1775, 0
  %v1872 = vsel %vm80, %v1776, 0
  %v1875 = vsel %vm80, %v1777, 0
  %v1878 = vsel %vm80, %v1778, 0
  %v1881 = vsel %vm80, %v1779, 0
  %v1884 = vsel %vm80, %v1780, 0
  %v1887 = vsel %vm80, %v1781, 0
  %v1890 = vsel %vm80, %v1782, 0
  %v1893 = vsel %vm80, %v1783, 0
  %v1896 = vsel %vm80, %v1784, 0
  %v1899 = vsel %vm80, %v1785, 0
  %v1902 = vsel %vm80, %v1786, 0
  %v1905 = vsel %vm80, %v1787, 0
  %v1908 = vsel %vm80, %v1788, 0
  %v1911 = vsel %vm80, %v1789, 0
  %v1914 = vsel %vm80, %v1790, 0
  %v1917 = vsel %vm80, %v1791, 0
  %v1920 = vsel %vm80, %v1792, 0
  %v1923 = vsel %vm80, %v1793, 0
  %v1926 = vsel %vm80, %v1794, 0
  %v1929 = vsel %vm80, %v1795, 0
  %v1932 = vsel %vm80, %v1796, 0
  %v1935 = vsel %vm80, %v1797, 0
  %v1938 = vsel %vm80, %v1798, 0
  %v1941 = vsel %vm80, %v1799, 0
  %v1944 = vsel %vm80, %v1800, 0
  %v1947 = vsel %vm80, %v1801, 0
  %1949 = vmatprep.subr.mxu0 0.0
  %1950 = vmatpush1.msra.mxu0 %v14
  %1951 = vmatprep.subr.mxu0 0.0
  %1952 = vmatpush1.msra.mxu0 %v15
  %1953 = vmatprep.subr.mxu0 0.0
  %1954 = vmatpush1.msra.mxu0 %v16
  %1955 = vmatprep.subr.mxu0 0.0
  %1956 = vmatpush1.msra.mxu0 %v17
  %1957 = vmatprep.subr.mxu0 0.0
  %1958 = vmatpush1.msra.mxu0 %v18
  %1959 = vmatprep.subr.mxu0 0.0
  %1960 = vmatpush1.msra.mxu0 %v19
  %1961 = vmatprep.subr.mxu0 0.0
  %1962 = vmatpush1.msra.mxu0 %v20
  %1963 = vmatprep.subr.mxu0 0.0
  %1964 = vmatpush1.msra.mxu0 %v21
  %1965 = vmatprep.subr.mxu0 0.0
  %1966 = vmatpush1.msra.mxu0 %v22
  %1967 = vmatprep.subr.mxu0 0.0
  %1968 = vmatpush1.msra.mxu0 %v230
  %1969 = vmatprep.subr.mxu0 0.0
  %1970 = vmatpush1.msra.mxu0 0.0
  %1971 = vmatprep.subr.mxu0 0.0
  %1972 = vmatpush1.msra.mxu0 0.0
  %1973 = vmatprep.subr.mxu0 0.0
  %1974 = vmatpush1.msra.mxu0 0.0
  %1975 = vmatprep.subr.mxu0 0.0
  %1976 = vmatpush1.msra.mxu0 0.0
  %1977 = vmatprep.subr.mxu0 0.0
  %1978 = vmatpush1.msra.mxu0 0.0
  %1979 = vmatprep.subr.mxu0 0.0
  %1980 = vmatpush1.msra.mxu0 0.0
  %1981 = vmatprep.subr.mxu0 0.0
  %1982 = vmatpush1.msra.mxu0 0.0
  %1983 = vmatprep.subr.mxu0 0.0
  %1984 = vmatpush1.msra.mxu0 0.0
  %1985 = vmatprep.subr.mxu0 0.0
  %1986 = vmatpush1.msra.mxu0 0.0
  %1987 = vmatprep.subr.mxu0 0.0
  %1988 = vmatpush1.msra.mxu0 0.0
  %1989 = vmatprep.subr.mxu0 0.0
  %1990 = vmatpush1.msra.mxu0 0.0
  %1991 = vmatprep.subr.mxu0 0.0
  %1992 = vmatpush1.msra.mxu0 0.0
  %1993 = vmatprep.subr.mxu0 0.0
  %1994 = vmatpush1.msra.mxu0 0.0
  %1995 = vmatprep.subr.mxu0 0.0
  %1996 = vmatpush1.msra.mxu0 0.0
  %1997 = vmatprep.subr.mxu0 0.0
  %1998 = vmatpush1.msra.mxu0 0.0
  %1999 = vmatprep.subr.mxu0 0.0
  %2000 = vmatpush1.msra.mxu0 0.0
  %2001 = vmatprep.subr.mxu0 0.0
  %2002 = vmatpush1.msra.mxu0 0.0
  %2003 = vmatprep.subr.mxu0 0.0
  %2004 = vmatpush1.msra.mxu0 0.0
  %2005 = vmatprep.subr.mxu0 0.0
  %2006 = vmatpush1.msra.mxu0 0.0
  %2007 = vmatprep.subr.mxu0 0.0
  %2008 = vmatpush1.msra.mxu0 0.0
  %2009 = vmatprep.subr.mxu0 0.0
  %2010 = vmatpush1.msra.mxu0 0.0
  %2011 = vmatprep.subr.mxu0 0.0
  %2012 = vmatpush1.msra.mxu0 0.0
  %2013 = vmatprep.mubr.f32.mxu0 0.0
  %2014 = vmatmul.mubr.f32.gmra.mrb[0].mxu0 %v1803
  %v2015 = vpop.f32.mrb[0].mxu0
  %v2016 = vadd.f32 %v78, %v2015
  %v2017 = vpop.f32.mrb[0].mxu0
  %2018 = vmatprep.mubr.f32.mxu0 0.0
  %2019 = vmatmul.mubr.f32.gmra.mrb[0].mxu0 %v1806
  %v2020 = vpop.f32.mrb[0].mxu0
  %v2021 = vadd.f32 %v78, %v2020
  %v2022 = vpop.f32.mrb[0].mxu0
  %2023 = vmatprep.mubr.f32.mxu0 0.0
  %2024 = vmatmul.mubr.f32.gmra.mrb[0].mxu0 %v1809
  %v2025 = vpop.f32.mrb[0].mxu0
  %v2026 = vadd.f32 %v78, %v2025
  %v2027 = vpop.f32.mrb[0].mxu0
  %2028 = vmatprep.mubr.f32.mxu0 0.0
  %2029 = vmatmul.mubr.f32.gmra.mrb[0].mxu0 %v1812
  %v2030 = vpop.f32.mrb[0].mxu0
  %v2031 = vadd.f32 %v78, %v2030
  %v2032 = vpop.f32.mrb[0].mxu0
  %2033 = vmatprep.mubr.f32.mxu0 0.0
  %2034 = vmatmul.mubr.f32.gmra.mrb[0].mxu0 %v1815
  %v2035 = vpop.f32.mrb[0].mxu0
  %v2036 = vadd.f32 %v78, %v2035
  %v2037 = vpop.f32.mrb[0].mxu0
  %2038 = vmatprep.mubr.f32.mxu0 0.0
  %2039 = vmatmul.mubr.f32.gmra.mrb[0].mxu0 %v1818
  %v2040 = vpop.f32.mrb[0].mxu0
  %v2041 = vadd.f32 %v78, %v2040
  %v2042 = vpop.f32.mrb[0].mxu0
  %2043 = vmatprep.mubr.f32.mxu0 0.0
  %2044 = vmatmul.mubr.f32.gmra.mrb[0].mxu0 %v1821
  %v2045 = vpop.f32.mrb[0].mxu0
  %v2046 = vadd.f32 %v78, %v2045
  %v2047 = vpop.f32.mrb[0].mxu0
  %2048 = vmatprep.mubr.f32.mxu0 0.0
  %2049 = vmatmul.mubr.f32.gmra.mrb[0].mxu0 %v1824
  %v2050 = vpop.f32.mrb[0].mxu0
  %v2051 = vadd.f32 %v78, %v2050
  %v2052 = vpop.f32.mrb[0].mxu0
  %2053 = vmatprep.mubr.f32.mxu0 0.0
  %2054 = vmatmul.mubr.f32.gmra.mrb[0].mxu0 %v1827
  %v2055 = vpop.f32.mrb[0].mxu0
  %v2056 = vadd.f32 %v78, %v2055
  %v2057 = vpop.f32.mrb[0].mxu0
  %2058 = vmatprep.mubr.f32.mxu0 0.0
  %2059 = vmatmul.mubr.f32.gmra.mrb[0].mxu0 %v1830
  %v2060 = vpop.f32.mrb[0].mxu0
  %v2061 = vadd.f32 %v78, %v2060
  %v2062 = vpop.f32.mrb[0].mxu0
  %2063 = vmatprep.mubr.f32.mxu0 0.0
  %2064 = vmatmul.mubr.f32.gmra.mrb[0].mxu0 %v1833
  %v2065 = vpop.f32.mrb[0].mxu0
  %v2066 = vadd.f32 %v78, %v2065
  %v2067 = vpop.f32.mrb[0].mxu0
  %2068 = vmatprep.mubr.f32.mxu0 0.0
  %2069 = vmatmul.mubr.f32.gmra.mrb[0].mxu0 %v1836
  %v2070 = vpop.f32.mrb[0].mxu0
  %v2071 = vadd.f32 %v78, %v2070
  %v2072 = vpop.f32.mrb[0].mxu0
  %2073 = vmatprep.mubr.f32.mxu0 0.0
  %2074 = vmatmul.mubr.f32.gmra.mrb[0].mxu0 %v1839
  %v2075 = vpop.f32.mrb[0].mxu0
  %v2076 = vadd.f32 %v78, %v2075
  %v2077 = vpop.f32.mrb[0].mxu0
  %2078 = vmatprep.mubr.f32.mxu0 0.0
  %2079 = vmatmul.mubr.f32.gmra.mrb[0].mxu0 %v1842
  %v2080 = vpop.f32.mrb[0].mxu0
  %v2081 = vadd.f32 %v78, %v2080
  %v2082 = vpop.f32.mrb[0].mxu0
  %2083 = vmatprep.mubr.f32.mxu0 0.0
  %2084 = vmatmul.mubr.f32.gmra.mrb[0].mxu0 %v1845
  %v2085 = vpop.f32.mrb[0].mxu0
  %v2086 = vadd.f32 %v78, %v2085
  %v2087 = vpop.f32.mrb[0].mxu0
  %2088 = vmatprep.mubr.f32.mxu0 0.0
  %2089 = vmatmul.mubr.f32.gmra.mrb[0].mxu0 %v1848
  %v2090 = vpop.f32.mrb[0].mxu0
  %v2091 = vadd.f32 %v78, %v2090
  %v2092 = vpop.f32.mrb[0].mxu0
  %2093 = vmatprep.mubr.f32.mxu0 0.0
  %2094 = vmatmul.mubr.f32.gmra.mrb[0].mxu0 %v1851
  %v2095 = vpop.f32.mrb[0].mxu0
  %v2096 = vadd.f32 %v78, %v2095
  %v2097 = vpop.f32.mrb[0].mxu0
  %2098 = vmatprep.mubr.f32.mxu0 0.0
  %2099 = vmatmul.mubr.f32.gmra.mrb[0].mxu0 %v1854
  %v2100 = vpop.f32.mrb[0].mxu0
  %v2101 = vadd.f32 %v78, %v2100
  %v2102 = vpop.f32.mrb[0].mxu0
  %2103 = vmatprep.mubr.f32.mxu0 0.0
  %2104 = vmatmul.mubr.f32.gmra.mrb[0].mxu0 %v1857
  %v2105 = vpop.f32.mrb[0].mxu0
  %v2106 = vadd.f32 %v78, %v2105
  %v2107 = vpop.f32.mrb[0].mxu0
  %2108 = vmatprep.mubr.f32.mxu0 0.0
  %2109 = vmatmul.mubr.f32.gmra.mrb[0].mxu0 %v1860
  %v2110 = vpop.f32.mrb[0].mxu0
  %v2111 = vadd.f32 %v78, %v2110
  %v2112 = vpop.f32.mrb[0].mxu0
  %2113 = vmatprep.mubr.f32.mxu0 0.0
  %2114 = vmatmul.mubr.f32.gmra.mrb[0].mxu0 %v1863
  %v2115 = vpop.f32.mrb[0].mxu0
  %v2116 = vadd.f32 %v78, %v2115
  %v2117 = vpop.f32.mrb[0].mxu0
  %2118 = vmatprep.mubr.f32.mxu0 0.0
  %2119 = vmatmul.mubr.f32.gmra.mrb[0].mxu0 %v1866
  %v2120 = vpop.f32.mrb[0].mxu0
  %v2121 = vadd.f32 %v78, %v2120
  %v2122 = vpop.f32.mrb[0].mxu0
  %2123 = vmatprep.mubr.f32.mxu0 0.0
  %2124 = vmatmul.mubr.f32.gmra.mrb[0].mxu0 %v1869
  %v2125 = vpop.f32.mrb[0].mxu0
  %v2126 = vadd.f32 %v78, %v2125
  %v2127 = vpop.f32.mrb[0].mxu0
  %2128 = vmatprep.mubr.f32.mxu0 0.0
  %2129 = vmatmul.mubr.f32.gmra.mrb[0].mxu0 %v1872
  %v2130 = vpop.f32.mrb[0].mxu0
  %v2131 = vadd.f32 %v78, %v2130
  %v2132 = vpop.f32.mrb[0].mxu0
  %2133 = vmatprep.mubr.f32.mxu0 0.0
  %2134 = vmatmul.mubr.f32.gmra.mrb[0].mxu0 %v1875
  %v2135 = vpop.f32.mrb[0].mxu0
  %v2136 = vadd.f32 %v78, %v2135
  %v2137 = vpop.f32.mrb[0].mxu0
  %2138 = vmatprep.mubr.f32.mxu0 0.0
  %2139 = vmatmul.mubr.f32.gmra.mrb[0].mxu0 %v1878
  %v2140 = vpop.f32.mrb[0].mxu0
  %v2141 = vadd.f32 %v78, %v2140
  %v2142 = vpop.f32.mrb[0].mxu0
  %2143 = vmatprep.mubr.f32.mxu0 0.0
  %2144 = vmatmul.mubr.f32.gmra.mrb[0].mxu0 %v1881
  %v2145 = vpop.f32.mrb[0].mxu0
  %v2146 = vadd.f32 %v78, %v2145
  %v2147 = vpop.f32.mrb[0].mxu0
  %2148 = vmatprep.mubr.f32.mxu0 0.0
  %2149 = vmatmul.mubr.f32.gmra.mrb[0].mxu0 %v1884
  %v2150 = vpop.f32.mrb[0].mxu0
  %v2151 = vadd.f32 %v78, %v2150
  %v2152 = vpop.f32.mrb[0].mxu0
  %2153 = vmatprep.mubr.f32.mxu0 0.0
  %2154 = vmatmul.mubr.f32.gmra.mrb[0].mxu0 %v1887
  %v2155 = vpop.f32.mrb[0].mxu0
  %v2156 = vadd.f32 %v78, %v2155
  %v2157 = vpop.f32.mrb[0].mxu0
  %2158 = vmatprep.mubr.f32.mxu0 0.0
  %2159 = vmatmul.mubr.f32.gmra.mrb[0].mxu0 %v1890
  %v2160 = vpop.f32.mrb[0].mxu0
  %v2161 = vadd.f32 %v78, %v2160
  %v2162 = vpop.f32.mrb[0].mxu0
  %2163 = vmatprep.mubr.f32.mxu0 0.0
  %2164 = vmatmul.mubr.f32.gmra.mrb[0].mxu0 %v1893
  %v2165 = vpop.f32.mrb[0].mxu0
  %v2166 = vadd.f32 %v78, %v2165
  %v2167 = vpop.f32.mrb[0].mxu0
  %2168 = vmatprep.mubr.f32.mxu0 0.0
  %2169 = vmatmul.mubr.f32.gmra.mrb[0].mxu0 %v1896
  %v2170 = vpop.f32.mrb[0].mxu0
  %v2171 = vadd.f32 %v78, %v2170
  %v2172 = vpop.f32.mrb[0].mxu0
  %2173 = vmatprep.mubr.f32.mxu0 0.0
  %2174 = vmatmul.mubr.f32.gmra.mrb[0].mxu0 %v1899
  %v2175 = vpop.f32.mrb[0].mxu0
  %v2176 = vadd.f32 %v78, %v2175
  %v2177 = vpop.f32.mrb[0].mxu0
  %2178 = vmatprep.mubr.f32.mxu0 0.0
  %2179 = vmatmul.mubr.f32.gmra.mrb[0].mxu0 %v1902
  %v2180 = vpop.f32.mrb[0].mxu0
  %v2181 = vadd.f32 %v78, %v2180
  %v2182 = vpop.f32.mrb[0].mxu0
  %2183 = vmatprep.mubr.f32.mxu0 0.0
  %2184 = vmatmul.mubr.f32.gmra.mrb[0].mxu0 %v1905
  %v2185 = vpop.f32.mrb[0].mxu0
  %v2186 = vadd.f32 %v78, %v2185
  %v2187 = vpop.f32.mrb[0].mxu0
  %2188 = vmatprep.mubr.f32.mxu0 0.0
  %2189 = vmatmul.mubr.f32.gmra.mrb[0].mxu0 %v1908
  %v2190 = vpop.f32.mrb[0].mxu0
  %v2191 = vadd.f32 %v78, %v2190
  %v2192 = vpop.f32.mrb[0].mxu0
  %2193 = vmatprep.mubr.f32.mxu0 0.0
  %2194 = vmatmul.mubr.f32.gmra.mrb[0].mxu0 %v1911
  %v2195 = vpop.f32.mrb[0].mxu0
  %v2196 = vadd.f32 %v78, %v2195
  %v2197 = vpop.f32.mrb[0].mxu0
  %2198 = vmatprep.mubr.f32.mxu0 0.0
  %2199 = vmatmul.mubr.f32.gmra.mrb[0].mxu0 %v1914
  %v2200 = vpop.f32.mrb[0].mxu0
  %v2201 = vadd.f32 %v78, %v2200
  %v2202 = vpop.f32.mrb[0].mxu0
  %2203 = vmatprep.mubr.f32.mxu0 0.0
  %2204 = vmatmul.mubr.f32.gmra.mrb[0].mxu0 %v1917
  %v2205 = vpop.f32.mrb[0].mxu0
  %v2206 = vadd.f32 %v78, %v2205
  %v2207 = vpop.f32.mrb[0].mxu0
  %2208 = vmatprep.mubr.f32.mxu0 0.0
  %2209 = vmatmul.mubr.f32.gmra.mrb[0].mxu0 %v1920
  %v2210 = vpop.f32.mrb[0].mxu0
  %v2211 = vadd.f32 %v78, %v2210
  %v2212 = vpop.f32.mrb[0].mxu0
  %2213 = vmatprep.mubr.f32.mxu0 0.0
  %2214 = vmatmul.mubr.f32.gmra.mrb[0].mxu0 %v1923
  %v2215 = vpop.f32.mrb[0].mxu0
  %v2216 = vadd.f32 %v78, %v2215
  %v2217 = vpop.f32.mrb[0].mxu0
  %2218 = vmatprep.mubr.f32.mxu0 0.0
  %2219 = vmatmul.mubr.f32.gmra.mrb[0].mxu0 %v1926
  %v2220 = vpop.f32.mrb[0].mxu0
  %v2221 = vadd.f32 %v78, %v2220
  %v2222 = vpop.f32.mrb[0].mxu0
  %2223 = vmatprep.mubr.f32.mxu0 0.0
  %2224 = vmatmul.mubr.f32.gmra.mrb[0].mxu0 %v1929
  %v2225 = vpop.f32.mrb[0].mxu0
  %v2226 = vadd.f32 %v78, %v2225
  %v2227 = vpop.f32.mrb[0].mxu0
  %2228 = vmatprep.mubr.f32.mxu0 0.0
  %2229 = vmatmul.mubr.f32.gmra.mrb[0].mxu0 %v1932
  %v2230 = vpop.f32.mrb[0].mxu0
  %v2231 = vadd.f32 %v78, %v2230
  %v2232 = vpop.f32.mrb[0].mxu0
  %2233 = vmatprep.mubr.f32.mxu0 0.0
  %2234 = vmatmul.mubr.f32.gmra.mrb[0].mxu0 %v1935
  %v2235 = vpop.f32.mrb[0].mxu0
  %v2236 = vadd.f32 %v78, %v2235
  %v2237 = vpop.f32.mrb[0].mxu0
  %2238 = vmatprep.mubr.f32.mxu0 0.0
  %2239 = vmatmul.mubr.f32.gmra.mrb[0].mxu0 %v1938
  %v2240 = vpop.f32.mrb[0].mxu0
  %v2241 = vadd.f32 %v78, %v2240
  %v2242 = vpop.f32.mrb[0].mxu0
  %2243 = vmatprep.mubr.f32.mxu0 0.0
  %2244 = vmatmul.mubr.f32.gmra.mrb[0].mxu0 %v1941
  %v2245 = vpop.f32.mrb[0].mxu0
  %v2246 = vadd.f32 %v78, %v2245
  %v2247 = vpop.f32.mrb[0].mxu0
  %2248 = vmatprep.mubr.f32.mxu0 0.0
  %2249 = vmatmul.mubr.f32.gmra.mrb[0].mxu0 %v1944
  %v2250 = vpop.f32.mrb[0].mxu0
  %v2251 = vadd.f32 %v78, %v2250
  %v2252 = vpop.f32.mrb[0].mxu0
  %2253 = vmatprep.mubr.f32.mxu0 0.0
  %2254 = vmatmul.mubr.f32.gmra.mrb[0].mxu0 %v1947
  %v2255 = vpop.f32.mrb[0].mxu0
  %v2256 = vadd.f32 %v78, %v2255
  %v2257 = vpop.f32.mrb[0].mxu0
  %2258 = vdwg.mxu0
  %v2259 = vmax.f32 %v2016, 0.0
  %v2260 = vmax.f32 %v2021, 0.0
  %v2261 = vmax.f32 %v2026, 0.0
  %v2262 = vmax.f32 %v2031, 0.0
  %v2263 = vmax.f32 %v2036, 0.0
  %v2264 = vmax.f32 %v2041, 0.0
  %v2265 = vmax.f32 %v2046, 0.0
  %v2266 = vmax.f32 %v2051, 0.0
  %v2267 = vmax.f32 %v2056, 0.0
  %v2268 = vmax.f32 %v2061, 0.0
  %v2269 = vmax.f32 %v2066, 0.0
  %v2270 = vmax.f32 %v2071, 0.0
  %v2271 = vmax.f32 %v2076, 0.0
  %v2272 = vmax.f32 %v2081, 0.0
  %v2273 = vmax.f32 %v2086, 0.0
  %v2274 = vmax.f32 %v2091, 0.0
  %v2275 = vmax.f32 %v2096, 0.0
  %v2276 = vmax.f32 %v2101, 0.0
  %v2277 = vmax.f32 %v2106, 0.0
  %v2278 = vmax.f32 %v2111, 0.0
  %v2279 = vmax.f32 %v2116, 0.0
  %v2280 = vmax.f32 %v2121, 0.0
  %v2281 = vmax.f32 %v2126, 0.0
  %v2282 = vmax.f32 %v2131, 0.0
  %v2283 = vmax.f32 %v2136, 0.0
  %v2284 = vmax.f32 %v2141, 0.0
  %v2285 = vmax.f32 %v2146, 0.0
  %v2286 = vmax.f32 %v2151, 0.0
  %v2287 = vmax.f32 %v2156, 0.0
  %v2288 = vmax.f32 %v2161, 0.0
  %v2289 = vmax.f32 %v2166, 0.0
  %v2290 = vmax.f32 %v2171, 0.0
  %v2291 = vmax.f32 %v2176, 0.0
  %v2292 = vmax.f32 %v2181, 0.0
  %v2293 = vmax.f32 %v2186, 0.0
  %v2294 = vmax.f32 %v2191, 0.0
  %v2295 = vmax.f32 %v2196, 0.0
  %v2296 = vmax.f32 %v2201, 0.0
  %v2297 = vmax.f32 %v2206, 0.0
  %v2298 = vmax.f32 %v2211, 0.0
  %v2299 = vmax.f32 %v2216, 0.0
  %v2300 = vmax.f32 %v2221, 0.0
  %v2301 = vmax.f32 %v2226, 0.0
  %v2302 = vmax.f32 %v2231, 0.0
  %v2303 = vmax.f32 %v2236, 0.0
  %v2304 = vmax.f32 %v2241, 0.0
  %v2305 = vmax.f32 %v2246, 0.0
  %v2306 = vmax.f32 %v2251, 0.0
  %v2307 = vmax.f32 %v2256, 0.0
  %v2308 = vmax.f32 %v1703, %v2259
  %v2309 = vmax.f32 %v1704, %v2260
  %v2310 = vmax.f32 %v1705, %v2261
  %v2311 = vmax.f32 %v1706, %v2262
  %v2312 = vmax.f32 %v1707, %v2263
  %v2313 = vmax.f32 %v1708, %v2264
  %v2314 = vmax.f32 %v1709, %v2265
  %v2315 = vmax.f32 %v1710, %v2266
  %v2316 = vmax.f32 %v1711, %v2267
  %v2317 = vmax.f32 %v1712, %v2268
  %v2318 = vmax.f32 %v1713, %v2269
  %v2319 = vmax.f32 %v1714, %v2270
  %v2320 = vmax.f32 %v1715, %v2271
  %v2321 = vmax.f32 %v1716, %v2272
  %v2322 = vmax.f32 %v1717, %v2273
  %v2323 = vmax.f32 %v1718, %v2274
  %v2324 = vmax.f32 %v1719, %v2275
  %v2325 = vmax.f32 %v1720, %v2276
  %v2326 = vmax.f32 %v1721, %v2277
  %v2327 = vmax.f32 %v1722, %v2278
  %v2328 = vmax.f32 %v1723, %v2279
  %v2329 = vmax.f32 %v1724, %v2280
  %v2330 = vmax.f32 %v1725, %v2281
  %v2331 = vmax.f32 %v1726, %v2282
  %v2332 = vmax.f32 %v1727, %v2283
  %v2333 = vmax.f32 %v1728, %v2284
  %v2334 = vmax.f32 %v1729, %v2285
  %v2335 = vmax.f32 %v1730, %v2286
  %v2336 = vmax.f32 %v1731, %v2287
  %v2337 = vmax.f32 %v1732, %v2288
  %v2338 = vmax.f32 %v1733, %v2289
  %v2339 = vmax.f32 %v1734, %v2290
  %v2340 = vmax.f32 %v1735, %v2291
  %v2341 = vmax.f32 %v1736, %v2292
  %v2342 = vmax.f32 %v1737, %v2293
  %v2343 = vmax.f32 %v1738, %v2294
  %v2344 = vmax.f32 %v1739, %v2295
  %v2345 = vmax.f32 %v1740, %v2296
  %v2346 = vmax.f32 %v1741, %v2297
  %v2347 = vmax.f32 %v1742, %v2298
  %v2348 = vmax.f32 %v1743, %v2299
  %v2349 = vmax.f32 %v1744, %v2300
  %v2350 = vmax.f32 %v1745, %v2301
  %v2351 = vmax.f32 %v1746, %v2302
  %v2352 = vmax.f32 %v1747, %v2303
  %v2353 = vmax.f32 %v1748, %v2304
  %v2354 = vmax.f32 %v1749, %v2305
  %v2355 = vmax.f32 %v1750, %v2306
  %v2356 = vmax.f32 %v1751, %v2307
  %v2357 = vmax.f32 %v1147, %v2308
  %v2358 = vmax.f32 %v1148, %v2309
  %v2359 = vmax.f32 %v1149, %v2310
  %v2360 = vmax.f32 %v1150, %v2311
  %v2361 = vmax.f32 %v1151, %v2312
  %v2362 = vmax.f32 %v1152, %v2313
  %v2363 = vmax.f32 %v1153, %v2314
  %v2364 = vmax.f32 %v1154, %v2315
  %v2365 = vmax.f32 %v1155, %v2316
  %v2366 = vmax.f32 %v1156, %v2317
  %v2367 = vmax.f32 %v1157, %v2318
  %v2368 = vmax.f32 %v1158, %v2319
  %v2369 = vmax.f32 %v1159, %v2320
  %v2370 = vmax.f32 %v1160, %v2321
  %v2371 = vmax.f32 %v1161, %v2322
  %v2372 = vmax.f32 %v1162, %v2323
  %v2373 = vmax.f32 %v1163, %v2324
  %v2374 = vmax.f32 %v1164, %v2325
  %v2375 = vmax.f32 %v1165, %v2326
  %v2376 = vmax.f32 %v1166, %v2327
  %v2377 = vmax.f32 %v1167, %v2328
  %v2378 = vmax.f32 %v1168, %v2329
  %v2379 = vmax.f32 %v1169, %v2330
  %v2380 = vmax.f32 %v1170, %v2331
  %v2381 = vmax.f32 %v1171, %v2332
  %v2382 = vmax.f32 %v1172, %v2333
  %v2383 = vmax.f32 %v1173, %v2334
  %v2384 = vmax.f32 %v1174, %v2335
  %v2385 = vmax.f32 %v1175, %v2336
  %v2386 = vmax.f32 %v1176, %v2337
  %v2387 = vmax.f32 %v1177, %v2338
  %v2388 = vmax.f32 %v1178, %v2339
  %v2389 = vmax.f32 %v1179, %v2340
  %v2390 = vmax.f32 %v1180, %v2341
  %v2391 = vmax.f32 %v1181, %v2342
  %v2392 = vmax.f32 %v1182, %v2343
  %v2393 = vmax.f32 %v1183, %v2344
  %v2394 = vmax.f32 %v1184, %v2345
  %v2395 = vmax.f32 %v1185, %v2346
  %v2396 = vmax.f32 %v1186, %v2347
  %v2397 = vmax.f32 %v1187, %v2348
  %v2398 = vmax.f32 %v1188, %v2349
  %v2399 = vmax.f32 %v1189, %v2350
  %v2400 = vmax.f32 %v1190, %v2351
  %v2401 = vmax.f32 %v1191, %v2352
  %v2402 = vmax.f32 %v1192, %v2353
  %v2403 = vmax.f32 %v1193, %v2354
  %v2404 = vmax.f32 %v1194, %v2355
  %v2405 = vmax.f32 %v1195, %v2356
  %2406 = vst [vmem:[%s3] sm:$0xff] %v2357
  %2407 = vst [vmem:[%s3 + $0x8] sm:$0xff] %v2358
  %2408 = vst [vmem:[%s3 + $0x10] sm:$0xff] %v2359
  %2409 = vst [vmem:[%s3 + $0x18] sm:$0xff] %v2360
  %2410 = vst [vmem:[%s3 + $0x20] sm:$0xff] %v2361
  %2411 = vst [vmem:[%s3 + $0x28] sm:$0xff] %v2362
  %2412 = vst [vmem:[%s3 + $0x30] sm:$0xff] %v2363
  %2413 = vst [vmem:[%s3 + $0x38] sm:$0xff] %v2364
  %2414 = vst [vmem:[%s3 + $0x40] sm:$0xff] %v2365
  %2415 = vst [vmem:[%s3 + $0x48] sm:$0xff] %v2366
  %2416 = vst [vmem:[%s3 + $0x50] sm:$0xff] %v2367
  %2417 = vst [vmem:[%s3 + $0x58] sm:$0xff] %v2368
  %2418 = vst [vmem:[%s3 + $0x60] sm:$0xff] %v2369
  %2419 = vst [vmem:[%s3 + $0x68] sm:$0xff] %v2370
  %2420 = vst [vmem:[%s3 + $0x70] sm:$0xff] %v2371
  %2421 = vst [vmem:[%s3 + $0x78] sm:$0xff] %v2372
  %2422 = vst [vmem:[%s3 + $0x80] sm:$0xff] %v2373
  %2423 = vst [vmem:[%s3 + $0x88] sm:$0xff] %v2374
  %2424 = vst [vmem:[%s3 + $0x90] sm:$0xff] %v2375
  %2425 = vst [vmem:[%s3 + $0x98] sm:$0xff] %v2376
  %2426 = vst [vmem:[%s3 + $0xa0] sm:$0xff] %v2377
  %2427 = vst [vmem:[%s3 + $0xa8] sm:$0xff] %v2378
  %2428 = vst [vmem:[%s3 + $0xb0] sm:$0xff] %v2379
  %2429 = vst [vmem:[%s3 + $0xb8] sm:$0xff] %v2380
  %2430 = vst [vmem:[%s3 + $0xc0] sm:$0xff] %v2381
  %2431 = vst [vmem:[%s3 + $0xc8] sm:$0xff] %v2382
  %2432 = vst [vmem:[%s3 + $0xd0] sm:$0xff] %v2383
  %2433 = vst [vmem:[%s3 + $0xd8] sm:$0xff] %v2384
  %2434 = vst [vmem:[%s3 + $0xe0] sm:$0xff] %v2385
  %2435 = vst [vmem:[%s3 + $0xe8] sm:$0xff] %v2386
  %2436 = vst [vmem:[%s3 + $0xf0] sm:$0xff] %v2387
  %2437 = vst [vmem:[%s3 + $0xf8] sm:$0xff] %v2388
  %2438 = vst [vmem:[%s3 + $0x100] sm:$0xff] %v2389
  %2439 = vst [vmem:[%s3 + $0x108] sm:$0xff] %v2390
  %2440 = vst [vmem:[%s3 + $0x110] sm:$0xff] %v2391
  %2441 = vst [vmem:[%s3 + $0x118] sm:$0xff] %v2392
  %2442 = vst [vmem:[%s3 + $0x120] sm:$0xff] %v2393
  %2443 = vst [vmem:[%s3 + $0x128] sm:$0xff] %v2394
  %2444 = vst [vmem:[%s3 + $0x130] sm:$0xff] %v2395
  %2445 = vst [vmem:[%s3 + $0x138] sm:$0xff] %v2396
  %2446 = vst [vmem:[%s3 + $0x140] sm:$0xff] %v2397
  %2447 = vst [vmem:[%s3 + $0x148] sm:$0xff] %v2398
  %2448 = vst [vmem:[%s3 + $0x150] sm:$0xff] %v2399
  %2449 = vst [vmem:[%s3 + $0x158] sm:$0xff] %v2400
  %2450 = vst [vmem:[%s3 + $0x160] sm:$0xff] %v2401
  %2451 = vst [vmem:[%s3 + $0x168] sm:$0xff] %v2402
  %2452 = vst [vmem:[%s3 + $0x170] sm:$0xff] %v2403
  %2453 = vst [vmem:[%s3 + $0x178] sm:$0xff] %v2404
  %2454 = vst [vmem:[%s3 + $0x180] sm:$0xff] %v2405
  // Predicated region
  $region14: #{net_forward.2} parent=0 // pred_check
    _
  $region15: #{net_forward.2} parent=0 // pred_check_branch
    %2456 = sbr.rel (0) target = $region17
  $region16: #{net_forward.2} parent=0 // pred_region
    _
  $region17: #{net_forward.2} parent=0 // pred_fallthru
    _
  // Predicated region
  $region18: #{net_forward.2} parent=0 // pred_check
    _
  $region19: #{net_forward.2} parent=0 // pred_check_branch
    %2458 = sbr.rel (0) target = $region21
  $region20: #{net_forward.2} parent=0 // pred_region
    _
  $region21: #{net_forward.2} parent=0 // pred_fallthru
    _

// kernel: net_forward.3
$region0: #{net_forward.3}
  #allocation0 [shape = 'u32[]', space=smem, size = 0x4, offset = 0x4, fixed_abs, tag = 'smem constant byte address 0x4 - core index']
  #allocation1 [shape = 'u32[144,128]{1,0:T(1,128)}', space=vmem, size = 0x12000, scoped, tag = 'internal scratch']
  #allocation2 [shape = 'f32[50,16]{1,0:T(8,128)}', space=vmem, size = 0x7000, scoped, tag = 'scratch operand']
  %s0 = inlined_call_operand.vmem [shape: f32[2,2,50,150], index: 0, kind: input, shape index: {}]
  %s1 = inlined_call_operand.vmem [shape: f32[150,16], index: 1, kind: input, shape index: {}]
  %s2 = inlined_call_operand.vmem [shape: f32[1,16], index: 2, kind: input, shape index: {}]
  %s3 = inlined_call_operand.vmem [shape: f32[25,16,120], index: 3, kind: input, shape index: {}]
  %s4 = inlined_call_operand.vmem [shape: f32[1,120], index: 4, kind: input, shape index: {}]
  %s5 = inlined_call_operand.vmem [shape: f32[120,84], index: 5, kind: input, shape index: {}]
  %s6 = inlined_call_operand.vmem [shape: f32[1,84], index: 6, kind: input, shape index: {}]
  %s7 = inlined_call_operand.vmem [shape: f32[84,10], index: 7, kind: input, shape index: {}]
  %s8 = inlined_call_operand.vmem [shape: f32[1,10], index: 8, kind: input, shape index: {}]
  %s9 = inlined_call_operand.hbm [shape: f32[2,10], index: 9, kind: output, shape index: {}]
  %s10 = sld [smem:[#allocation0]]
  $region46: #{net_forward.3} parent=0
    _
  %s12 = ssub.s32 1, %s10
  %s13 = scalar_select 0, %s12, %s10
  $region1: #{net_forward.3} parent=0
    #allocation3 [shape = 'u8[1024]{0}', space=vmem, size = 0x400, scoped, tag = 'output window, operand 0, single buffered']
    #allocation4 [shape = 's32[1]{0}', space=sflag, size = 0x4, scoped, tag = 'scoped memory for net_forward.3']
    %14 = vsyncpa [#allocation4], 0
    // Predicated region
    $region2: #{net_forward.3} parent=1 // pred_check
      _
    $region3: #{net_forward.3} parent=1 // pred_check_branch
      %16 = sbr.rel (0) target = $region5
    $region4: #{net_forward.3} parent=1 // pred_region
      _
    $region5: #{net_forward.3} parent=1 // pred_fallthru
      _
    // Predicated region
    $region6: #{net_forward.3} parent=1 // pred_check
      _
    $region7: #{net_forward.3} parent=1 // pred_check_branch
      %18 = sbr.rel (0) target = $region9
    $region8: #{net_forward.3} parent=1 // pred_region
      _
    $region9: #{net_forward.3} parent=1 // pred_fallthru
      _
    // Predicated region
    $region10: #{net_forward.3} parent=1 // pred_check
      _
    $region11: #{net_forward.3} parent=1 // pred_check_branch
      %20 = sbr.rel (0) target = $region13
    $region12: #{net_forward.3} parent=1 // pred_region
      _
    $region13: #{net_forward.3} parent=1 // pred_fallthru
      _
    // Predicated region
    $region14: #{net_forward.3} parent=1 // pred_check
      _
    $region15: #{net_forward.3} parent=1 // pred_check_branch
      %22 = sbr.rel (0) target = $region17
    $region16: #{net_forward.3} parent=1 // pred_region
      _
    $region17: #{net_forward.3} parent=1 // pred_fallthru
      _
    // Predicated region
    $region18: #{net_forward.3} parent=1 // pred_check
      _
    $region19: #{net_forward.3} parent=1 // pred_check_branch
      %24 = sbr.rel (0) target = $region21
    $region20: #{net_forward.3} parent=1 // pred_region
      _
    $region21: #{net_forward.3} parent=1 // pred_fallthru
      _
    // Predicated region
    $region22: #{net_forward.3} parent=1 // pred_check
      _
    $region23: #{net_forward.3} parent=1 // pred_check_branch
      %26 = sbr.rel (0) target = $region25
    $region24: #{net_forward.3} parent=1 // pred_region
      _
    $region25: #{net_forward.3} parent=1 // pred_fallthru
      _
    // Predicated region
    $region26: #{net_forward.3} parent=1 // pred_check
      _
    $region27: #{net_forward.3} parent=1 // pred_check_branch
      %28 = sbr.rel (0) target = $region29
    $region28: #{net_forward.3} parent=1 // pred_region
      _
    $region29: #{net_forward.3} parent=1 // pred_fallthru
      _
    // Predicated region
    $region30: #{net_forward.3} parent=1 // pred_check
      _
    $region31: #{net_forward.3} parent=1 // pred_check_branch
      %30 = sbr.rel (0) target = $region33
    $region32: #{net_forward.3} parent=1 // pred_region
      _
    $region33: #{net_forward.3} parent=1 // pred_fallthru
      _
    // Predicated region
    $region34: #{net_forward.3} parent=1 // pred_check
      _
    $region35: #{net_forward.3} parent=1 // pred_check_branch
      %32 = sbr.rel (0) target = $region37
    $region36: #{net_forward.3} parent=1 // pred_region
      _
    $region37: #{net_forward.3} parent=1 // pred_fallthru
      _
    %v33 = vld [vmem:[%s1] sm:$0xff]
    %v34 = vld [vmem:[%s1 + $0x8] sm:$0xff]
    %v35 = vld [vmem:[%s1 + $0x10] sm:$0xff]
    %v36 = vld [vmem:[%s1 + $0x18] sm:$0xff]
    %v37 = vld [vmem:[%s1 + $0x20] sm:$0xff]
    %v38 = vld [vmem:[%s1 + $0x28] sm:$0xff]
    %v39 = vld [vmem:[%s1 + $0x30] sm:$0xff]
    %v40 = vld [vmem:[%s1 + $0x38] sm:$0xff]
    %v41 = vld [vmem:[%s1 + $0x40] sm:$0xff]
    %v42 = vld [vmem:[%s1 + $0x48] sm:$0xff]
    %v43 = vld [vmem:[%s1 + $0x50] sm:$0xff]
    %v44 = vld [vmem:[%s1 + $0x58] sm:$0xff]
    %v45 = vld [vmem:[%s1 + $0x60] sm:$0xff]
    %v46 = vld [vmem:[%s1 + $0x68] sm:$0xff]
    %v47 = vld [vmem:[%s1 + $0x70] sm:$0xff]
    %v48 = vld [vmem:[%s1 + $0x78] sm:$0xff]
    %v49 = vld [vmem:[%s1 + $0x80] sm:$0xff]
    %v50 = vld [vmem:[%s1 + $0x88] sm:$0xff]
    %v51 = vld [vmem:[%s1 + $0x90] sm:$0x3f]
    %v52 = vld [vmem:[%s2] sm:$0x1]
    %v53 = vld [vmem:[%s0] sm:$0xff]
    %v54 = vld [vmem:[%s0 + $0x8] sm:$0xff]
    %v55 = vld [vmem:[%s0 + $0x10] sm:$0xff]
    %v56 = vld [vmem:[%s0 + $0x18] sm:$0xff]
    %v57 = vld [vmem:[%s0 + $0x20] sm:$0xff]
    %v58 = vld [vmem:[%s0 + $0x28] sm:$0xff]
    %v59 = vld [vmem:[%s0 + $0x30] sm:$0xff]
    %v60 = vld [vmem:[%s0 + $0x38] sm:$0xff]
    %v61 = vld [vmem:[%s0 + $0x40] sm:$0xff]
    %v62 = vld [vmem:[%s0 + $0x48] sm:$0xff]
    %v63 = vld [vmem:[%s0 + $0x50] sm:$0xff]
    %v64 = vld [vmem:[%s0 + $0x58] sm:$0xff]
    %v65 = vld [vmem:[%s0 + $0x60] sm:$0x3]
    %v66 = vld [vmem:[%s0 + $0x68] sm:$0x3]
    %v68 = vlaneseq
    %v69 = vshrl.u32 %v68, 7
    %v70 = vsub.s32 0, %v69
    %v71 = vrot.slane %v52, %v70
    %vm73 = vcmask 179200
    %v75 = vsel %vm73, %v54, 0
    %v78 = vsel %vm73, %v56, 0
    %v81 = vsel %vm73, %v58, 0
    %v84 = vsel %vm73, %v60, 0
    %v87 = vsel %vm73, %v62, 0
    %v90 = vsel %vm73, %v64, 0
    %v93 = vsel %vm73, %v66, 0
    %vm95 = vcmask 1045504
    %v97 = vsel %vm95, %v51, 0
    %99 = vmatprep.subr.mxu0 0.0
    %100 = vmatpush1.msra.mxu0 %v33
    %101 = vmatprep.subr.mxu0 0.0
    %102 = vmatpush1.msra.mxu0 %v34
    %103 = vmatprep.subr.mxu0 0.0
    %104 = vmatpush1.msra.mxu0 %v35
    %105 = vmatprep.subr.mxu0 0.0
    %106 = vmatpush1.msra.mxu0 %v36
    %107 = vmatprep.subr.mxu0 0.0
    %108 = vmatpush1.msra.mxu0 %v37
    %109 = vmatprep.subr.mxu0 0.0
    %110 = vmatpush1.msra.mxu0 %v38
    %111 = vmatprep.subr.mxu0 0.0
    %112 = vmatpush1.msra.mxu0 %v39
    %113 = vmatprep.subr.mxu0 0.0
    %114 = vmatpush1.msra.mxu0 %v40
    %115 = vmatprep.subr.mxu0 0.0
    %116 = vmatpush1.msra.mxu0 %v41
    %117 = vmatprep.subr.mxu0 0.0
    %118 = vmatpush1.msra.mxu0 %v42
    %119 = vmatprep.subr.mxu0 0.0
    %120 = vmatpush1.msra.mxu0 %v43
    %121 = vmatprep.subr.mxu0 0.0
    %122 = vmatpush1.msra.mxu0 %v44
    %123 = vmatprep.subr.mxu0 0.0
    %124 = vmatpush1.msra.mxu0 %v45
    %125 = vmatprep.subr.mxu0 0.0
    %126 = vmatpush1.msra.mxu0 %v46
    %127 = vmatprep.subr.mxu0 0.0
    %128 = vmatpush1.msra.mxu0 %v47
    %129 = vmatprep.subr.mxu0 0.0
    %130 = vmatpush1.msra.mxu0 %v48
    %131 = vmatprep.subr.mxu0 0.0
    %132 = vmatpush1.msra.mxu0 %v49
    %133 = vmatprep.subr.mxu0 0.0
    %134 = vmatpush1.msra.mxu0 %v50
    %135 = vmatprep.subr.mxu0 0.0
    %136 = vmatpush1.msra.mxu0 %v97
    %137 = vmatprep.subr.mxu0 0.0
    %138 = vmatpush1.msra.mxu0 0.0
    %139 = vmatprep.subr.mxu0 0.0
    %140 = vmatpush1.msra.mxu0 0.0
    %141 = vmatprep.subr.mxu0 0.0
    %142 = vmatpush1.msra.mxu0 0.0
    %143 = vmatprep.subr.mxu0 0.0
    %144 = vmatpush1.msra.mxu0 0.0
    %145 = vmatprep.subr.mxu0 0.0
    %146 = vmatpush1.msra.mxu0 0.0
    %147 = vmatprep.subr.mxu0 0.0
    %148 = vmatpush1.msra.mxu0 0.0
    %149 = vmatprep.subr.mxu0 0.0
    %150 = vmatpush1.msra.mxu0 0.0
    %151 = vmatprep.subr.mxu0 0.0
    %152 = vmatpush1.msra.mxu0 0.0
    %153 = vmatprep.subr.mxu0 0.0
    %154 = vmatpush1.msra.mxu0 0.0
    %155 = vmatprep.subr.mxu0 0.0
    %156 = vmatpush1.msra.mxu0 0.0
    %157 = vmatprep.subr.mxu0 0.0
    %158 = vmatpush1.msra.mxu0 0.0
    %159 = vmatprep.subr.mxu0 0.0
    %160 = vmatpush1.msra.mxu0 0.0
    %161 = vmatprep.subr.mxu0 0.0
    %162 = vmatpush1.msra.mxu0 0.0
    %163 = vmatprep.mubr.f32.mxu0 %v75
    %164 = vmatmul.mubr.f32.gmra.mrb[0].mxu0 %v53
    %v165 = vpop.f32.mrb[0].mxu0
    %v166 = vadd.f32 %v71, %v165
    %v167 = vpop.f32.mrb[0].mxu0
    %168 = vmatprep.mubr.f32.mxu0 %v78
    %169 = vmatmul.mubr.f32.gmra.mrb[0].mxu0 %v55
    %v170 = vpop.f32.mrb[0].mxu0
    %v171 = vadd.f32 %v71, %v170
    %v172 = vpop.f32.mrb[0].mxu0
    %173 = vmatprep.mubr.f32.mxu0 %v81
    %174 = vmatmul.mubr.f32.gmra.mrb[0].mxu0 %v57
    %v175 = vpop.f32.mrb[0].mxu0
    %v176 = vadd.f32 %v71, %v175
    %v177 = vpop.f32.mrb[0].mxu0
    %178 = vmatprep.mubr.f32.mxu0 %v84
    %179 = vmatmul.mubr.f32.gmra.mrb[0].mxu0 %v59
    %v180 = vpop.f32.mrb[0].mxu0
    %v181 = vadd.f32 %v71, %v180
    %v182 = vpop.f32.mrb[0].mxu0
    %183 = vmatprep.mubr.f32.mxu0 %v87
    %184 = vmatmul.mubr.f32.gmra.mrb[0].mxu0 %v61
    %v185 = vpop.f32.mrb[0].mxu0
    %v186 = vadd.f32 %v71, %v185
    %v187 = vpop.f32.mrb[0].mxu0
    %188 = vmatprep.mubr.f32.mxu0 %v90
    %189 = vmatmul.mubr.f32.gmra.mrb[0].mxu0 %v63
    %v190 = vpop.f32.mrb[0].mxu0
    %v191 = vadd.f32 %v71, %v190
    %v192 = vpop.f32.mrb[0].mxu0
    %193 = vmatprep.mubr.f32.mxu0 %v93
    %194 = vmatmul.mubr.f32.gmra.mrb[0].mxu0 %v65
    %v195 = vpop.f32.mrb[0].mxu0
    %v196 = vadd.f32 %v71, %v195
    %v197 = vpop.f32.mrb[0].mxu0
    %198 = vdwg.mxu0
    %v199 = vmax.f32 %v166, 0.0
    %v200 = vmax.f32 %v171, 0.0
    %v201 = vmax.f32 %v176, 0.0
    %v202 = vmax.f32 %v181, 0.0
    %v203 = vmax.f32 %v186, 0.0
    %v204 = vmax.f32 %v191, 0.0
    %v205 = vmax.f32 %v196, 0.0
    %s206 = scalar_lea.vmem %s0, 112
    %v207 = vld [vmem:[%s206] sm:$0xff]
    %v208 = vld [vmem:[%s206 + $0x8] sm:$0xff]
    %v209 = vld [vmem:[%s206 + $0x10] sm:$0xff]
    %v210 = vld [vmem:[%s206 + $0x18] sm:$0xff]
    %v211 = vld [vmem:[%s206 + $0x20] sm:$0xff]
    %v212 = vld [vmem:[%s206 + $0x28] sm:$0xff]
    %v213 = vld [vmem:[%s206 + $0x30] sm:$0xff]
    %v214 = vld [vmem:[%s206 + $0x38] sm:$0xff]
    %v215 = vld [vmem:[%s206 + $0x40] sm:$0xff]
    %v216 = vld [vmem:[%s206 + $0x48] sm:$0xff]
    %v217 = vld [vmem:[%s206 + $0x50] sm:$0xff]
    %v218 = vld [vmem:[%s206 + $0x58] sm:$0xff]
    %v219 = vld [vmem:[%s206 + $0x60] sm:$0x3]
    %v220 = vld [vmem:[%s206 + $0x68] sm:$0x3]
    %v222 = vsel %vm73, %v208, 0
    %v225 = vsel %vm73, %v210, 0
    %v228 = vsel %vm73, %v212, 0
    %v231 = vsel %vm73, %v214, 0
    %v234 = vsel %vm73, %v216, 0
    %v237 = vsel %vm73, %v218, 0
    %v240 = vsel %vm73, %v220, 0
    %242 = vmatprep.subr.mxu0 0.0
    %243 = vmatpush1.msra.mxu0 %v33
    %244 = vmatprep.subr.mxu0 0.0
    %245 = vmatpush1.msra.mxu0 %v34
    %246 = vmatprep.subr.mxu0 0.0
    %247 = vmatpush1.msra.mxu0 %v35
    %248 = vmatprep.subr.mxu0 0.0
    %249 = vmatpush1.msra.mxu0 %v36
    %250 = vmatprep.subr.mxu0 0.0
    %251 = vmatpush1.msra.mxu0 %v37
    %252 = vmatprep.subr.mxu0 0.0
    %253 = vmatpush1.msra.mxu0 %v38
    %254 = vmatprep.subr.mxu0 0.0
    %255 = vmatpush1.msra.mxu0 %v39
    %256 = vmatprep.subr.mxu0 0.0
    %257 = vmatpush1.msra.mxu0 %v40
    %258 = vmatprep.subr.mxu0 0.0
    %259 = vmatpush1.msra.mxu0 %v41
    %260 = vmatprep.subr.mxu0 0.0
    %261 = vmatpush1.msra.mxu0 %v42
    %262 = vmatprep.subr.mxu0 0.0
    %263 = vmatpush1.msra.mxu0 %v43
    %264 = vmatprep.subr.mxu0 0.0
    %265 = vmatpush1.msra.mxu0 %v44
    %266 = vmatprep.subr.mxu0 0.0
    %267 = vmatpush1.msra.mxu0 %v45
    %268 = vmatprep.subr.mxu0 0.0
    %269 = vmatpush1.msra.mxu0 %v46
    %270 = vmatprep.subr.mxu0 0.0
    %271 = vmatpush1.msra.mxu0 %v47
    %272 = vmatprep.subr.mxu0 0.0
    %273 = vmatpush1.msra.mxu0 %v48
    %274 = vmatprep.subr.mxu0 0.0
    %275 = vmatpush1.msra.mxu0 %v49
    %276 = vmatprep.subr.mxu0 0.0
    %277 = vmatpush1.msra.mxu0 %v50
    %278 = vmatprep.subr.mxu0 0.0
    %279 = vmatpush1.msra.mxu0 %v97
    %280 = vmatprep.subr.mxu0 0.0
    %281 = vmatpush1.msra.mxu0 0.0
    %282 = vmatprep.subr.mxu0 0.0
    %283 = vmatpush1.msra.mxu0 0.0
    %284 = vmatprep.subr.mxu0 0.0
    %285 = vmatpush1.msra.mxu0 0.0
    %286 = vmatprep.subr.mxu0 0.0
    %287 = vmatpush1.msra.mxu0 0.0
    %288 = vmatprep.subr.mxu0 0.0
    %289 = vmatpush1.msra.mxu0 0.0
    %290 = vmatprep.subr.mxu0 0.0
    %291 = vmatpush1.msra.mxu0 0.0
    %292 = vmatprep.subr.mxu0 0.0
    %293 = vmatpush1.msra.mxu0 0.0
    %294 = vmatprep.subr.mxu0 0.0
    %295 = vmatpush1.msra.mxu0 0.0
    %296 = vmatprep.subr.mxu0 0.0
    %297 = vmatpush1.msra.mxu0 0.0
    %298 = vmatprep.subr.mxu0 0.0
    %299 = vmatpush1.msra.mxu0 0.0
    %300 = vmatprep.subr.mxu0 0.0
    %301 = vmatpush1.msra.mxu0 0.0
    %302 = vmatprep.subr.mxu0 0.0
    %303 = vmatpush1.msra.mxu0 0.0
    %304 = vmatprep.subr.mxu0 0.0
    %305 = vmatpush1.msra.mxu0 0.0
    %306 = vmatprep.mubr.f32.mxu0 %v222
    %307 = vmatmul.mubr.f32.gmra.mrb[0].mxu0 %v207
    %v308 = vpop.f32.mrb[0].mxu0
    %v309 = vadd.f32 %v71, %v308
    %v310 = vpop.f32.mrb[0].mxu0
    %311 = vmatprep.mubr.f32.mxu0 %v225
    %312 = vmatmul.mubr.f32.gmra.mrb[0].mxu0 %v209
    %v313 = vpop.f32.mrb[0].mxu0
    %v314 = vadd.f32 %v71, %v313
    %v315 = vpop.f32.mrb[0].mxu0
    %316 = vmatprep.mubr.f32.mxu0 %v228
    %317 = vmatmul.mubr.f32.gmra.mrb[0].mxu0 %v211
    %v318 = vpop.f32.mrb[0].mxu0
    %v319 = vadd.f32 %v71, %v318
    %v320 = vpop.f32.mrb[0].mxu0
    %321 = vmatprep.mubr.f32.mxu0 %v231
    %322 = vmatmul.mubr.f32.gmra.mrb[0].mxu0 %v213
    %v323 = vpop.f32.mrb[0].mxu0
    %v324 = vadd.f32 %v71, %v323
    %v325 = vpop.f32.mrb[0].mxu0
    %326 = vmatprep.mubr.f32.mxu0 %v234
    %327 = vmatmul.mubr.f32.gmra.mrb[0].mxu0 %v215
    %v328 = vpop.f32.mrb[0].mxu0
    %v329 = vadd.f32 %v71, %v328
    %v330 = vpop.f32.mrb[0].mxu0
    %331 = vmatprep.mubr.f32.mxu0 %v237
    %332 = vmatmul.mubr.f32.gmra.mrb[0].mxu0 %v217
    %v333 = vpop.f32.mrb[0].mxu0
    %v334 = vadd.f32 %v71, %v333
    %v335 = vpop.f32.mrb[0].mxu0
    %336 = vmatprep.mubr.f32.mxu0 %v240
    %337 = vmatmul.mubr.f32.gmra.mrb[0].mxu0 %v219
    %v338 = vpop.f32.mrb[0].mxu0
    %v339 = vadd.f32 %v71, %v338
    %v340 = vpop.f32.mrb[0].mxu0
    %341 = vdwg.mxu0
    %v342 = vmax.f32 %v309, 0.0
    %v343 = vmax.f32 %v314, 0.0
    %v344 = vmax.f32 %v319, 0.0
    %v345 = vmax.f32 %v324, 0.0
    %v346 = vmax.f32 %v329, 0.0
    %v347 = vmax.f32 %v334, 0.0
    %v348 = vmax.f32 %v339, 0.0
    %v349 = vmax.f32 %v199, %v342
    %v350 = vmax.f32 %v200, %v343
    %v351 = vmax.f32 %v201, %v344
    %v352 = vmax.f32 %v202, %v345
    %v353 = vmax.f32 %v203, %v346
    %v354 = vmax.f32 %v204, %v347
    %v355 = vmax.f32 %v205, %v348
    %s356 = scalar_lea.vmem %s0, 224
    %v357 = vld [vmem:[%s356] sm:$0xff]
    %v358 = vld [vmem:[%s356 + $0x8] sm:$0xff]
    %v359 = vld [vmem:[%s356 + $0x10] sm:$0xff]
    %v360 = vld [vmem:[%s356 + $0x18] sm:$0xff]
    %v361 = vld [vmem:[%s356 + $0x20] sm:$0xff]
    %v362 = vld [vmem:[%s356 + $0x28] sm:$0xff]
    %v363 = vld [vmem:[%s356 + $0x30] sm:$0xff]
    %v364 = vld [vmem:[%s356 + $0x38] sm:$0xff]
    %v365 = vld [vmem:[%s356 + $0x40] sm:$0xff]
    %v366 = vld [vmem:[%s356 + $0x48] sm:$0xff]
    %v367 = vld [vmem:[%s356 + $0x50] sm:$0xff]
    %v368 = vld [vmem:[%s356 + $0x58] sm:$0xff]
    %v369 = vld [vmem:[%s356 + $0x60] sm:$0x3]
    %v370 = vld [vmem:[%s356 + $0x68] sm:$0x3]
    %v372 = vsel %vm73, %v358, 0
    %v375 = vsel %vm73, %v360, 0
    %v378 = vsel %vm73, %v362, 0
    %v381 = vsel %vm73, %v364, 0
    %v384 = vsel %vm73, %v366, 0
    %v387 = vsel %vm73, %v368, 0
    %v390 = vsel %vm73, %v370, 0
    %392 = vmatprep.subr.mxu0 0.0
    %393 = vmatpush1.msra.mxu0 %v33
    %394 = vmatprep.subr.mxu0 0.0
    %395 = vmatpush1.msra.mxu0 %v34
    %396 = vmatprep.subr.mxu0 0.0
    %397 = vmatpush1.msra.mxu0 %v35
    %398 = vmatprep.subr.mxu0 0.0
    %399 = vmatpush1.msra.mxu0 %v36
    %400 = vmatprep.subr.mxu0 0.0
    %401 = vmatpush1.msra.mxu0 %v37
    %402 = vmatprep.subr.mxu0 0.0
    %403 = vmatpush1.msra.mxu0 %v38
    %404 = vmatprep.subr.mxu0 0.0
    %405 = vmatpush1.msra.mxu0 %v39
    %406 = vmatprep.subr.mxu0 0.0
    %407 = vmatpush1.msra.mxu0 %v40
    %408 = vmatprep.subr.mxu0 0.0
    %409 = vmatpush1.msra.mxu0 %v41
    %410 = vmatprep.subr.mxu0 0.0
    %411 = vmatpush1.msra.mxu0 %v42
    %412 = vmatprep.subr.mxu0 0.0
    %413 = vmatpush1.msra.mxu0 %v43
    %414 = vmatprep.subr.mxu0 0.0
    %415 = vmatpush1.msra.mxu0 %v44
    %416 = vmatprep.subr.mxu0 0.0
    %417 = vmatpush1.msra.mxu0 %v45
    %418 = vmatprep.subr.mxu0 0.0
    %419 = vmatpush1.msra.mxu0 %v46
    %420 = vmatprep.subr.mxu0 0.0
    %421 = vmatpush1.msra.mxu0 %v47
    %422 = vmatprep.subr.mxu0 0.0
    %423 = vmatpush1.msra.mxu0 %v48
    %424 = vmatprep.subr.mxu0 0.0
    %425 = vmatpush1.msra.mxu0 %v49
    %426 = vmatprep.subr.mxu0 0.0
    %427 = vmatpush1.msra.mxu0 %v50
    %428 = vmatprep.subr.mxu0 0.0
    %429 = vmatpush1.msra.mxu0 %v97
    %430 = vmatprep.subr.mxu0 0.0
    %431 = vmatpush1.msra.mxu0 0.0
    %432 = vmatprep.subr.mxu0 0.0
    %433 = vmatpush1.msra.mxu0 0.0
    %434 = vmatprep.subr.mxu0 0.0
    %435 = vmatpush1.msra.mxu0 0.0
    %436 = vmatprep.subr.mxu0 0.0
    %437 = vmatpush1.msra.mxu0 0.0
    %438 = vmatprep.subr.mxu0 0.0
    %439 = vmatpush1.msra.mxu0 0.0
    %440 = vmatprep.subr.mxu0 0.0
    %441 = vmatpush1.msra.mxu0 0.0
    %442 = vmatprep.subr.mxu0 0.0
    %443 = vmatpush1.msra.mxu0 0.0
    %444 = vmatprep.subr.mxu0 0.0
    %445 = vmatpush1.msra.mxu0 0.0
    %446 = vmatprep.subr.mxu0 0.0
    %447 = vmatpush1.msra.mxu0 0.0
    %448 = vmatprep.subr.mxu0 0.0
    %449 = vmatpush1.msra.mxu0 0.0
    %450 = vmatprep.subr.mxu0 0.0
    %451 = vmatpush1.msra.mxu0 0.0
    %452 = vmatprep.subr.mxu0 0.0
    %453 = vmatpush1.msra.mxu0 0.0
    %454 = vmatprep.subr.mxu0 0.0
    %455 = vmatpush1.msra.mxu0 0.0
    %456 = vmatprep.mubr.f32.mxu0 %v372
    %457 = vmatmul.mubr.f32.gmra.mrb[0].mxu0 %v357
    %v458 = vpop.f32.mrb[0].mxu0
    %v459 = vadd.f32 %v71, %v458
    %v460 = vpop.f32.mrb[0].mxu0
    %461 = vmatprep.mubr.f32.mxu0 %v375
    %462 = vmatmul.mubr.f32.gmra.mrb[0].mxu0 %v359
    %v463 = vpop.f32.mrb[0].mxu0
    %v464 = vadd.f32 %v71, %v463
    %v465 = vpop.f32.mrb[0].mxu0
    %466 = vmatprep.mubr.f32.mxu0 %v378
    %467 = vmatmul.mubr.f32.gmra.mrb[0].mxu0 %v361
    %v468 = vpop.f32.mrb[0].mxu0
    %v469 = vadd.f32 %v71, %v468
    %v470 = vpop.f32.mrb[0].mxu0
    %471 = vmatprep.mubr.f32.mxu0 %v381
    %472 = vmatmul.mubr.f32.gmra.mrb[0].mxu0 %v363
    %v473 = vpop.f32.mrb[0].mxu0
    %v474 = vadd.f32 %v71, %v473
    %v475 = vpop.f32.mrb[0].mxu0
    %476 = vmatprep.mubr.f32.mxu0 %v384
    %477 = vmatmul.mubr.f32.gmra.mrb[0].mxu0 %v365
    %v478 = vpop.f32.mrb[0].mxu0
    %v479 = vadd.f32 %v71, %v478
    %v480 = vpop.f32.mrb[0].mxu0
    %481 = vmatprep.mubr.f32.mxu0 %v387
    %482 = vmatmul.mubr.f32.gmra.mrb[0].mxu0 %v367
    %v483 = vpop.f32.mrb[0].mxu0
    %v484 = vadd.f32 %v71, %v483
    %v485 = vpop.f32.mrb[0].mxu0
    %486 = vmatprep.mubr.f32.mxu0 %v390
    %487 = vmatmul.mubr.f32.gmra.mrb[0].mxu0 %v369
    %v488 = vpop.f32.mrb[0].mxu0
    %v489 = vadd.f32 %v71, %v488
    %v490 = vpop.f32.mrb[0].mxu0
    %491 = vdwg.mxu0
    %v492 = vmax.f32 %v459, 0.0
    %v493 = vmax.f32 %v464, 0.0
    %v494 = vmax.f32 %v469, 0.0
    %v495 = vmax.f32 %v474, 0.0
    %v496 = vmax.f32 %v479, 0.0
    %v497 = vmax.f32 %v484, 0.0
    %v498 = vmax.f32 %v489, 0.0
    %s499 = scalar_lea.vmem %s0, 336
    %v500 = vld [vmem:[%s499] sm:$0xff]
    %v501 = vld [vmem:[%s499 + $0x8] sm:$0xff]
    %v502 = vld [vmem:[%s499 + $0x10] sm:$0xff]
    %v503 = vld [vmem:[%s499 + $0x18] sm:$0xff]
    %v504 = vld [vmem:[%s499 + $0x20] sm:$0xff]
    %v505 = vld [vmem:[%s499 + $0x28] sm:$0xff]
    %v506 = vld [vmem:[%s499 + $0x30] sm:$0xff]
    %v507 = vld [vmem:[%s499 + $0x38] sm:$0xff]
    %v508 = vld [vmem:[%s499 + $0x40] sm:$0xff]
    %v509 = vld [vmem:[%s499 + $0x48] sm:$0xff]
    %v510 = vld [vmem:[%s499 + $0x50] sm:$0xff]
    %v511 = vld [vmem:[%s499 + $0x58] sm:$0xff]
    %v512 = vld [vmem:[%s499 + $0x60] sm:$0x3]
    %v513 = vld [vmem:[%s499 + $0x68] sm:$0x3]
    %v515 = vsel %vm73, %v501, 0
    %v518 = vsel %vm73, %v503, 0
    %v521 = vsel %vm73, %v505, 0
    %v524 = vsel %vm73, %v507, 0
    %v527 = vsel %vm73, %v509, 0
    %v530 = vsel %vm73, %v511, 0
    %v533 = vsel %vm73, %v513, 0
    %535 = vmatprep.subr.mxu0 0.0
    %536 = vmatpush1.msra.mxu0 %v33
    %537 = vmatprep.subr.mxu0 0.0
    %538 = vmatpush1.msra.mxu0 %v34
    %539 = vmatprep.subr.mxu0 0.0
    %540 = vmatpush1.msra.mxu0 %v35
    %541 = vmatprep.subr.mxu0 0.0
    %542 = vmatpush1.msra.mxu0 %v36
    %543 = vmatprep.subr.mxu0 0.0
    %544 = vmatpush1.msra.mxu0 %v37
    %545 = vmatprep.subr.mxu0 0.0
    %546 = vmatpush1.msra.mxu0 %v38
    %547 = vmatprep.subr.mxu0 0.0
    %548 = vmatpush1.msra.mxu0 %v39
    %549 = vmatprep.subr.mxu0 0.0
    %550 = vmatpush1.msra.mxu0 %v40
    %551 = vmatprep.subr.mxu0 0.0
    %552 = vmatpush1.msra.mxu0 %v41
    %553 = vmatprep.subr.mxu0 0.0
    %554 = vmatpush1.msra.mxu0 %v42
    %555 = vmatprep.subr.mxu0 0.0
    %556 = vmatpush1.msra.mxu0 %v43
    %557 = vmatprep.subr.mxu0 0.0
    %558 = vmatpush1.msra.mxu0 %v44
    %559 = vmatprep.subr.mxu0 0.0
    %560 = vmatpush1.msra.mxu0 %v45
    %561 = vmatprep.subr.mxu0 0.0
    %562 = vmatpush1.msra.mxu0 %v46
    %563 = vmatprep.subr.mxu0 0.0
    %564 = vmatpush1.msra.mxu0 %v47
    %565 = vmatprep.subr.mxu0 0.0
    %566 = vmatpush1.msra.mxu0 %v48
    %567 = vmatprep.subr.mxu0 0.0
    %568 = vmatpush1.msra.mxu0 %v49
    %569 = vmatprep.subr.mxu0 0.0
    %570 = vmatpush1.msra.mxu0 %v50
    %571 = vmatprep.subr.mxu0 0.0
    %572 = vmatpush1.msra.mxu0 %v97
    %573 = vmatprep.subr.mxu0 0.0
    %574 = vmatpush1.msra.mxu0 0.0
    %575 = vmatprep.subr.mxu0 0.0
    %576 = vmatpush1.msra.mxu0 0.0
    %577 = vmatprep.subr.mxu0 0.0
    %578 = vmatpush1.msra.mxu0 0.0
    %579 = vmatprep.subr.mxu0 0.0
    %580 = vmatpush1.msra.mxu0 0.0
    %581 = vmatprep.subr.mxu0 0.0
    %582 = vmatpush1.msra.mxu0 0.0
    %583 = vmatprep.subr.mxu0 0.0
    %584 = vmatpush1.msra.mxu0 0.0
    %585 = vmatprep.subr.mxu0 0.0
    %586 = vmatpush1.msra.mxu0 0.0
    %587 = vmatprep.subr.mxu0 0.0
    %588 = vmatpush1.msra.mxu0 0.0
    %589 = vmatprep.subr.mxu0 0.0
    %590 = vmatpush1.msra.mxu0 0.0
    %591 = vmatprep.subr.mxu0 0.0
    %592 = vmatpush1.msra.mxu0 0.0
    %593 = vmatprep.subr.mxu0 0.0
    %594 = vmatpush1.msra.mxu0 0.0
    %595 = vmatprep.subr.mxu0 0.0
    %596 = vmatpush1.msra.mxu0 0.0
    %597 = vmatprep.subr.mxu0 0.0
    %598 = vmatpush1.msra.mxu0 0.0
    %599 = vmatprep.mubr.f32.mxu0 %v515
    %600 = vmatmul.mubr.f32.gmra.mrb[0].mxu0 %v500
    %v601 = vpop.f32.mrb[0].mxu0
    %v602 = vadd.f32 %v71, %v601
    %v603 = vpop.f32.mrb[0].mxu0
    %604 = vmatprep.mubr.f32.mxu0 %v518
    %605 = vmatmul.mubr.f32.gmra.mrb[0].mxu0 %v502
    %v606 = vpop.f32.mrb[0].mxu0
    %v607 = vadd.f32 %v71, %v606
    %v608 = vpop.f32.mrb[0].mxu0
    %609 = vmatprep.mubr.f32.mxu0 %v521
    %610 = vmatmul.mubr.f32.gmra.mrb[0].mxu0 %v504
    %v611 = vpop.f32.mrb[0].mxu0
    %v612 = vadd.f32 %v71, %v611
    %v613 = vpop.f32.mrb[0].mxu0
    %614 = vmatprep.mubr.f32.mxu0 %v524
    %615 = vmatmul.mubr.f32.gmra.mrb[0].mxu0 %v506
    %v616 = vpop.f32.mrb[0].mxu0
    %v617 = vadd.f32 %v71, %v616
    %v618 = vpop.f32.mrb[0].mxu0
    %619 = vmatprep.mubr.f32.mxu0 %v527
    %620 = vmatmul.mubr.f32.gmra.mrb[0].mxu0 %v508
    %v621 = vpop.f32.mrb[0].mxu0
    %v622 = vadd.f32 %v71, %v621
    %v623 = vpop.f32.mrb[0].mxu0
    %624 = vmatprep.mubr.f32.mxu0 %v530
    %625 = vmatmul.mubr.f32.gmra.mrb[0].mxu0 %v510
    %v626 = vpop.f32.mrb[0].mxu0
    %v627 = vadd.f32 %v71, %v626
    %v628 = vpop.f32.mrb[0].mxu0
    %629 = vmatprep.mubr.f32.mxu0 %v533
    %630 = vmatmul.mubr.f32.gmra.mrb[0].mxu0 %v512
    %v631 = vpop.f32.mrb[0].mxu0
    %v632 = vadd.f32 %v71, %v631
    %v633 = vpop.f32.mrb[0].mxu0
    %634 = vdwg.mxu0
    %v635 = vmax.f32 %v602, 0.0
    %v636 = vmax.f32 %v607, 0.0
    %v637 = vmax.f32 %v612, 0.0
    %v638 = vmax.f32 %v617, 0.0
    %v639 = vmax.f32 %v622, 0.0
    %v640 = vmax.f32 %v627, 0.0
    %v641 = vmax.f32 %v632, 0.0
    %v642 = vmax.f32 %v492, %v635
    %v643 = vmax.f32 %v493, %v636
    %v644 = vmax.f32 %v494, %v637
    %v645 = vmax.f32 %v495, %v638
    %v646 = vmax.f32 %v496, %v639
    %v647 = vmax.f32 %v497, %v640
    %v648 = vmax.f32 %v498, %v641
    %v649 = vmax.f32 %v349, %v642
    %v650 = vmax.f32 %v350, %v643
    %v651 = vmax.f32 %v351, %v644
    %v652 = vmax.f32 %v352, %v645
    %v653 = vmax.f32 %v353, %v646
    %v654 = vmax.f32 %v354, %v647
    %v655 = vmax.f32 %v355, %v648
    %vm656 = vcmask 130048
    %657 = vst.msk [vmem:[#allocation2] sm:$0xff] %vm656, %v649
    %658 = vst.msk [vmem:[#allocation2 + $0x8] sm:$0xff] %vm656, %v650
    %659 = vst.msk [vmem:[#allocation2 + $0x10] sm:$0xff] %vm656, %v651
    %660 = vst.msk [vmem:[#allocation2 + $0x18] sm:$0xff] %vm656, %v652
    %661 = vst.msk [vmem:[#allocation2 + $0x20] sm:$0xff] %vm656, %v653
    %662 = vst.msk [vmem:[#allocation2 + $0x28] sm:$0xff] %vm656, %v654
    %vm663 = vcmask 123904
    %664 = vst.msk [vmem:[#allocation2 + $0x30] sm:$0x3] %vm663, %v655
    %v665 = vld [vmem:[#allocation2] sm:$0x3]
    %v666 = vld [vmem:[%s3] sm:$0xff]
    %v667 = vld [vmem:[%s3 + $0x8] sm:$0xff]
    %v668 = vld [vmem:[%s4] sm:$0x1]
    %v670 = vlaneseq
    %v671 = vshrl.u32 %v670, 7
    %v672 = vsub.s32 0, %v671
    %v673 = vrot.slane %v668, %v672
    %v676 = vsel %vm656, %v665, 0
    %678 = vmatprep.subr.mxu0 0.0
    %679 = vmatpush1.msra.mxu0 %v666
    %680 = vmatprep.subr.mxu0 0.0
    %681 = vmatpush1.msra.mxu0 %v667
    %682 = vmatprep.subr.mxu0 0.0
    %683 = vmatpush1.msra.mxu0 0.0
    %684 = vmatprep.subr.mxu0 0.0
    %685 = vmatpush1.msra.mxu0 0.0
    %686 = vmatprep.subr.mxu0 0.0
    %687 = vmatpush1.msra.mxu0 0.0
    %688 = vmatprep.subr.mxu0 0.0
    %689 = vmatpush1.msra.mxu0 0.0
    %690 = vmatprep.subr.mxu0 0.0
    %691 = vmatpush1.msra.mxu0 0.0
    %692 = vmatprep.subr.mxu0 0.0
    %693 = vmatpush1.msra.mxu0 0.0
    %694 = vmatprep.subr.mxu0 0.0
    %695 = vmatpush1.msra.mxu0 0.0
    %696 = vmatprep.subr.mxu0 0.0
    %697 = vmatpush1.msra.mxu0 0.0
    %698 = vmatprep.subr.mxu0 0.0
    %699 = vmatpush1.msra.mxu0 0.0
    %700 = vmatprep.subr.mxu0 0.0
    %701 = vmatpush1.msra.mxu0 0.0
    %702 = vmatprep.subr.mxu0 0.0
    %703 = vmatpush1.msra.mxu0 0.0
    %704 = vmatprep.subr.mxu0 0.0
    %705 = vmatpush1.msra.mxu0 0.0
    %706 = vmatprep.subr.mxu0 0.0
    %707 = vmatpush1.msra.mxu0 0.0
    %708 = vmatprep.subr.mxu0 0.0
    %709 = vmatpush1.msra.mxu0 0.0
    %710 = vmatprep.subr.mxu0 0.0
    %711 = vmatpush1.msra.mxu0 0.0
    %712 = vmatprep.subr.mxu0 0.0
    %713 = vmatpush1.msra.mxu0 0.0
    %714 = vmatprep.subr.mxu0 0.0
    %715 = vmatpush1.msra.mxu0 0.0
    %716 = vmatprep.subr.mxu0 0.0
    %717 = vmatpush1.msra.mxu0 0.0
    %718 = vmatprep.subr.mxu0 0.0
    %719 = vmatpush1.msra.mxu0 0.0
    %720 = vmatprep.subr.mxu0 0.0
    %721 = vmatpush1.msra.mxu0 0.0
    %722 = vmatprep.subr.mxu0 0.0
    %723 = vmatpush1.msra.mxu0 0.0
    %724 = vmatprep.subr.mxu0 0.0
    %725 = vmatpush1.msra.mxu0 0.0
    %726 = vmatprep.subr.mxu0 0.0
    %727 = vmatpush1.msra.mxu0 0.0
    %728 = vmatprep.subr.mxu0 0.0
    %729 = vmatpush1.msra.mxu0 0.0
    %730 = vmatprep.subr.mxu0 0.0
    %731 = vmatpush1.msra.mxu0 0.0
    %732 = vmatprep.subr.mxu0 0.0
    %733 = vmatpush1.msra.mxu0 0.0
    %734 = vmatprep.subr.mxu0 0.0
    %735 = vmatpush1.msra.mxu0 0.0
    %736 = vmatprep.subr.mxu0 0.0
    %737 = vmatpush1.msra.mxu0 0.0
    %738 = vmatprep.subr.mxu0 0.0
    %739 = vmatpush1.msra.mxu0 0.0
    %740 = vmatprep.subr.mxu0 0.0
    %741 = vmatpush1.msra.mxu0 0.0
    %742 = vmatprep.mubr.f32.mxu0 0.0
    %743 = vmatmul.mubr.f32.gmra.mrb[0].mxu0 %v676
    %v744 = vpop.f32.mrb[0].mxu0
    %v745 = vadd.f32 %v673, %v744
    %v746 = vpop.f32.mrb[0].mxu0
    %747 = vdwg.mxu0
    %v748 = vld [vmem:[#allocation2 + $0x2] sm:$0x3]
    %s749 = scalar_lea.vmem %s3, 16
    %v750 = vld [vmem:[%s749] sm:$0xff]
    %v751 = vld [vmem:[%s749 + $0x8] sm:$0xff]
    %v753 = vsel %vm656, %v748, 0
    %755 = vmatprep.subr.mxu0 0.0
    %756 = vmatpush1.msra.mxu0 %v750
    %757 = vmatprep.subr.mxu0 0.0
    %758 = vmatpush1.msra.mxu0 %v751
    %759 = vmatprep.subr.mxu0 0.0
    %760 = vmatpush1.msra.mxu0 0.0
    %761 = vmatprep.subr.mxu0 0.0
    %762 = vmatpush1.msra.mxu0 0.0
    %763 = vmatprep.subr.mxu0 0.0
    %764 = vmatpush1.msra.mxu0 0.0
    %765 = vmatprep.subr.mxu0 0.0
    %766 = vmatpush1.msra.mxu0 0.0
    %767 = vmatprep.subr.mxu0 0.0
    %768 = vmatpush1.msra.mxu0 0.0
    %769 = vmatprep.subr.mxu0 0.0
    %770 = vmatpush1.msra.mxu0 0.0
    %771 = vmatprep.subr.mxu0 0.0
    %772 = vmatpush1.msra.mxu0 0.0
    %773 = vmatprep.subr.mxu0 0.0
    %774 = vmatpush1.msra.mxu0 0.0
    %775 = vmatprep.subr.mxu0 0.0
    %776 = vmatpush1.msra.mxu0 0.0
    %777 = vmatprep.subr.mxu0 0.0
    %778 = vmatpush1.msra.mxu0 0.0
    %779 = vmatprep.subr.mxu0 0.0
    %780 = vmatpush1.msra.mxu0 0.0
    %781 = vmatprep.subr.mxu0 0.0
    %782 = vmatpush1.msra.mxu0 0.0
    %783 = vmatprep.subr.mxu0 0.0
    %784 = vmatpush1.msra.mxu0 0.0
    %785 = vmatprep.subr.mxu0 0.0
    %786 = vmatpush1.msra.mxu0 0.0
    %787 = vmatprep.subr.mxu0 0.0
    %788 = vmatpush1.msra.mxu0 0.0
    %789 = vmatprep.subr.mxu0 0.0
    %790 = vmatpush1.msra.mxu0 0.0
    %791 = vmatprep.subr.mxu0 0.0
    %792 = vmatpush1.msra.mxu0 0.0
    %793 = vmatprep.subr.mxu0 0.0
    %794 = vmatpush1.msra.mxu0 0.0
    %795 = vmatprep.subr.mxu0 0.0
    %796 = vmatpush1.msra.mxu0 0.0
    %797 = vmatprep.subr.mxu0 0.0
    %798 = vmatpush1.msra.mxu0 0.0
    %799 = vmatprep.subr.mxu0 0.0
    %800 = vmatpush1.msra.mxu0 0.0
    %801 = vmatprep.subr.mxu0 0.0
    %802 = vmatpush1.msra.mxu0 0.0
    %803 = vmatprep.subr.mxu0 0.0
    %804 = vmatpush1.msra.mxu0 0.0
    %805 = vmatprep.subr.mxu0 0.0
    %806 = vmatpush1.msra.mxu0 0.0
    %807 = vmatprep.subr.mxu0 0.0
    %808 = vmatpush1.msra.mxu0 0.0
    %809 = vmatprep.subr.mxu0 0.0
    %810 = vmatpush1.msra.mxu0 0.0
    %811 = vmatprep.subr.mxu0 0.0
    %812 = vmatpush1.msra.mxu0 0.0
    %813 = vmatprep.subr.mxu0 0.0
    %814 = vmatpush1.msra.mxu0 0.0
    %815 = vmatprep.subr.mxu0 0.0
    %816 = vmatpush1.msra.mxu0 0.0
    %817 = vmatprep.subr.mxu0 0.0
    %818 = vmatpush1.msra.mxu0 0.0
    %819 = vmatprep.mubr.f32.mxu0 0.0
    %820 = vmatmul.mubr.f32.gmra.mrb[0].mxu0 %v753
    %v821 = vpop.f32.mrb[0].mxu0
    %v822 = vadd.f32 0.0, %v821
    %v823 = vpop.f32.mrb[0].mxu0
    %824 = vdwg.mxu0
    %v825 = vadd.f32 %v745, %v822
    %v826 = vld [vmem:[#allocation2 + $0x4] sm:$0x3]
    %s827 = scalar_lea.vmem %s3, 32
    %v828 = vld [vmem:[%s827] sm:$0xff]
    %v829 = vld [vmem:[%s827 + $0x8] sm:$0xff]
    %v831 = vsel %vm656, %v826, 0
    %833 = vmatprep.subr.mxu0 0.0
    %834 = vmatpush1.msra.mxu0 %v828
    %835 = vmatprep.subr.mxu0 0.0
    %836 = vmatpush1.msra.mxu0 %v829
    %837 = vmatprep.subr.mxu0 0.0
    %838 = vmatpush1.msra.mxu0 0.0
    %839 = vmatprep.subr.mxu0 0.0
    %840 = vmatpush1.msra.mxu0 0.0
    %841 = vmatprep.subr.mxu0 0.0
    %842 = vmatpush1.msra.mxu0 0.0
    %843 = vmatprep.subr.mxu0 0.0
    %844 = vmatpush1.msra.mxu0 0.0
    %845 = vmatprep.subr.mxu0 0.0
    %846 = vmatpush1.msra.mxu0 0.0
    %847 = vmatprep.subr.mxu0 0.0
    %848 = vmatpush1.msra.mxu0 0.0
    %849 = vmatprep.subr.mxu0 0.0
    %850 = vmatpush1.msra.mxu0 0.0
    %851 = vmatprep.subr.mxu0 0.0
    %852 = vmatpush1.msra.mxu0 0.0
    %853 = vmatprep.subr.mxu0 0.0
    %854 = vmatpush1.msra.mxu0 0.0
    %855 = vmatprep.subr.mxu0 0.0
    %856 = vmatpush1.msra.mxu0 0.0
    %857 = vmatprep.subr.mxu0 0.0
    %858 = vmatpush1.msra.mxu0 0.0
    %859 = vmatprep.subr.mxu0 0.0
    %860 = vmatpush1.msra.mxu0 0.0
    %861 = vmatprep.subr.mxu0 0.0
    %862 = vmatpush1.msra.mxu0 0.0
    %863 = vmatprep.subr.mxu0 0.0
    %864 = vmatpush1.msra.mxu0 0.0
    %865 = vmatprep.subr.mxu0 0.0
    %866 = vmatpush1.msra.mxu0 0.0
    %867 = vmatprep.subr.mxu0 0.0
    %868 = vmatpush1.msra.mxu0 0.0
    %869 = vmatprep.subr.mxu0 0.0
    %870 = vmatpush1.msra.mxu0 0.0
    %871 = vmatprep.subr.mxu0 0.0
    %872 = vmatpush1.msra.mxu0 0.0
    %873 = vmatprep.subr.mxu0 0.0
    %874 = vmatpush1.msra.mxu0 0.0
    %875 = vmatprep.subr.mxu0 0.0
    %876 = vmatpush1.msra.mxu0 0.0
    %877 = vmatprep.subr.mxu0 0.0
    %878 = vmatpush1.msra.mxu0 0.0
    %879 = vmatprep.subr.mxu0 0.0
    %880 = vmatpush1.msra.mxu0 0.0
    %881 = vmatprep.subr.mxu0 0.0
    %882 = vmatpush1.msra.mxu0 0.0
    %883 = vmatprep.subr.mxu0 0.0
    %884 = vmatpush1.msra.mxu0 0.0
    %885 = vmatprep.subr.mxu0 0.0
    %886 = vmatpush1.msra.mxu0 0.0
    %887 = vmatprep.subr.mxu0 0.0
    %888 = vmatpush1.msra.mxu0 0.0
    %889 = vmatprep.subr.mxu0 0.0
    %890 = vmatpush1.msra.mxu0 0.0
    %891 = vmatprep.subr.mxu0 0.0
    %892 = vmatpush1.msra.mxu0 0.0
    %893 = vmatprep.subr.mxu0 0.0
    %894 = vmatpush1.msra.mxu0 0.0
    %895 = vmatprep.subr.mxu0 0.0
    %896 = vmatpush1.msra.mxu0 0.0
    %897 = vmatprep.mubr.f32.mxu0 0.0
    %898 = vmatmul.mubr.f32.gmra.mrb[0].mxu0 %v831
    %v899 = vpop.f32.mrb[0].mxu0
    %v900 = vadd.f32 0.0, %v899
    %v901 = vpop.f32.mrb[0].mxu0
    %902 = vdwg.mxu0
    %v903 = vadd.f32 %v825, %v900
    %v904 = vld [vmem:[#allocation2 + $0x6] sm:$0x3]
    %s905 = scalar_lea.vmem %s3, 48
    %v906 = vld [vmem:[%s905] sm:$0xff]
    %v907 = vld [vmem:[%s905 + $0x8] sm:$0xff]
    %v909 = vsel %vm656, %v904, 0
    %911 = vmatprep.subr.mxu0 0.0
    %912 = vmatpush1.msra.mxu0 %v906
    %913 = vmatprep.subr.mxu0 0.0
    %914 = vmatpush1.msra.mxu0 %v907
    %915 = vmatprep.subr.mxu0 0.0
    %916 = vmatpush1.msra.mxu0 0.0
    %917 = vmatprep.subr.mxu0 0.0
    %918 = vmatpush1.msra.mxu0 0.0
    %919 = vmatprep.subr.mxu0 0.0
    %920 = vmatpush1.msra.mxu0 0.0
    %921 = vmatprep.subr.mxu0 0.0
    %922 = vmatpush1.msra.mxu0 0.0
    %923 = vmatprep.subr.mxu0 0.0
    %924 = vmatpush1.msra.mxu0 0.0
    %925 = vmatprep.subr.mxu0 0.0
    %926 = vmatpush1.msra.mxu0 0.0
    %927 = vmatprep.subr.mxu0 0.0
    %928 = vmatpush1.msra.mxu0 0.0
    %929 = vmatprep.subr.mxu0 0.0
    %930 = vmatpush1.msra.mxu0 0.0
    %931 = vmatprep.subr.mxu0 0.0
    %932 = vmatpush1.msra.mxu0 0.0
    %933 = vmatprep.subr.mxu0 0.0
    %934 = vmatpush1.msra.mxu0 0.0
    %935 = vmatprep.subr.mxu0 0.0
    %936 = vmatpush1.msra.mxu0 0.0
    %937 = vmatprep.subr.mxu0 0.0
    %938 = vmatpush1.msra.mxu0 0.0
    %939 = vmatprep.subr.mxu0 0.0
    %940 = vmatpush1.msra.mxu0 0.0
    %941 = vmatprep.subr.mxu0 0.0
    %942 = vmatpush1.msra.mxu0 0.0
    %943 = vmatprep.subr.mxu0 0.0
    %944 = vmatpush1.msra.mxu0 0.0
    %945 = vmatprep.subr.mxu0 0.0
    %946 = vmatpush1.msra.mxu0 0.0
    %947 = vmatprep.subr.mxu0 0.0
    %948 = vmatpush1.msra.mxu0 0.0
    %949 = vmatprep.subr.mxu0 0.0
    %950 = vmatpush1.msra.mxu0 0.0
    %951 = vmatprep.subr.mxu0 0.0
    %952 = vmatpush1.msra.mxu0 0.0
    %953 = vmatprep.subr.mxu0 0.0
    %954 = vmatpush1.msra.mxu0 0.0
    %955 = vmatprep.subr.mxu0 0.0
    %956 = vmatpush1.msra.mxu0 0.0
    %957 = vmatprep.subr.mxu0 0.0
    %958 = vmatpush1.msra.mxu0 0.0
    %959 = vmatprep.subr.mxu0 0.0
    %960 = vmatpush1.msra.mxu0 0.0
    %961 = vmatprep.subr.mxu0 0.0
    %962 = vmatpush1.msra.mxu0 0.0
    %963 = vmatprep.subr.mxu0 0.0
    %964 = vmatpush1.msra.mxu0 0.0
    %965 = vmatprep.subr.mxu0 0.0
    %966 = vmatpush1.msra.mxu0 0.0
    %967 = vmatprep.subr.mxu0 0.0
    %968 = vmatpush1.msra.mxu0 0.0
    %969 = vmatprep.subr.mxu0 0.0
    %970 = vmatpush1.msra.mxu0 0.0
    %971 = vmatprep.subr.mxu0 0.0
    %972 = vmatpush1.msra.mxu0 0.0
    %973 = vmatprep.subr.mxu0 0.0
    %974 = vmatpush1.msra.mxu0 0.0
    %975 = vmatprep.mubr.f32.mxu0 0.0
    %976 = vmatmul.mubr.f32.gmra.mrb[0].mxu0 %v909
    %v977 = vpop.f32.mrb[0].mxu0
    %v978 = vadd.f32 0.0, %v977
    %v979 = vpop.f32.mrb[0].mxu0
    %980 = vdwg.mxu0
    %v981 = vadd.f32 %v903, %v978
    %v982 = vld [vmem:[#allocation2 + $0x8] sm:$0x3]
    %s983 = scalar_lea.vmem %s3, 64
    %v984 = vld [vmem:[%s983] sm:$0xff]
    %v985 = vld [vmem:[%s983 + $0x8] sm:$0xff]
    %v987 = vsel %vm656, %v982, 0
    %989 = vmatprep.subr.mxu0 0.0
    %990 = vmatpush1.msra.mxu0 %v984
    %991 = vmatprep.subr.mxu0 0.0
    %992 = vmatpush1.msra.mxu0 %v985
    %993 = vmatprep.subr.mxu0 0.0
    %994 = vmatpush1.msra.mxu0 0.0
    %995 = vmatprep.subr.mxu0 0.0
    %996 = vmatpush1.msra.mxu0 0.0
    %997 = vmatprep.subr.mxu0 0.0
    %998 = vmatpush1.msra.mxu0 0.0
    %999 = vmatprep.subr.mxu0 0.0
    %1000 = vmatpush1.msra.mxu0 0.0
    %1001 = vmatprep.subr.mxu0 0.0
    %1002 = vmatpush1.msra.mxu0 0.0
    %1003 = vmatprep.subr.mxu0 0.0
    %1004 = vmatpush1.msra.mxu0 0.0
    %1005 = vmatprep.subr.mxu0 0.0
    %1006 = vmatpush1.msra.mxu0 0.0
    %1007 = vmatprep.subr.mxu0 0.0
    %1008 = vmatpush1.msra.mxu0 0.0
    %1009 = vmatprep.subr.mxu0 0.0
    %1010 = vmatpush1.msra.mxu0 0.0
    %1011 = vmatprep.subr.mxu0 0.0
    %1012 = vmatpush1.msra.mxu0 0.0
    %1013 = vmatprep.subr.mxu0 0.0
    %1014 = vmatpush1.msra.mxu0 0.0
    %1015 = vmatprep.subr.mxu0 0.0
    %1016 = vmatpush1.msra.mxu0 0.0
    %1017 = vmatprep.subr.mxu0 0.0
    %1018 = vmatpush1.msra.mxu0 0.0
    %1019 = vmatprep.subr.mxu0 0.0
    %1020 = vmatpush1.msra.mxu0 0.0
    %1021 = vmatprep.subr.mxu0 0.0
    %1022 = vmatpush1.msra.mxu0 0.0
    %1023 = vmatprep.subr.mxu0 0.0
    %1024 = vmatpush1.msra.mxu0 0.0
    %1025 = vmatprep.subr.mxu0 0.0
    %1026 = vmatpush1.msra.mxu0 0.0
    %1027 = vmatprep.subr.mxu0 0.0
    %1028 = vmatpush1.msra.mxu0 0.0
    %1029 = vmatprep.subr.mxu0 0.0
    %1030 = vmatpush1.msra.mxu0 0.0
    %1031 = vmatprep.subr.mxu0 0.0
    %1032 = vmatpush1.msra.mxu0 0.0
    %1033 = vmatprep.subr.mxu0 0.0
    %1034 = vmatpush1.msra.mxu0 0.0
    %1035 = vmatprep.subr.mxu0 0.0
    %1036 = vmatpush1.msra.mxu0 0.0
    %1037 = vmatprep.subr.mxu0 0.0
    %1038 = vmatpush1.msra.mxu0 0.0
    %1039 = vmatprep.subr.mxu0 0.0
    %1040 = vmatpush1.msra.mxu0 0.0
    %1041 = vmatprep.subr.mxu0 0.0
    %1042 = vmatpush1.msra.mxu0 0.0
    %1043 = vmatprep.subr.mxu0 0.0
    %1044 = vmatpush1.msra.mxu0 0.0
    %1045 = vmatprep.subr.mxu0 0.0
    %1046 = vmatpush1.msra.mxu0 0.0
    %1047 = vmatprep.subr.mxu0 0.0
    %1048 = vmatpush1.msra.mxu0 0.0
    %1049 = vmatprep.subr.mxu0 0.0
    %1050 = vmatpush1.msra.mxu0 0.0
    %1051 = vmatprep.subr.mxu0 0.0
    %1052 = vmatpush1.msra.mxu0 0.0
    %1053 = vmatprep.mubr.f32.mxu0 0.0
    %1054 = vmatmul.mubr.f32.gmra.mrb[0].mxu0 %v987
    %v1055 = vpop.f32.mrb[0].mxu0
    %v1056 = vadd.f32 0.0, %v1055
    %v1057 = vpop.f32.mrb[0].mxu0
    %1058 = vdwg.mxu0
    %v1059 = vadd.f32 %v981, %v1056
    %v1060 = vld [vmem:[#allocation2 + $0xa] sm:$0x3]
    %s1061 = scalar_lea.vmem %s3, 80
    %v1062 = vld [vmem:[%s1061] sm:$0xff]
    %v1063 = vld [vmem:[%s1061 + $0x8] sm:$0xff]
    %v1065 = vsel %vm656, %v1060, 0
    %1067 = vmatprep.subr.mxu0 0.0
    %1068 = vmatpush1.msra.mxu0 %v1062
    %1069 = vmatprep.subr.mxu0 0.0
    %1070 = vmatpush1.msra.mxu0 %v1063
    %1071 = vmatprep.subr.mxu0 0.0
    %1072 = vmatpush1.msra.mxu0 0.0
    %1073 = vmatprep.subr.mxu0 0.0
    %1074 = vmatpush1.msra.mxu0 0.0
    %1075 = vmatprep.subr.mxu0 0.0
    %1076 = vmatpush1.msra.mxu0 0.0
    %1077 = vmatprep.subr.mxu0 0.0
    %1078 = vmatpush1.msra.mxu0 0.0
    %1079 = vmatprep.subr.mxu0 0.0
    %1080 = vmatpush1.msra.mxu0 0.0
    %1081 = vmatprep.subr.mxu0 0.0
    %1082 = vmatpush1.msra.mxu0 0.0
    %1083 = vmatprep.subr.mxu0 0.0
    %1084 = vmatpush1.msra.mxu0 0.0
    %1085 = vmatprep.subr.mxu0 0.0
    %1086 = vmatpush1.msra.mxu0 0.0
    %1087 = vmatprep.subr.mxu0 0.0
    %1088 = vmatpush1.msra.mxu0 0.0
    %1089 = vmatprep.subr.mxu0 0.0
    %1090 = vmatpush1.msra.mxu0 0.0
    %1091 = vmatprep.subr.mxu0 0.0
    %1092 = vmatpush1.msra.mxu0 0.0
    %1093 = vmatprep.subr.mxu0 0.0
    %1094 = vmatpush1.msra.mxu0 0.0
    %1095 = vmatprep.subr.mxu0 0.0
    %1096 = vmatpush1.msra.mxu0 0.0
    %1097 = vmatprep.subr.mxu0 0.0
    %1098 = vmatpush1.msra.mxu0 0.0
    %1099 = vmatprep.subr.mxu0 0.0
    %1100 = vmatpush1.msra.mxu0 0.0
    %1101 = vmatprep.subr.mxu0 0.0
    %1102 = vmatpush1.msra.mxu0 0.0
    %1103 = vmatprep.subr.mxu0 0.0
    %1104 = vmatpush1.msra.mxu0 0.0
    %1105 = vmatprep.subr.mxu0 0.0
    %1106 = vmatpush1.msra.mxu0 0.0
    %1107 = vmatprep.subr.mxu0 0.0
    %1108 = vmatpush1.msra.mxu0 0.0
    %1109 = vmatprep.subr.mxu0 0.0
    %1110 = vmatpush1.msra.mxu0 0.0
    %1111 = vmatprep.subr.mxu0 0.0
    %1112 = vmatpush1.msra.mxu0 0.0
    %1113 = vmatprep.subr.mxu0 0.0
    %1114 = vmatpush1.msra.mxu0 0.0
    %1115 = vmatprep.subr.mxu0 0.0
    %1116 = vmatpush1.msra.mxu0 0.0
    %1117 = vmatprep.subr.mxu0 0.0
    %1118 = vmatpush1.msra.mxu0 0.0
    %1119 = vmatprep.subr.mxu0 0.0
    %1120 = vmatpush1.msra.mxu0 0.0
    %1121 = vmatprep.subr.mxu0 0.0
    %1122 = vmatpush1.msra.mxu0 0.0
    %1123 = vmatprep.subr.mxu0 0.0
    %1124 = vmatpush1.msra.mxu0 0.0
    %1125 = vmatprep.subr.mxu0 0.0
    %1126 = vmatpush1.msra.mxu0 0.0
    %1127 = vmatprep.subr.mxu0 0.0
    %1128 = vmatpush1.msra.mxu0 0.0
    %1129 = vmatprep.subr.mxu0 0.0
    %1130 = vmatpush1.msra.mxu0 0.0
    %1131 = vmatprep.mubr.f32.mxu0 0.0
    %1132 = vmatmul.mubr.f32.gmra.mrb[0].mxu0 %v1065
    %v1133 = vpop.f32.mrb[0].mxu0
    %v1134 = vadd.f32 0.0, %v1133
    %v1135 = vpop.f32.mrb[0].mxu0
    %1136 = vdwg.mxu0
    %v1137 = vadd.f32 %v1059, %v1134
    %v1138 = vld [vmem:[#allocation2 + $0xc] sm:$0x3]
    %s1139 = scalar_lea.vmem %s3, 96
    %v1140 = vld [vmem:[%s1139] sm:$0xff]
    %v1141 = vld [vmem:[%s1139 + $0x8] sm:$0xff]
    %v1143 = vsel %vm656, %v1138, 0
    %1145 = vmatprep.subr.mxu0 0.0
    %1146 = vmatpush1.msra.mxu0 %v1140
    %1147 = vmatprep.subr.mxu0 0.0
    %1148 = vmatpush1.msra.mxu0 %v1141
    %1149 = vmatprep.subr.mxu0 0.0
    %1150 = vmatpush1.msra.mxu0 0.0
    %1151 = vmatprep.subr.mxu0 0.0
    %1152 = vmatpush1.msra.mxu0 0.0
    %1153 = vmatprep.subr.mxu0 0.0
    %1154 = vmatpush1.msra.mxu0 0.0
    %1155 = vmatprep.subr.mxu0 0.0
    %1156 = vmatpush1.msra.mxu0 0.0
    %1157 = vmatprep.subr.mxu0 0.0
    %1158 = vmatpush1.msra.mxu0 0.0
    %1159 = vmatprep.subr.mxu0 0.0
    %1160 = vmatpush1.msra.mxu0 0.0
    %1161 = vmatprep.subr.mxu0 0.0
    %1162 = vmatpush1.msra.mxu0 0.0
    %1163 = vmatprep.subr.mxu0 0.0
    %1164 = vmatpush1.msra.mxu0 0.0
    %1165 = vmatprep.subr.mxu0 0.0
    %1166 = vmatpush1.msra.mxu0 0.0
    %1167 = vmatprep.subr.mxu0 0.0
    %1168 = vmatpush1.msra.mxu0 0.0
    %1169 = vmatprep.subr.mxu0 0.0
    %1170 = vmatpush1.msra.mxu0 0.0
    %1171 = vmatprep.subr.mxu0 0.0
    %1172 = vmatpush1.msra.mxu0 0.0
    %1173 = vmatprep.subr.mxu0 0.0
    %1174 = vmatpush1.msra.mxu0 0.0
    %1175 = vmatprep.subr.mxu0 0.0
    %1176 = vmatpush1.msra.mxu0 0.0
    %1177 = vmatprep.subr.mxu0 0.0
    %1178 = vmatpush1.msra.mxu0 0.0
    %1179 = vmatprep.subr.mxu0 0.0
    %1180 = vmatpush1.msra.mxu0 0.0
    %1181 = vmatprep.subr.mxu0 0.0
    %1182 = vmatpush1.msra.mxu0 0.0
    %1183 = vmatprep.subr.mxu0 0.0
    %1184 = vmatpush1.msra.mxu0 0.0
    %1185 = vmatprep.subr.mxu0 0.0
    %1186 = vmatpush1.msra.mxu0 0.0
    %1187 = vmatprep.subr.mxu0 0.0
    %1188 = vmatpush1.msra.mxu0 0.0
    %1189 = vmatprep.subr.mxu0 0.0
    %1190 = vmatpush1.msra.mxu0 0.0
    %1191 = vmatprep.subr.mxu0 0.0
    %1192 = vmatpush1.msra.mxu0 0.0
    %1193 = vmatprep.subr.mxu0 0.0
    %1194 = vmatpush1.msra.mxu0 0.0
    %1195 = vmatprep.subr.mxu0 0.0
    %1196 = vmatpush1.msra.mxu0 0.0
    %1197 = vmatprep.subr.mxu0 0.0
    %1198 = vmatpush1.msra.mxu0 0.0
    %1199 = vmatprep.subr.mxu0 0.0
    %1200 = vmatpush1.msra.mxu0 0.0
    %1201 = vmatprep.subr.mxu0 0.0
    %1202 = vmatpush1.msra.mxu0 0.0
    %1203 = vmatprep.subr.mxu0 0.0
    %1204 = vmatpush1.msra.mxu0 0.0
    %1205 = vmatprep.subr.mxu0 0.0
    %1206 = vmatpush1.msra.mxu0 0.0
    %1207 = vmatprep.subr.mxu0 0.0
    %1208 = vmatpush1.msra.mxu0 0.0
    %1209 = vmatprep.mubr.f32.mxu0 0.0
    %1210 = vmatmul.mubr.f32.gmra.mrb[0].mxu0 %v1143
    %v1211 = vpop.f32.mrb[0].mxu0
    %v1212 = vadd.f32 0.0, %v1211
    %v1213 = vpop.f32.mrb[0].mxu0
    %1214 = vdwg.mxu0
    %v1215 = vadd.f32 %v1137, %v1212
    %v1216 = vld [vmem:[#allocation2 + $0xe] sm:$0x3]
    %s1217 = scalar_lea.vmem %s3, 112
    %v1218 = vld [vmem:[%s1217] sm:$0xff]
    %v1219 = vld [vmem:[%s1217 + $0x8] sm:$0xff]
    %v1221 = vsel %vm656, %v1216, 0
    %1223 = vmatprep.subr.mxu0 0.0
    %1224 = vmatpush1.msra.mxu0 %v1218
    %1225 = vmatprep.subr.mxu0 0.0
    %1226 = vmatpush1.msra.mxu0 %v1219
    %1227 = vmatprep.subr.mxu0 0.0
    %1228 = vmatpush1.msra.mxu0 0.0
    %1229 = vmatprep.subr.mxu0 0.0
    %1230 = vmatpush1.msra.mxu0 0.0
    %1231 = vmatprep.subr.mxu0 0.0
    %1232 = vmatpush1.msra.mxu0 0.0
    %1233 = vmatprep.subr.mxu0 0.0
    %1234 = vmatpush1.msra.mxu0 0.0
    %1235 = vmatprep.subr.mxu0 0.0
    %1236 = vmatpush1.msra.mxu0 0.0
    %1237 = vmatprep.subr.mxu0 0.0
    %1238 = vmatpush1.msra.mxu0 0.0
    %1239 = vmatprep.subr.mxu0 0.0
    %1240 = vmatpush1.msra.mxu0 0.0
    %1241 = vmatprep.subr.mxu0 0.0
    %1242 = vmatpush1.msra.mxu0 0.0
    %1243 = vmatprep.subr.mxu0 0.0
    %1244 = vmatpush1.msra.mxu0 0.0
    %1245 = vmatprep.subr.mxu0 0.0
    %1246 = vmatpush1.msra.mxu0 0.0
    %1247 = vmatprep.subr.mxu0 0.0
    %1248 = vmatpush1.msra.mxu0 0.0
    %1249 = vmatprep.subr.mxu0 0.0
    %1250 = vmatpush1.msra.mxu0 0.0
    %1251 = vmatprep.subr.mxu0 0.0
    %1252 = vmatpush1.msra.mxu0 0.0
    %1253 = vmatprep.subr.mxu0 0.0
    %1254 = vmatpush1.msra.mxu0 0.0
    %1255 = vmatprep.subr.mxu0 0.0
    %1256 = vmatpush1.msra.mxu0 0.0
    %1257 = vmatprep.subr.mxu0 0.0
    %1258 = vmatpush1.msra.mxu0 0.0
    %1259 = vmatprep.subr.mxu0 0.0
    %1260 = vmatpush1.msra.mxu0 0.0
    %1261 = vmatprep.subr.mxu0 0.0
    %1262 = vmatpush1.msra.mxu0 0.0
    %1263 = vmatprep.subr.mxu0 0.0
    %1264 = vmatpush1.msra.mxu0 0.0
    %1265 = vmatprep.subr.mxu0 0.0
    %1266 = vmatpush1.msra.mxu0 0.0
    %1267 = vmatprep.subr.mxu0 0.0
    %1268 = vmatpush1.msra.mxu0 0.0
    %1269 = vmatprep.subr.mxu0 0.0
    %1270 = vmatpush1.msra.mxu0 0.0
    %1271 = vmatprep.subr.mxu0 0.0
    %1272 = vmatpush1.msra.mxu0 0.0
    %1273 = vmatprep.subr.mxu0 0.0
    %1274 = vmatpush1.msra.mxu0 0.0
    %1275 = vmatprep.subr.mxu0 0.0
    %1276 = vmatpush1.msra.mxu0 0.0
    %1277 = vmatprep.subr.mxu0 0.0
    %1278 = vmatpush1.msra.mxu0 0.0
    %1279 = vmatprep.subr.mxu0 0.0
    %1280 = vmatpush1.msra.mxu0 0.0
    %1281 = vmatprep.subr.mxu0 0.0
    %1282 = vmatpush1.msra.mxu0 0.0
    %1283 = vmatprep.subr.mxu0 0.0
    %1284 = vmatpush1.msra.mxu0 0.0
    %1285 = vmatprep.subr.mxu0 0.0
    %1286 = vmatpush1.msra.mxu0 0.0
    %1287 = vmatprep.mubr.f32.mxu0 0.0
    %1288 = vmatmul.mubr.f32.gmra.mrb[0].mxu0 %v1221
    %v1289 = vpop.f32.mrb[0].mxu0
    %v1290 = vadd.f32 0.0, %v1289
    %v1291 = vpop.f32.mrb[0].mxu0
    %1292 = vdwg.mxu0
    %v1293 = vadd.f32 %v1215, %v1290
    %v1294 = vld [vmem:[#allocation2 + $0x10] sm:$0x3]
    %s1295 = scalar_lea.vmem %s3, 128
    %v1296 = vld [vmem:[%s1295] sm:$0xff]
    %v1297 = vld [vmem:[%s1295 + $0x8] sm:$0xff]
    %v1299 = vsel %vm656, %v1294, 0
    %1301 = vmatprep.subr.mxu0 0.0
    %1302 = vmatpush1.msra.mxu0 %v1296
    %1303 = vmatprep.subr.mxu0 0.0
    %1304 = vmatpush1.msra.mxu0 %v1297
    %1305 = vmatprep.subr.mxu0 0.0
    %1306 = vmatpush1.msra.mxu0 0.0
    %1307 = vmatprep.subr.mxu0 0.0
    %1308 = vmatpush1.msra.mxu0 0.0
    %1309 = vmatprep.subr.mxu0 0.0
    %1310 = vmatpush1.msra.mxu0 0.0
    %1311 = vmatprep.subr.mxu0 0.0
    %1312 = vmatpush1.msra.mxu0 0.0
    %1313 = vmatprep.subr.mxu0 0.0
    %1314 = vmatpush1.msra.mxu0 0.0
    %1315 = vmatprep.subr.mxu0 0.0
    %1316 = vmatpush1.msra.mxu0 0.0
    %1317 = vmatprep.subr.mxu0 0.0
    %1318 = vmatpush1.msra.mxu0 0.0
    %1319 = vmatprep.subr.mxu0 0.0
    %1320 = vmatpush1.msra.mxu0 0.0
    %1321 = vmatprep.subr.mxu0 0.0
    %1322 = vmatpush1.msra.mxu0 0.0
    %1323 = vmatprep.subr.mxu0 0.0
    %1324 = vmatpush1.msra.mxu0 0.0
    %1325 = vmatprep.subr.mxu0 0.0
    %1326 = vmatpush1.msra.mxu0 0.0
    %1327 = vmatprep.subr.mxu0 0.0
    %1328 = vmatpush1.msra.mxu0 0.0
    %1329 = vmatprep.subr.mxu0 0.0
    %1330 = vmatpush1.msra.mxu0 0.0
    %1331 = vmatprep.subr.mxu0 0.0
    %1332 = vmatpush1.msra.mxu0 0.0
    %1333 = vmatprep.subr.mxu0 0.0
    %1334 = vmatpush1.msra.mxu0 0.0
    %1335 = vmatprep.subr.mxu0 0.0
    %1336 = vmatpush1.msra.mxu0 0.0
    %1337 = vmatprep.subr.mxu0 0.0
    %1338 = vmatpush1.msra.mxu0 0.0
    %1339 = vmatprep.subr.mxu0 0.0
    %1340 = vmatpush1.msra.mxu0 0.0
    %1341 = vmatprep.subr.mxu0 0.0
    %1342 = vmatpush1.msra.mxu0 0.0
    %1343 = vmatprep.subr.mxu0 0.0
    %1344 = vmatpush1.msra.mxu0 0.0
    %1345 = vmatprep.subr.mxu0 0.0
    %1346 = vmatpush1.msra.mxu0 0.0
    %1347 = vmatprep.subr.mxu0 0.0
    %1348 = vmatpush1.msra.mxu0 0.0
    %1349 = vmatprep.subr.mxu0 0.0
    %1350 = vmatpush1.msra.mxu0 0.0
    %1351 = vmatprep.subr.mxu0 0.0
    %1352 = vmatpush1.msra.mxu0 0.0
    %1353 = vmatprep.subr.mxu0 0.0
    %1354 = vmatpush1.msra.mxu0 0.0
    %1355 = vmatprep.subr.mxu0 0.0
    %1356 = vmatpush1.msra.mxu0 0.0
    %1357 = vmatprep.subr.mxu0 0.0
    %1358 = vmatpush1.msra.mxu0 0.0
    %1359 = vmatprep.subr.mxu0 0.0
    %1360 = vmatpush1.msra.mxu0 0.0
    %1361 = vmatprep.subr.mxu0 0.0
    %1362 = vmatpush1.msra.mxu0 0.0
    %1363 = vmatprep.subr.mxu0 0.0
    %1364 = vmatpush1.msra.mxu0 0.0
    %1365 = vmatprep.mubr.f32.mxu0 0.0
    %1366 = vmatmul.mubr.f32.gmra.mrb[0].mxu0 %v1299
    %v1367 = vpop.f32.mrb[0].mxu0
    %v1368 = vadd.f32 0.0, %v1367
    %v1369 = vpop.f32.mrb[0].mxu0
    %1370 = vdwg.mxu0
    %v1371 = vadd.f32 %v1293, %v1368
    %v1372 = vld [vmem:[#allocation2 + $0x12] sm:$0x3]
    %s1373 = scalar_lea.vmem %s3, 144
    %v1374 = vld [vmem:[%s1373] sm:$0xff]
    %v1375 = vld [vmem:[%s1373 + $0x8] sm:$0xff]
    %v1377 = vsel %vm656, %v1372, 0
    %1379 = vmatprep.subr.mxu0 0.0
    %1380 = vmatpush1.msra.mxu0 %v1374
    %1381 = vmatprep.subr.mxu0 0.0
    %1382 = vmatpush1.msra.mxu0 %v1375
    %1383 = vmatprep.subr.mxu0 0.0
    %1384 = vmatpush1.msra.mxu0 0.0
    %1385 = vmatprep.subr.mxu0 0.0
    %1386 = vmatpush1.msra.mxu0 0.0
    %1387 = vmatprep.subr.mxu0 0.0
    %1388 = vmatpush1.msra.mxu0 0.0
    %1389 = vmatprep.subr.mxu0 0.0
    %1390 = vmatpush1.msra.mxu0 0.0
    %1391 = vmatprep.subr.mxu0 0.0
    %1392 = vmatpush1.msra.mxu0 0.0
    %1393 = vmatprep.subr.mxu0 0.0
    %1394 = vmatpush1.msra.mxu0 0.0
    %1395 = vmatprep.subr.mxu0 0.0
    %1396 = vmatpush1.msra.mxu0 0.0
    %1397 = vmatprep.subr.mxu0 0.0
    %1398 = vmatpush1.msra.mxu0 0.0
    %1399 = vmatprep.subr.mxu0 0.0
    %1400 = vmatpush1.msra.mxu0 0.0
    %1401 = vmatprep.subr.mxu0 0.0
    %1402 = vmatpush1.msra.mxu0 0.0
    %1403 = vmatprep.subr.mxu0 0.0
    %1404 = vmatpush1.msra.mxu0 0.0
    %1405 = vmatprep.subr.mxu0 0.0
    %1406 = vmatpush1.msra.mxu0 0.0
    %1407 = vmatprep.subr.mxu0 0.0
    %1408 = vmatpush1.msra.mxu0 0.0
    %1409 = vmatprep.subr.mxu0 0.0
    %1410 = vmatpush1.msra.mxu0 0.0
    %1411 = vmatprep.subr.mxu0 0.0
    %1412 = vmatpush1.msra.mxu0 0.0
    %1413 = vmatprep.subr.mxu0 0.0
    %1414 = vmatpush1.msra.mxu0 0.0
    %1415 = vmatprep.subr.mxu0 0.0
    %1416 = vmatpush1.msra.mxu0 0.0
    %1417 = vmatprep.subr.mxu0 0.0
    %1418 = vmatpush1.msra.mxu0 0.0
    %1419 = vmatprep.subr.mxu0 0.0
    %1420 = vmatpush1.msra.mxu0 0.0
    %1421 = vmatprep.subr.mxu0 0.0
    %1422 = vmatpush1.msra.mxu0 0.0
    %1423 = vmatprep.subr.mxu0 0.0
    %1424 = vmatpush1.msra.mxu0 0.0
    %1425 = vmatprep.subr.mxu0 0.0
    %1426 = vmatpush1.msra.mxu0 0.0
    %1427 = vmatprep.subr.mxu0 0.0
    %1428 = vmatpush1.msra.mxu0 0.0
    %1429 = vmatprep.subr.mxu0 0.0
    %1430 = vmatpush1.msra.mxu0 0.0
    %1431 = vmatprep.subr.mxu0 0.0
    %1432 = vmatpush1.msra.mxu0 0.0
    %1433 = vmatprep.subr.mxu0 0.0
    %1434 = vmatpush1.msra.mxu0 0.0
    %1435 = vmatprep.subr.mxu0 0.0
    %1436 = vmatpush1.msra.mxu0 0.0
    %1437 = vmatprep.subr.mxu0 0.0
    %1438 = vmatpush1.msra.mxu0 0.0
    %1439 = vmatprep.subr.mxu0 0.0
    %1440 = vmatpush1.msra.mxu0 0.0
    %1441 = vmatprep.subr.mxu0 0.0
    %1442 = vmatpush1.msra.mxu0 0.0
    %1443 = vmatprep.mubr.f32.mxu0 0.0
    %1444 = vmatmul.mubr.f32.gmra.mrb[0].mxu0 %v1377
    %v1445 = vpop.f32.mrb[0].mxu0
    %v1446 = vadd.f32 0.0, %v1445
    %v1447 = vpop.f32.mrb[0].mxu0
    %1448 = vdwg.mxu0
    %v1449 = vadd.f32 %v1371, %v1446
    %v1450 = vld [vmem:[#allocation2 + $0x14] sm:$0x3]
    %s1451 = scalar_lea.vmem %s3, 160
    %v1452 = vld [vmem:[%s1451] sm:$0xff]
    %v1453 = vld [vmem:[%s1451 + $0x8] sm:$0xff]
    %v1455 = vsel %vm656, %v1450, 0
    %1457 = vmatprep.subr.mxu0 0.0
    %1458 = vmatpush1.msra.mxu0 %v1452
    %1459 = vmatprep.subr.mxu0 0.0
    %1460 = vmatpush1.msra.mxu0 %v1453
    %1461 = vmatprep.subr.mxu0 0.0
    %1462 = vmatpush1.msra.mxu0 0.0
    %1463 = vmatprep.subr.mxu0 0.0
    %1464 = vmatpush1.msra.mxu0 0.0
    %1465 = vmatprep.subr.mxu0 0.0
    %1466 = vmatpush1.msra.mxu0 0.0
    %1467 = vmatprep.subr.mxu0 0.0
    %1468 = vmatpush1.msra.mxu0 0.0
    %1469 = vmatprep.subr.mxu0 0.0
    %1470 = vmatpush1.msra.mxu0 0.0
    %1471 = vmatprep.subr.mxu0 0.0
    %1472 = vmatpush1.msra.mxu0 0.0
    %1473 = vmatprep.subr.mxu0 0.0
    %1474 = vmatpush1.msra.mxu0 0.0
    %1475 = vmatprep.subr.mxu0 0.0
    %1476 = vmatpush1.msra.mxu0 0.0
    %1477 = vmatprep.subr.mxu0 0.0
    %1478 = vmatpush1.msra.mxu0 0.0
    %1479 = vmatprep.subr.mxu0 0.0
    %1480 = vmatpush1.msra.mxu0 0.0
    %1481 = vmatprep.subr.mxu0 0.0
    %1482 = vmatpush1.msra.mxu0 0.0
    %1483 = vmatprep.subr.mxu0 0.0
    %1484 = vmatpush1.msra.mxu0 0.0
    %1485 = vmatprep.subr.mxu0 0.0
    %1486 = vmatpush1.msra.mxu0 0.0
    %1487 = vmatprep.subr.mxu0 0.0
    %1488 = vmatpush1.msra.mxu0 0.0
    %1489 = vmatprep.subr.mxu0 0.0
    %1490 = vmatpush1.msra.mxu0 0.0
    %1491 = vmatprep.subr.mxu0 0.0
    %1492 = vmatpush1.msra.mxu0 0.0
    %1493 = vmatprep.subr.mxu0 0.0
    %1494 = vmatpush1.msra.mxu0 0.0
    %1495 = vmatprep.subr.mxu0 0.0
    %1496 = vmatpush1.msra.mxu0 0.0
    %1497 = vmatprep.subr.mxu0 0.0
    %1498 = vmatpush1.msra.mxu0 0.0
    %1499 = vmatprep.subr.mxu0 0.0
    %1500 = vmatpush1.msra.mxu0 0.0
    %1501 = vmatprep.subr.mxu0 0.0
    %1502 = vmatpush1.msra.mxu0 0.0
    %1503 = vmatprep.subr.mxu0 0.0
    %1504 = vmatpush1.msra.mxu0 0.0
    %1505 = vmatprep.subr.mxu0 0.0
    %1506 = vmatpush1.msra.mxu0 0.0
    %1507 = vmatprep.subr.mxu0 0.0
    %1508 = vmatpush1.msra.mxu0 0.0
    %1509 = vmatprep.subr.mxu0 0.0
    %1510 = vmatpush1.msra.mxu0 0.0
    %1511 = vmatprep.subr.mxu0 0.0
    %1512 = vmatpush1.msra.mxu0 0.0
    %1513 = vmatprep.subr.mxu0 0.0
    %1514 = vmatpush1.msra.mxu0 0.0
    %1515 = vmatprep.subr.mxu0 0.0
    %1516 = vmatpush1.msra.mxu0 0.0
    %1517 = vmatprep.subr.mxu0 0.0
    %1518 = vmatpush1.msra.mxu0 0.0
    %1519 = vmatprep.subr.mxu0 0.0
    %1520 = vmatpush1.msra.mxu0 0.0
    %1521 = vmatprep.mubr.f32.mxu0 0.0
    %1522 = vmatmul.mubr.f32.gmra.mrb[0].mxu0 %v1455
    %v1523 = vpop.f32.mrb[0].mxu0
    %v1524 = vadd.f32 0.0, %v1523
    %v1525 = vpop.f32.mrb[0].mxu0
    %1526 = vdwg.mxu0
    %v1527 = vadd.f32 %v1449, %v1524
    %v1528 = vld [vmem:[#allocation2 + $0x16] sm:$0x3]
    %s1529 = scalar_lea.vmem %s3, 176
    %v1530 = vld [vmem:[%s1529] sm:$0xff]
    %v1531 = vld [vmem:[%s1529 + $0x8] sm:$0xff]
    %v1533 = vsel %vm656, %v1528, 0
    %1535 = vmatprep.subr.mxu0 0.0
    %1536 = vmatpush1.msra.mxu0 %v1530
    %1537 = vmatprep.subr.mxu0 0.0
    %1538 = vmatpush1.msra.mxu0 %v1531
    %1539 = vmatprep.subr.mxu0 0.0
    %1540 = vmatpush1.msra.mxu0 0.0
    %1541 = vmatprep.subr.mxu0 0.0
    %1542 = vmatpush1.msra.mxu0 0.0
    %1543 = vmatprep.subr.mxu0 0.0
    %1544 = vmatpush1.msra.mxu0 0.0
    %1545 = vmatprep.subr.mxu0 0.0
    %1546 = vmatpush1.msra.mxu0 0.0
    %1547 = vmatprep.subr.mxu0 0.0
    %1548 = vmatpush1.msra.mxu0 0.0
    %1549 = vmatprep.subr.mxu0 0.0
    %1550 = vmatpush1.msra.mxu0 0.0
    %1551 = vmatprep.subr.mxu0 0.0
    %1552 = vmatpush1.msra.mxu0 0.0
    %1553 = vmatprep.subr.mxu0 0.0
    %1554 = vmatpush1.msra.mxu0 0.0
    %1555 = vmatprep.subr.mxu0 0.0
    %1556 = vmatpush1.msra.mxu0 0.0
    %1557 = vmatprep.subr.mxu0 0.0
    %1558 = vmatpush1.msra.mxu0 0.0
    %1559 = vmatprep.subr.mxu0 0.0
    %1560 = vmatpush1.msra.mxu0 0.0
    %1561 = vmatprep.subr.mxu0 0.0
    %1562 = vmatpush1.msra.mxu0 0.0
    %1563 = vmatprep.subr.mxu0 0.0
    %1564 = vmatpush1.msra.mxu0 0.0
    %1565 = vmatprep.subr.mxu0 0.0
    %1566 = vmatpush1.msra.mxu0 0.0
    %1567 = vmatprep.subr.mxu0 0.0
    %1568 = vmatpush1.msra.mxu0 0.0
    %1569 = vmatprep.subr.mxu0 0.0
    %1570 = vmatpush1.msra.mxu0 0.0
    %1571 = vmatprep.subr.mxu0 0.0
    %1572 = vmatpush1.msra.mxu0 0.0
    %1573 = vmatprep.subr.mxu0 0.0
    %1574 = vmatpush1.msra.mxu0 0.0
    %1575 = vmatprep.subr.mxu0 0.0
    %1576 = vmatpush1.msra.mxu0 0.0
    %1577 = vmatprep.subr.mxu0 0.0
    %1578 = vmatpush1.msra.mxu0 0.0
    %1579 = vmatprep.subr.mxu0 0.0
    %1580 = vmatpush1.msra.mxu0 0.0
    %1581 = vmatprep.subr.mxu0 0.0
    %1582 = vmatpush1.msra.mxu0 0.0
    %1583 = vmatprep.subr.mxu0 0.0
    %1584 = vmatpush1.msra.mxu0 0.0
    %1585 = vmatprep.subr.mxu0 0.0
    %1586 = vmatpush1.msra.mxu0 0.0
    %1587 = vmatprep.subr.mxu0 0.0
    %1588 = vmatpush1.msra.mxu0 0.0
    %1589 = vmatprep.subr.mxu0 0.0
    %1590 = vmatpush1.msra.mxu0 0.0
    %1591 = vmatprep.subr.mxu0 0.0
    %1592 = vmatpush1.msra.mxu0 0.0
    %1593 = vmatprep.subr.mxu0 0.0
    %1594 = vmatpush1.msra.mxu0 0.0
    %1595 = vmatprep.subr.mxu0 0.0
    %1596 = vmatpush1.msra.mxu0 0.0
    %1597 = vmatprep.subr.mxu0 0.0
    %1598 = vmatpush1.msra.mxu0 0.0
    %1599 = vmatprep.mubr.f32.mxu0 0.0
    %1600 = vmatmul.mubr.f32.gmra.mrb[0].mxu0 %v1533
    %v1601 = vpop.f32.mrb[0].mxu0
    %v1602 = vadd.f32 0.0, %v1601
    %v1603 = vpop.f32.mrb[0].mxu0
    %1604 = vdwg.mxu0
    %v1605 = vadd.f32 %v1527, %v1602
    %v1606 = vld [vmem:[#allocation2 + $0x18] sm:$0x3]
    %s1607 = scalar_lea.vmem %s3, 192
    %v1608 = vld [vmem:[%s1607] sm:$0xff]
    %v1609 = vld [vmem:[%s1607 + $0x8] sm:$0xff]
    %v1611 = vsel %vm656, %v1606, 0
    %1613 = vmatprep.subr.mxu0 0.0
    %1614 = vmatpush1.msra.mxu0 %v1608
    %1615 = vmatprep.subr.mxu0 0.0
    %1616 = vmatpush1.msra.mxu0 %v1609
    %1617 = vmatprep.subr.mxu0 0.0
    %1618 = vmatpush1.msra.mxu0 0.0
    %1619 = vmatprep.subr.mxu0 0.0
    %1620 = vmatpush1.msra.mxu0 0.0
    %1621 = vmatprep.subr.mxu0 0.0
    %1622 = vmatpush1.msra.mxu0 0.0
    %1623 = vmatprep.subr.mxu0 0.0
    %1624 = vmatpush1.msra.mxu0 0.0
    %1625 = vmatprep.subr.mxu0 0.0
    %1626 = vmatpush1.msra.mxu0 0.0
    %1627 = vmatprep.subr.mxu0 0.0
    %1628 = vmatpush1.msra.mxu0 0.0
    %1629 = vmatprep.subr.mxu0 0.0
    %1630 = vmatpush1.msra.mxu0 0.0
    %1631 = vmatprep.subr.mxu0 0.0
    %1632 = vmatpush1.msra.mxu0 0.0
    %1633 = vmatprep.subr.mxu0 0.0
    %1634 = vmatpush1.msra.mxu0 0.0
    %1635 = vmatprep.subr.mxu0 0.0
    %1636 = vmatpush1.msra.mxu0 0.0
    %1637 = vmatprep.subr.mxu0 0.0
    %1638 = vmatpush1.msra.mxu0 0.0
    %1639 = vmatprep.subr.mxu0 0.0
    %1640 = vmatpush1.msra.mxu0 0.0
    %1641 = vmatprep.subr.mxu0 0.0
    %1642 = vmatpush1.msra.mxu0 0.0
    %1643 = vmatprep.subr.mxu0 0.0
    %1644 = vmatpush1.msra.mxu0 0.0
    %1645 = vmatprep.subr.mxu0 0.0
    %1646 = vmatpush1.msra.mxu0 0.0
    %1647 = vmatprep.subr.mxu0 0.0
    %1648 = vmatpush1.msra.mxu0 0.0
    %1649 = vmatprep.subr.mxu0 0.0
    %1650 = vmatpush1.msra.mxu0 0.0
    %1651 = vmatprep.subr.mxu0 0.0
    %1652 = vmatpush1.msra.mxu0 0.0
    %1653 = vmatprep.subr.mxu0 0.0
    %1654 = vmatpush1.msra.mxu0 0.0
    %1655 = vmatprep.subr.mxu0 0.0
    %1656 = vmatpush1.msra.mxu0 0.0
    %1657 = vmatprep.subr.mxu0 0.0
    %1658 = vmatpush1.msra.mxu0 0.0
    %1659 = vmatprep.subr.mxu0 0.0
    %1660 = vmatpush1.msra.mxu0 0.0
    %1661 = vmatprep.subr.mxu0 0.0
    %1662 = vmatpush1.msra.mxu0 0.0
    %1663 = vmatprep.subr.mxu0 0.0
    %1664 = vmatpush1.msra.mxu0 0.0
    %1665 = vmatprep.subr.mxu0 0.0
    %1666 = vmatpush1.msra.mxu0 0.0
    %1667 = vmatprep.subr.mxu0 0.0
    %1668 = vmatpush1.msra.mxu0 0.0
    %1669 = vmatprep.subr.mxu0 0.0
    %1670 = vmatpush1.msra.mxu0 0.0
    %1671 = vmatprep.subr.mxu0 0.0
    %1672 = vmatpush1.msra.mxu0 0.0
    %1673 = vmatprep.subr.mxu0 0.0
    %1674 = vmatpush1.msra.mxu0 0.0
    %1675 = vmatprep.subr.mxu0 0.0
    %1676 = vmatpush1.msra.mxu0 0.0
    %1677 = vmatprep.mubr.f32.mxu0 0.0
    %1678 = vmatmul.mubr.f32.gmra.mrb[0].mxu0 %v1611
    %v1679 = vpop.f32.mrb[0].mxu0
    %v1680 = vadd.f32 0.0, %v1679
    %v1681 = vpop.f32.mrb[0].mxu0
    %1682 = vdwg.mxu0
    %v1683 = vadd.f32 %v1605, %v1680
    %v1684 = vld [vmem:[#allocation2 + $0x1a] sm:$0x3]
    %s1685 = scalar_lea.vmem %s3, 208
    %v1686 = vld [vmem:[%s1685] sm:$0xff]
    %v1687 = vld [vmem:[%s1685 + $0x8] sm:$0xff]
    %v1689 = vsel %vm656, %v1684, 0
    %1691 = vmatprep.subr.mxu0 0.0
    %1692 = vmatpush1.msra.mxu0 %v1686
    %1693 = vmatprep.subr.mxu0 0.0
    %1694 = vmatpush1.msra.mxu0 %v1687
    %1695 = vmatprep.subr.mxu0 0.0
    %1696 = vmatpush1.msra.mxu0 0.0
    %1697 = vmatprep.subr.mxu0 0.0
    %1698 = vmatpush1.msra.mxu0 0.0
    %1699 = vmatprep.subr.mxu0 0.0
    %1700 = vmatpush1.msra.mxu0 0.0
    %1701 = vmatprep.subr.mxu0 0.0
    %1702 = vmatpush1.msra.mxu0 0.0
    %1703 = vmatprep.subr.mxu0 0.0
    %1704 = vmatpush1.msra.mxu0 0.0
    %1705 = vmatprep.subr.mxu0 0.0
    %1706 = vmatpush1.msra.mxu0 0.0
    %1707 = vmatprep.subr.mxu0 0.0
    %1708 = vmatpush1.msra.mxu0 0.0
    %1709 = vmatprep.subr.mxu0 0.0
    %1710 = vmatpush1.msra.mxu0 0.0
    %1711 = vmatprep.subr.mxu0 0.0
    %1712 = vmatpush1.msra.mxu0 0.0
    %1713 = vmatprep.subr.mxu0 0.0
    %1714 = vmatpush1.msra.mxu0 0.0
    %1715 = vmatprep.subr.mxu0 0.0
    %1716 = vmatpush1.msra.mxu0 0.0
    %1717 = vmatprep.subr.mxu0 0.0
    %1718 = vmatpush1.msra.mxu0 0.0
    %1719 = vmatprep.subr.mxu0 0.0
    %1720 = vmatpush1.msra.mxu0 0.0
    %1721 = vmatprep.subr.mxu0 0.0
    %1722 = vmatpush1.msra.mxu0 0.0
    %1723 = vmatprep.subr.mxu0 0.0
    %1724 = vmatpush1.msra.mxu0 0.0
    %1725 = vmatprep.subr.mxu0 0.0
    %1726 = vmatpush1.msra.mxu0 0.0
    %1727 = vmatprep.subr.mxu0 0.0
    %1728 = vmatpush1.msra.mxu0 0.0
    %1729 = vmatprep.subr.mxu0 0.0
    %1730 = vmatpush1.msra.mxu0 0.0
    %1731 = vmatprep.subr.mxu0 0.0
    %1732 = vmatpush1.msra.mxu0 0.0
    %1733 = vmatprep.subr.mxu0 0.0
    %1734 = vmatpush1.msra.mxu0 0.0
    %1735 = vmatprep.subr.mxu0 0.0
    %1736 = vmatpush1.msra.mxu0 0.0
    %1737 = vmatprep.subr.mxu0 0.0
    %1738 = vmatpush1.msra.mxu0 0.0
    %1739 = vmatprep.subr.mxu0 0.0
    %1740 = vmatpush1.msra.mxu0 0.0
    %1741 = vmatprep.subr.mxu0 0.0
    %1742 = vmatpush1.msra.mxu0 0.0
    %1743 = vmatprep.subr.mxu0 0.0
    %1744 = vmatpush1.msra.mxu0 0.0
    %1745 = vmatprep.subr.mxu0 0.0
    %1746 = vmatpush1.msra.mxu0 0.0
    %1747 = vmatprep.subr.mxu0 0.0
    %1748 = vmatpush1.msra.mxu0 0.0
    %1749 = vmatprep.subr.mxu0 0.0
    %1750 = vmatpush1.msra.mxu0 0.0
    %1751 = vmatprep.subr.mxu0 0.0
    %1752 = vmatpush1.msra.mxu0 0.0
    %1753 = vmatprep.subr.mxu0 0.0
    %1754 = vmatpush1.msra.mxu0 0.0
    %1755 = vmatprep.mubr.f32.mxu0 0.0
    %1756 = vmatmul.mubr.f32.gmra.mrb[0].mxu0 %v1689
    %v1757 = vpop.f32.mrb[0].mxu0
    %v1758 = vadd.f32 0.0, %v1757
    %v1759 = vpop.f32.mrb[0].mxu0
    %1760 = vdwg.mxu0
    %v1761 = vadd.f32 %v1683, %v1758
    %v1762 = vld [vmem:[#allocation2 + $0x1c] sm:$0x3]
    %s1763 = scalar_lea.vmem %s3, 224
    %v1764 = vld [vmem:[%s1763] sm:$0xff]
    %v1765 = vld [vmem:[%s1763 + $0x8] sm:$0xff]
    %v1767 = vsel %vm656, %v1762, 0
    %1769 = vmatprep.subr.mxu0 0.0
    %1770 = vmatpush1.msra.mxu0 %v1764
    %1771 = vmatprep.subr.mxu0 0.0
    %1772 = vmatpush1.msra.mxu0 %v1765
    %1773 = vmatprep.subr.mxu0 0.0
    %1774 = vmatpush1.msra.mxu0 0.0
    %1775 = vmatprep.subr.mxu0 0.0
    %1776 = vmatpush1.msra.mxu0 0.0
    %1777 = vmatprep.subr.mxu0 0.0
    %1778 = vmatpush1.msra.mxu0 0.0
    %1779 = vmatprep.subr.mxu0 0.0
    %1780 = vmatpush1.msra.mxu0 0.0
    %1781 = vmatprep.subr.mxu0 0.0
    %1782 = vmatpush1.msra.mxu0 0.0
    %1783 = vmatprep.subr.mxu0 0.0
    %1784 = vmatpush1.msra.mxu0 0.0
    %1785 = vmatprep.subr.mxu0 0.0
    %1786 = vmatpush1.msra.mxu0 0.0
    %1787 = vmatprep.subr.mxu0 0.0
    %1788 = vmatpush1.msra.mxu0 0.0
    %1789 = vmatprep.subr.mxu0 0.0
    %1790 = vmatpush1.msra.mxu0 0.0
    %1791 = vmatprep.subr.mxu0 0.0
    %1792 = vmatpush1.msra.mxu0 0.0
    %1793 = vmatprep.subr.mxu0 0.0
    %1794 = vmatpush1.msra.mxu0 0.0
    %1795 = vmatprep.subr.mxu0 0.0
    %1796 = vmatpush1.msra.mxu0 0.0
    %1797 = vmatprep.subr.mxu0 0.0
    %1798 = vmatpush1.msra.mxu0 0.0
    %1799 = vmatprep.subr.mxu0 0.0
    %1800 = vmatpush1.msra.mxu0 0.0
    %1801 = vmatprep.subr.mxu0 0.0
    %1802 = vmatpush1.msra.mxu0 0.0
    %1803 = vmatprep.subr.mxu0 0.0
    %1804 = vmatpush1.msra.mxu0 0.0
    %1805 = vmatprep.subr.mxu0 0.0
    %1806 = vmatpush1.msra.mxu0 0.0
    %1807 = vmatprep.subr.mxu0 0.0
    %1808 = vmatpush1.msra.mxu0 0.0
    %1809 = vmatprep.subr.mxu0 0.0
    %1810 = vmatpush1.msra.mxu0 0.0
    %1811 = vmatprep.subr.mxu0 0.0
    %1812 = vmatpush1.msra.mxu0 0.0
    %1813 = vmatprep.subr.mxu0 0.0
    %1814 = vmatpush1.msra.mxu0 0.0
    %1815 = vmatprep.subr.mxu0 0.0
    %1816 = vmatpush1.msra.mxu0 0.0
    %1817 = vmatprep.subr.mxu0 0.0
    %1818 = vmatpush1.msra.mxu0 0.0
    %1819 = vmatprep.subr.mxu0 0.0
    %1820 = vmatpush1.msra.mxu0 0.0
    %1821 = vmatprep.subr.mxu0 0.0
    %1822 = vmatpush1.msra.mxu0 0.0
    %1823 = vmatprep.subr.mxu0 0.0
    %1824 = vmatpush1.msra.mxu0 0.0
    %1825 = vmatprep.subr.mxu0 0.0
    %1826 = vmatpush1.msra.mxu0 0.0
    %1827 = vmatprep.subr.mxu0 0.0
    %1828 = vmatpush1.msra.mxu0 0.0
    %1829 = vmatprep.subr.mxu0 0.0
    %1830 = vmatpush1.msra.mxu0 0.0
    %1831 = vmatprep.subr.mxu0 0.0
    %1832 = vmatpush1.msra.mxu0 0.0
    %1833 = vmatprep.mubr.f32.mxu0 0.0
    %1834 = vmatmul.mubr.f32.gmra.mrb[0].mxu0 %v1767
    %v1835 = vpop.f32.mrb[0].mxu0
    %v1836 = vadd.f32 0.0, %v1835
    %v1837 = vpop.f32.mrb[0].mxu0
    %1838 = vdwg.mxu0
    %v1839 = vadd.f32 %v1761, %v1836
    %v1840 = vld [vmem:[#allocation2 + $0x1e] sm:$0x3]
    %s1841 = scalar_lea.vmem %s3, 240
    %v1842 = vld [vmem:[%s1841] sm:$0xff]
    %v1843 = vld [vmem:[%s1841 + $0x8] sm:$0xff]
    %v1845 = vsel %vm656, %v1840, 0
    %1847 = vmatprep.subr.mxu0 0.0
    %1848 = vmatpush1.msra.mxu0 %v1842
    %1849 = vmatprep.subr.mxu0 0.0
    %1850 = vmatpush1.msra.mxu0 %v1843
    %1851 = vmatprep.subr.mxu0 0.0
    %1852 = vmatpush1.msra.mxu0 0.0
    %1853 = vmatprep.subr.mxu0 0.0
    %1854 = vmatpush1.msra.mxu0 0.0
    %1855 = vmatprep.subr.mxu0 0.0
    %1856 = vmatpush1.msra.mxu0 0.0
    %1857 = vmatprep.subr.mxu0 0.0
    %1858 = vmatpush1.msra.mxu0 0.0
    %1859 = vmatprep.subr.mxu0 0.0
    %1860 = vmatpush1.msra.mxu0 0.0
    %1861 = vmatprep.subr.mxu0 0.0
    %1862 = vmatpush1.msra.mxu0 0.0
    %1863 = vmatprep.subr.mxu0 0.0
    %1864 = vmatpush1.msra.mxu0 0.0
    %1865 = vmatprep.subr.mxu0 0.0
    %1866 = vmatpush1.msra.mxu0 0.0
    %1867 = vmatprep.subr.mxu0 0.0
    %1868 = vmatpush1.msra.mxu0 0.0
    %1869 = vmatprep.subr.mxu0 0.0
    %1870 = vmatpush1.msra.mxu0 0.0
    %1871 = vmatprep.subr.mxu0 0.0
    %1872 = vmatpush1.msra.mxu0 0.0
    %1873 = vmatprep.subr.mxu0 0.0
    %1874 = vmatpush1.msra.mxu0 0.0
    %1875 = vmatprep.subr.mxu0 0.0
    %1876 = vmatpush1.msra.mxu0 0.0
    %1877 = vmatprep.subr.mxu0 0.0
    %1878 = vmatpush1.msra.mxu0 0.0
    %1879 = vmatprep.subr.mxu0 0.0
    %1880 = vmatpush1.msra.mxu0 0.0
    %1881 = vmatprep.subr.mxu0 0.0
    %1882 = vmatpush1.msra.mxu0 0.0
    %1883 = vmatprep.subr.mxu0 0.0
    %1884 = vmatpush1.msra.mxu0 0.0
    %1885 = vmatprep.subr.mxu0 0.0
    %1886 = vmatpush1.msra.mxu0 0.0
    %1887 = vmatprep.subr.mxu0 0.0
    %1888 = vmatpush1.msra.mxu0 0.0
    %1889 = vmatprep.subr.mxu0 0.0
    %1890 = vmatpush1.msra.mxu0 0.0
    %1891 = vmatprep.subr.mxu0 0.0
    %1892 = vmatpush1.msra.mxu0 0.0
    %1893 = vmatprep.subr.mxu0 0.0
    %1894 = vmatpush1.msra.mxu0 0.0
    %1895 = vmatprep.subr.mxu0 0.0
    %1896 = vmatpush1.msra.mxu0 0.0
    %1897 = vmatprep.subr.mxu0 0.0
    %1898 = vmatpush1.msra.mxu0 0.0
    %1899 = vmatprep.subr.mxu0 0.0
    %1900 = vmatpush1.msra.mxu0 0.0
    %1901 = vmatprep.subr.mxu0 0.0
    %1902 = vmatpush1.msra.mxu0 0.0
    %1903 = vmatprep.subr.mxu0 0.0
    %1904 = vmatpush1.msra.mxu0 0.0
    %1905 = vmatprep.subr.mxu0 0.0
    %1906 = vmatpush1.msra.mxu0 0.0
    %1907 = vmatprep.subr.mxu0 0.0
    %1908 = vmatpush1.msra.mxu0 0.0
    %1909 = vmatprep.subr.mxu0 0.0
    %1910 = vmatpush1.msra.mxu0 0.0
    %1911 = vmatprep.mubr.f32.mxu0 0.0
    %1912 = vmatmul.mubr.f32.gmra.mrb[0].mxu0 %v1845
    %v1913 = vpop.f32.mrb[0].mxu0
    %v1914 = vadd.f32 0.0, %v1913
    %v1915 = vpop.f32.mrb[0].mxu0
    %1916 = vdwg.mxu0
    %v1917 = vadd.f32 %v1839, %v1914
    %v1918 = vld [vmem:[#allocation2 + $0x20] sm:$0x3]
    %s1919 = scalar_lea.vmem %s3, 256
    %v1920 = vld [vmem:[%s1919] sm:$0xff]
    %v1921 = vld [vmem:[%s1919 + $0x8] sm:$0xff]
    %v1923 = vsel %vm656, %v1918, 0
    %1925 = vmatprep.subr.mxu0 0.0
    %1926 = vmatpush1.msra.mxu0 %v1920
    %1927 = vmatprep.subr.mxu0 0.0
    %1928 = vmatpush1.msra.mxu0 %v1921
    %1929 = vmatprep.subr.mxu0 0.0
    %1930 = vmatpush1.msra.mxu0 0.0
    %1931 = vmatprep.subr.mxu0 0.0
    %1932 = vmatpush1.msra.mxu0 0.0
    %1933 = vmatprep.subr.mxu0 0.0
    %1934 = vmatpush1.msra.mxu0 0.0
    %1935 = vmatprep.subr.mxu0 0.0
    %1936 = vmatpush1.msra.mxu0 0.0
    %1937 = vmatprep.subr.mxu0 0.0
    %1938 = vmatpush1.msra.mxu0 0.0
    %1939 = vmatprep.subr.mxu0 0.0
    %1940 = vmatpush1.msra.mxu0 0.0
    %1941 = vmatprep.subr.mxu0 0.0
    %1942 = vmatpush1.msra.mxu0 0.0
    %1943 = vmatprep.subr.mxu0 0.0
    %1944 = vmatpush1.msra.mxu0 0.0
    %1945 = vmatprep.subr.mxu0 0.0
    %1946 = vmatpush1.msra.mxu0 0.0
    %1947 = vmatprep.subr.mxu0 0.0
    %1948 = vmatpush1.msra.mxu0 0.0
    %1949 = vmatprep.subr.mxu0 0.0
    %1950 = vmatpush1.msra.mxu0 0.0
    %1951 = vmatprep.subr.mxu0 0.0
    %1952 = vmatpush1.msra.mxu0 0.0
    %1953 = vmatprep.subr.mxu0 0.0
    %1954 = vmatpush1.msra.mxu0 0.0
    %1955 = vmatprep.subr.mxu0 0.0
    %1956 = vmatpush1.msra.mxu0 0.0
    %1957 = vmatprep.subr.mxu0 0.0
    %1958 = vmatpush1.msra.mxu0 0.0
    %1959 = vmatprep.subr.mxu0 0.0
    %1960 = vmatpush1.msra.mxu0 0.0
    %1961 = vmatprep.subr.mxu0 0.0
    %1962 = vmatpush1.msra.mxu0 0.0
    %1963 = vmatprep.subr.mxu0 0.0
    %1964 = vmatpush1.msra.mxu0 0.0
    %1965 = vmatprep.subr.mxu0 0.0
    %1966 = vmatpush1.msra.mxu0 0.0
    %1967 = vmatprep.subr.mxu0 0.0
    %1968 = vmatpush1.msra.mxu0 0.0
    %1969 = vmatprep.subr.mxu0 0.0
    %1970 = vmatpush1.msra.mxu0 0.0
    %1971 = vmatprep.subr.mxu0 0.0
    %1972 = vmatpush1.msra.mxu0 0.0
    %1973 = vmatprep.subr.mxu0 0.0
    %1974 = vmatpush1.msra.mxu0 0.0
    %1975 = vmatprep.subr.mxu0 0.0
    %1976 = vmatpush1.msra.mxu0 0.0
    %1977 = vmatprep.subr.mxu0 0.0
    %1978 = vmatpush1.msra.mxu0 0.0
    %1979 = vmatprep.subr.mxu0 0.0
    %1980 = vmatpush1.msra.mxu0 0.0
    %1981 = vmatprep.subr.mxu0 0.0
    %1982 = vmatpush1.msra.mxu0 0.0
    %1983 = vmatprep.subr.mxu0 0.0
    %1984 = vmatpush1.msra.mxu0 0.0
    %1985 = vmatprep.subr.mxu0 0.0
    %1986 = vmatpush1.msra.mxu0 0.0
    %1987 = vmatprep.subr.mxu0 0.0
    %1988 = vmatpush1.msra.mxu0 0.0
    %1989 = vmatprep.mubr.f32.mxu0 0.0
    %1990 = vmatmul.mubr.f32.gmra.mrb[0].mxu0 %v1923
    %v1991 = vpop.f32.mrb[0].mxu0
    %v1992 = vadd.f32 0.0, %v1991
    %v1993 = vpop.f32.mrb[0].mxu0
    %1994 = vdwg.mxu0
    %v1995 = vadd.f32 %v1917, %v1992
    %v1996 = vld [vmem:[#allocation2 + $0x22] sm:$0x3]
    %s1997 = scalar_lea.vmem %s3, 272
    %v1998 = vld [vmem:[%s1997] sm:$0xff]
    %v1999 = vld [vmem:[%s1997 + $0x8] sm:$0xff]
    %v2001 = vsel %vm656, %v1996, 0
    %2003 = vmatprep.subr.mxu0 0.0
    %2004 = vmatpush1.msra.mxu0 %v1998
    %2005 = vmatprep.subr.mxu0 0.0
    %2006 = vmatpush1.msra.mxu0 %v1999
    %2007 = vmatprep.subr.mxu0 0.0
    %2008 = vmatpush1.msra.mxu0 0.0
    %2009 = vmatprep.subr.mxu0 0.0
    %2010 = vmatpush1.msra.mxu0 0.0
    %2011 = vmatprep.subr.mxu0 0.0
    %2012 = vmatpush1.msra.mxu0 0.0
    %2013 = vmatprep.subr.mxu0 0.0
    %2014 = vmatpush1.msra.mxu0 0.0
    %2015 = vmatprep.subr.mxu0 0.0
    %2016 = vmatpush1.msra.mxu0 0.0
    %2017 = vmatprep.subr.mxu0 0.0
    %2018 = vmatpush1.msra.mxu0 0.0
    %2019 = vmatprep.subr.mxu0 0.0
    %2020 = vmatpush1.msra.mxu0 0.0
    %2021 = vmatprep.subr.mxu0 0.0
    %2022 = vmatpush1.msra.mxu0 0.0
    %2023 = vmatprep.subr.mxu0 0.0
    %2024 = vmatpush1.msra.mxu0 0.0
    %2025 = vmatprep.subr.mxu0 0.0
    %2026 = vmatpush1.msra.mxu0 0.0
    %2027 = vmatprep.subr.mxu0 0.0
    %2028 = vmatpush1.msra.mxu0 0.0
    %2029 = vmatprep.subr.mxu0 0.0
    %2030 = vmatpush1.msra.mxu0 0.0
    %2031 = vmatprep.subr.mxu0 0.0
    %2032 = vmatpush1.msra.mxu0 0.0
    %2033 = vmatprep.subr.mxu0 0.0
    %2034 = vmatpush1.msra.mxu0 0.0
    %2035 = vmatprep.subr.mxu0 0.0
    %2036 = vmatpush1.msra.mxu0 0.0
    %2037 = vmatprep.subr.mxu0 0.0
    %2038 = vmatpush1.msra.mxu0 0.0
    %2039 = vmatprep.subr.mxu0 0.0
    %2040 = vmatpush1.msra.mxu0 0.0
    %2041 = vmatprep.subr.mxu0 0.0
    %2042 = vmatpush1.msra.mxu0 0.0
    %2043 = vmatprep.subr.mxu0 0.0
    %2044 = vmatpush1.msra.mxu0 0.0
    %2045 = vmatprep.subr.mxu0 0.0
    %2046 = vmatpush1.msra.mxu0 0.0
    %2047 = vmatprep.subr.mxu0 0.0
    %2048 = vmatpush1.msra.mxu0 0.0
    %2049 = vmatprep.subr.mxu0 0.0
    %2050 = vmatpush1.msra.mxu0 0.0
    %2051 = vmatprep.subr.mxu0 0.0
    %2052 = vmatpush1.msra.mxu0 0.0
    %2053 = vmatprep.subr.mxu0 0.0
    %2054 = vmatpush1.msra.mxu0 0.0
    %2055 = vmatprep.subr.mxu0 0.0
    %2056 = vmatpush1.msra.mxu0 0.0
    %2057 = vmatprep.subr.mxu0 0.0
    %2058 = vmatpush1.msra.mxu0 0.0
    %2059 = vmatprep.subr.mxu0 0.0
    %2060 = vmatpush1.msra.mxu0 0.0
    %2061 = vmatprep.subr.mxu0 0.0
    %2062 = vmatpush1.msra.mxu0 0.0
    %2063 = vmatprep.subr.mxu0 0.0
    %2064 = vmatpush1.msra.mxu0 0.0
    %2065 = vmatprep.subr.mxu0 0.0
    %2066 = vmatpush1.msra.mxu0 0.0
    %2067 = vmatprep.mubr.f32.mxu0 0.0
    %2068 = vmatmul.mubr.f32.gmra.mrb[0].mxu0 %v2001
    %v2069 = vpop.f32.mrb[0].mxu0
    %v2070 = vadd.f32 0.0, %v2069
    %v2071 = vpop.f32.mrb[0].mxu0
    %2072 = vdwg.mxu0
    %v2073 = vadd.f32 %v1995, %v2070
    %v2074 = vld [vmem:[#allocation2 + $0x24] sm:$0x3]
    %s2075 = scalar_lea.vmem %s3, 288
    %v2076 = vld [vmem:[%s2075] sm:$0xff]
    %v2077 = vld [vmem:[%s2075 + $0x8] sm:$0xff]
    %v2079 = vsel %vm656, %v2074, 0
    %2081 = vmatprep.subr.mxu0 0.0
    %2082 = vmatpush1.msra.mxu0 %v2076
    %2083 = vmatprep.subr.mxu0 0.0
    %2084 = vmatpush1.msra.mxu0 %v2077
    %2085 = vmatprep.subr.mxu0 0.0
    %2086 = vmatpush1.msra.mxu0 0.0
    %2087 = vmatprep.subr.mxu0 0.0
    %2088 = vmatpush1.msra.mxu0 0.0
    %2089 = vmatprep.subr.mxu0 0.0
    %2090 = vmatpush1.msra.mxu0 0.0
    %2091 = vmatprep.subr.mxu0 0.0
    %2092 = vmatpush1.msra.mxu0 0.0
    %2093 = vmatprep.subr.mxu0 0.0
    %2094 = vmatpush1.msra.mxu0 0.0
    %2095 = vmatprep.subr.mxu0 0.0
    %2096 = vmatpush1.msra.mxu0 0.0
    %2097 = vmatprep.subr.mxu0 0.0
    %2098 = vmatpush1.msra.mxu0 0.0
    %2099 = vmatprep.subr.mxu0 0.0
    %2100 = vmatpush1.msra.mxu0 0.0
    %2101 = vmatprep.subr.mxu0 0.0
    %2102 = vmatpush1.msra.mxu0 0.0
    %2103 = vmatprep.subr.mxu0 0.0
    %2104 = vmatpush1.msra.mxu0 0.0
    %2105 = vmatprep.subr.mxu0 0.0
    %2106 = vmatpush1.msra.mxu0 0.0
    %2107 = vmatprep.subr.mxu0 0.0
    %2108 = vmatpush1.msra.mxu0 0.0
    %2109 = vmatprep.subr.mxu0 0.0
    %2110 = vmatpush1.msra.mxu0 0.0
    %2111 = vmatprep.subr.mxu0 0.0
    %2112 = vmatpush1.msra.mxu0 0.0
    %2113 = vmatprep.subr.mxu0 0.0
    %2114 = vmatpush1.msra.mxu0 0.0
    %2115 = vmatprep.subr.mxu0 0.0
    %2116 = vmatpush1.msra.mxu0 0.0
    %2117 = vmatprep.subr.mxu0 0.0
    %2118 = vmatpush1.msra.mxu0 0.0
    %2119 = vmatprep.subr.mxu0 0.0
    %2120 = vmatpush1.msra.mxu0 0.0
    %2121 = vmatprep.subr.mxu0 0.0
    %2122 = vmatpush1.msra.mxu0 0.0
    %2123 = vmatprep.subr.mxu0 0.0
    %2124 = vmatpush1.msra.mxu0 0.0
    %2125 = vmatprep.subr.mxu0 0.0
    %2126 = vmatpush1.msra.mxu0 0.0
    %2127 = vmatprep.subr.mxu0 0.0
    %2128 = vmatpush1.msra.mxu0 0.0
    %2129 = vmatprep.subr.mxu0 0.0
    %2130 = vmatpush1.msra.mxu0 0.0
    %2131 = vmatprep.subr.mxu0 0.0
    %2132 = vmatpush1.msra.mxu0 0.0
    %2133 = vmatprep.subr.mxu0 0.0
    %2134 = vmatpush1.msra.mxu0 0.0
    %2135 = vmatprep.subr.mxu0 0.0
    %2136 = vmatpush1.msra.mxu0 0.0
    %2137 = vmatprep.subr.mxu0 0.0
    %2138 = vmatpush1.msra.mxu0 0.0
    %2139 = vmatprep.subr.mxu0 0.0
    %2140 = vmatpush1.msra.mxu0 0.0
    %2141 = vmatprep.subr.mxu0 0.0
    %2142 = vmatpush1.msra.mxu0 0.0
    %2143 = vmatprep.subr.mxu0 0.0
    %2144 = vmatpush1.msra.mxu0 0.0
    %2145 = vmatprep.mubr.f32.mxu0 0.0
    %2146 = vmatmul.mubr.f32.gmra.mrb[0].mxu0 %v2079
    %v2147 = vpop.f32.mrb[0].mxu0
    %v2148 = vadd.f32 0.0, %v2147
    %v2149 = vpop.f32.mrb[0].mxu0
    %2150 = vdwg.mxu0
    %v2151 = vadd.f32 %v2073, %v2148
    %v2152 = vld [vmem:[#allocation2 + $0x26] sm:$0x3]
    %s2153 = scalar_lea.vmem %s3, 304
    %v2154 = vld [vmem:[%s2153] sm:$0xff]
    %v2155 = vld [vmem:[%s2153 + $0x8] sm:$0xff]
    %v2157 = vsel %vm656, %v2152, 0
    %2159 = vmatprep.subr.mxu0 0.0
    %2160 = vmatpush1.msra.mxu0 %v2154
    %2161 = vmatprep.subr.mxu0 0.0
    %2162 = vmatpush1.msra.mxu0 %v2155
    %2163 = vmatprep.subr.mxu0 0.0
    %2164 = vmatpush1.msra.mxu0 0.0
    %2165 = vmatprep.subr.mxu0 0.0
    %2166 = vmatpush1.msra.mxu0 0.0
    %2167 = vmatprep.subr.mxu0 0.0
    %2168 = vmatpush1.msra.mxu0 0.0
    %2169 = vmatprep.subr.mxu0 0.0
    %2170 = vmatpush1.msra.mxu0 0.0
    %2171 = vmatprep.subr.mxu0 0.0
    %2172 = vmatpush1.msra.mxu0 0.0
    %2173 = vmatprep.subr.mxu0 0.0
    %2174 = vmatpush1.msra.mxu0 0.0
    %2175 = vmatprep.subr.mxu0 0.0
    %2176 = vmatpush1.msra.mxu0 0.0
    %2177 = vmatprep.subr.mxu0 0.0
    %2178 = vmatpush1.msra.mxu0 0.0
    %2179 = vmatprep.subr.mxu0 0.0
    %2180 = vmatpush1.msra.mxu0 0.0
    %2181 = vmatprep.subr.mxu0 0.0
    %2182 = vmatpush1.msra.mxu0 0.0
    %2183 = vmatprep.subr.mxu0 0.0
    %2184 = vmatpush1.msra.mxu0 0.0
    %2185 = vmatprep.subr.mxu0 0.0
    %2186 = vmatpush1.msra.mxu0 0.0
    %2187 = vmatprep.subr.mxu0 0.0
    %2188 = vmatpush1.msra.mxu0 0.0
    %2189 = vmatprep.subr.mxu0 0.0
    %2190 = vmatpush1.msra.mxu0 0.0
    %2191 = vmatprep.subr.mxu0 0.0
    %2192 = vmatpush1.msra.mxu0 0.0
    %2193 = vmatprep.subr.mxu0 0.0
    %2194 = vmatpush1.msra.mxu0 0.0
    %2195 = vmatprep.subr.mxu0 0.0
    %2196 = vmatpush1.msra.mxu0 0.0
    %2197 = vmatprep.subr.mxu0 0.0
    %2198 = vmatpush1.msra.mxu0 0.0
    %2199 = vmatprep.subr.mxu0 0.0
    %2200 = vmatpush1.msra.mxu0 0.0
    %2201 = vmatprep.subr.mxu0 0.0
    %2202 = vmatpush1.msra.mxu0 0.0
    %2203 = vmatprep.subr.mxu0 0.0
    %2204 = vmatpush1.msra.mxu0 0.0
    %2205 = vmatprep.subr.mxu0 0.0
    %2206 = vmatpush1.msra.mxu0 0.0
    %2207 = vmatprep.subr.mxu0 0.0
    %2208 = vmatpush1.msra.mxu0 0.0
    %2209 = vmatprep.subr.mxu0 0.0
    %2210 = vmatpush1.msra.mxu0 0.0
    %2211 = vmatprep.subr.mxu0 0.0
    %2212 = vmatpush1.msra.mxu0 0.0
    %2213 = vmatprep.subr.mxu0 0.0
    %2214 = vmatpush1.msra.mxu0 0.0
    %2215 = vmatprep.subr.mxu0 0.0
    %2216 = vmatpush1.msra.mxu0 0.0
    %2217 = vmatprep.subr.mxu0 0.0
    %2218 = vmatpush1.msra.mxu0 0.0
    %2219 = vmatprep.subr.mxu0 0.0
    %2220 = vmatpush1.msra.mxu0 0.0
    %2221 = vmatprep.subr.mxu0 0.0
    %2222 = vmatpush1.msra.mxu0 0.0
    %2223 = vmatprep.mubr.f32.mxu0 0.0
    %2224 = vmatmul.mubr.f32.gmra.mrb[0].mxu0 %v2157
    %v2225 = vpop.f32.mrb[0].mxu0
    %v2226 = vadd.f32 0.0, %v2225
    %v2227 = vpop.f32.mrb[0].mxu0
    %2228 = vdwg.mxu0
    %v2229 = vadd.f32 %v2151, %v2226
    %v2230 = vld [vmem:[#allocation2 + $0x28] sm:$0x3]
    %s2231 = scalar_lea.vmem %s3, 320
    %v2232 = vld [vmem:[%s2231] sm:$0xff]
    %v2233 = vld [vmem:[%s2231 + $0x8] sm:$0xff]
    %v2235 = vsel %vm656, %v2230, 0
    %2237 = vmatprep.subr.mxu0 0.0
    %2238 = vmatpush1.msra.mxu0 %v2232
    %2239 = vmatprep.subr.mxu0 0.0
    %2240 = vmatpush1.msra.mxu0 %v2233
    %2241 = vmatprep.subr.mxu0 0.0
    %2242 = vmatpush1.msra.mxu0 0.0
    %2243 = vmatprep.subr.mxu0 0.0
    %2244 = vmatpush1.msra.mxu0 0.0
    %2245 = vmatprep.subr.mxu0 0.0
    %2246 = vmatpush1.msra.mxu0 0.0
    %2247 = vmatprep.subr.mxu0 0.0
    %2248 = vmatpush1.msra.mxu0 0.0
    %2249 = vmatprep.subr.mxu0 0.0
    %2250 = vmatpush1.msra.mxu0 0.0
    %2251 = vmatprep.subr.mxu0 0.0
    %2252 = vmatpush1.msra.mxu0 0.0
    %2253 = vmatprep.subr.mxu0 0.0
    %2254 = vmatpush1.msra.mxu0 0.0
    %2255 = vmatprep.subr.mxu0 0.0
    %2256 = vmatpush1.msra.mxu0 0.0
    %2257 = vmatprep.subr.mxu0 0.0
    %2258 = vmatpush1.msra.mxu0 0.0
    %2259 = vmatprep.subr.mxu0 0.0
    %2260 = vmatpush1.msra.mxu0 0.0
    %2261 = vmatprep.subr.mxu0 0.0
    %2262 = vmatpush1.msra.mxu0 0.0
    %2263 = vmatprep.subr.mxu0 0.0
    %2264 = vmatpush1.msra.mxu0 0.0
    %2265 = vmatprep.subr.mxu0 0.0
    %2266 = vmatpush1.msra.mxu0 0.0
    %2267 = vmatprep.subr.mxu0 0.0
    %2268 = vmatpush1.msra.mxu0 0.0
    %2269 = vmatprep.subr.mxu0 0.0
    %2270 = vmatpush1.msra.mxu0 0.0
    %2271 = vmatprep.subr.mxu0 0.0
    %2272 = vmatpush1.msra.mxu0 0.0
    %2273 = vmatprep.subr.mxu0 0.0
    %2274 = vmatpush1.msra.mxu0 0.0
    %2275 = vmatprep.subr.mxu0 0.0
    %2276 = vmatpush1.msra.mxu0 0.0
    %2277 = vmatprep.subr.mxu0 0.0
    %2278 = vmatpush1.msra.mxu0 0.0
    %2279 = vmatprep.subr.mxu0 0.0
    %2280 = vmatpush1.msra.mxu0 0.0
    %2281 = vmatprep.subr.mxu0 0.0
    %2282 = vmatpush1.msra.mxu0 0.0
    %2283 = vmatprep.subr.mxu0 0.0
    %2284 = vmatpush1.msra.mxu0 0.0
    %2285 = vmatprep.subr.mxu0 0.0
    %2286 = vmatpush1.msra.mxu0 0.0
    %2287 = vmatprep.subr.mxu0 0.0
    %2288 = vmatpush1.msra.mxu0 0.0
    %2289 = vmatprep.subr.mxu0 0.0
    %2290 = vmatpush1.msra.mxu0 0.0
    %2291 = vmatprep.subr.mxu0 0.0
    %2292 = vmatpush1.msra.mxu0 0.0
    %2293 = vmatprep.subr.mxu0 0.0
    %2294 = vmatpush1.msra.mxu0 0.0
    %2295 = vmatprep.subr.mxu0 0.0
    %2296 = vmatpush1.msra.mxu0 0.0
    %2297 = vmatprep.subr.mxu0 0.0
    %2298 = vmatpush1.msra.mxu0 0.0
    %2299 = vmatprep.subr.mxu0 0.0
    %2300 = vmatpush1.msra.mxu0 0.0
    %2301 = vmatprep.mubr.f32.mxu0 0.0
    %2302 = vmatmul.mubr.f32.gmra.mrb[0].mxu0 %v2235
    %v2303 = vpop.f32.mrb[0].mxu0
    %v2304 = vadd.f32 0.0, %v2303
    %v2305 = vpop.f32.mrb[0].mxu0
    %2306 = vdwg.mxu0
    %v2307 = vadd.f32 %v2229, %v2304
    %v2308 = vld [vmem:[#allocation2 + $0x2a] sm:$0x3]
    %s2309 = scalar_lea.vmem %s3, 336
    %v2310 = vld [vmem:[%s2309] sm:$0xff]
    %v2311 = vld [vmem:[%s2309 + $0x8] sm:$0xff]
    %v2313 = vsel %vm656, %v2308, 0
    %2315 = vmatprep.subr.mxu0 0.0
    %2316 = vmatpush1.msra.mxu0 %v2310
    %2317 = vmatprep.subr.mxu0 0.0
    %2318 = vmatpush1.msra.mxu0 %v2311
    %2319 = vmatprep.subr.mxu0 0.0
    %2320 = vmatpush1.msra.mxu0 0.0
    %2321 = vmatprep.subr.mxu0 0.0
    %2322 = vmatpush1.msra.mxu0 0.0
    %2323 = vmatprep.subr.mxu0 0.0
    %2324 = vmatpush1.msra.mxu0 0.0
    %2325 = vmatprep.subr.mxu0 0.0
    %2326 = vmatpush1.msra.mxu0 0.0
    %2327 = vmatprep.subr.mxu0 0.0
    %2328 = vmatpush1.msra.mxu0 0.0
    %2329 = vmatprep.subr.mxu0 0.0
    %2330 = vmatpush1.msra.mxu0 0.0
    %2331 = vmatprep.subr.mxu0 0.0
    %2332 = vmatpush1.msra.mxu0 0.0
    %2333 = vmatprep.subr.mxu0 0.0
    %2334 = vmatpush1.msra.mxu0 0.0
    %2335 = vmatprep.subr.mxu0 0.0
    %2336 = vmatpush1.msra.mxu0 0.0
    %2337 = vmatprep.subr.mxu0 0.0
    %2338 = vmatpush1.msra.mxu0 0.0
    %2339 = vmatprep.subr.mxu0 0.0
    %2340 = vmatpush1.msra.mxu0 0.0
    %2341 = vmatprep.subr.mxu0 0.0
    %2342 = vmatpush1.msra.mxu0 0.0
    %2343 = vmatprep.subr.mxu0 0.0
    %2344 = vmatpush1.msra.mxu0 0.0
    %2345 = vmatprep.subr.mxu0 0.0
    %2346 = vmatpush1.msra.mxu0 0.0
    %2347 = vmatprep.subr.mxu0 0.0
    %2348 = vmatpush1.msra.mxu0 0.0
    %2349 = vmatprep.subr.mxu0 0.0
    %2350 = vmatpush1.msra.mxu0 0.0
    %2351 = vmatprep.subr.mxu0 0.0
    %2352 = vmatpush1.msra.mxu0 0.0
    %2353 = vmatprep.subr.mxu0 0.0
    %2354 = vmatpush1.msra.mxu0 0.0
    %2355 = vmatprep.subr.mxu0 0.0
    %2356 = vmatpush1.msra.mxu0 0.0
    %2357 = vmatprep.subr.mxu0 0.0
    %2358 = vmatpush1.msra.mxu0 0.0
    %2359 = vmatprep.subr.mxu0 0.0
    %2360 = vmatpush1.msra.mxu0 0.0
    %2361 = vmatprep.subr.mxu0 0.0
    %2362 = vmatpush1.msra.mxu0 0.0
    %2363 = vmatprep.subr.mxu0 0.0
    %2364 = vmatpush1.msra.mxu0 0.0
    %2365 = vmatprep.subr.mxu0 0.0
    %2366 = vmatpush1.msra.mxu0 0.0
    %2367 = vmatprep.subr.mxu0 0.0
    %2368 = vmatpush1.msra.mxu0 0.0
    %2369 = vmatprep.subr.mxu0 0.0
    %2370 = vmatpush1.msra.mxu0 0.0
    %2371 = vmatprep.subr.mxu0 0.0
    %2372 = vmatpush1.msra.mxu0 0.0
    %2373 = vmatprep.subr.mxu0 0.0
    %2374 = vmatpush1.msra.mxu0 0.0
    %2375 = vmatprep.subr.mxu0 0.0
    %2376 = vmatpush1.msra.mxu0 0.0
    %2377 = vmatprep.subr.mxu0 0.0
    %2378 = vmatpush1.msra.mxu0 0.0
    %2379 = vmatprep.mubr.f32.mxu0 0.0
    %2380 = vmatmul.mubr.f32.gmra.mrb[0].mxu0 %v2313
    %v2381 = vpop.f32.mrb[0].mxu0
    %v2382 = vadd.f32 0.0, %v2381
    %v2383 = vpop.f32.mrb[0].mxu0
    %2384 = vdwg.mxu0
    %v2385 = vadd.f32 %v2307, %v2382
    %v2386 = vld [vmem:[#allocation2 + $0x2c] sm:$0x3]
    %s2387 = scalar_lea.vmem %s3, 352
    %v2388 = vld [vmem:[%s2387] sm:$0xff]
    %v2389 = vld [vmem:[%s2387 + $0x8] sm:$0xff]
    %v2391 = vsel %vm656, %v2386, 0
    %2393 = vmatprep.subr.mxu0 0.0
    %2394 = vmatpush1.msra.mxu0 %v2388
    %2395 = vmatprep.subr.mxu0 0.0
    %2396 = vmatpush1.msra.mxu0 %v2389
    %2397 = vmatprep.subr.mxu0 0.0
    %2398 = vmatpush1.msra.mxu0 0.0
    %2399 = vmatprep.subr.mxu0 0.0
    %2400 = vmatpush1.msra.mxu0 0.0
    %2401 = vmatprep.subr.mxu0 0.0
    %2402 = vmatpush1.msra.mxu0 0.0
    %2403 = vmatprep.subr.mxu0 0.0
    %2404 = vmatpush1.msra.mxu0 0.0
    %2405 = vmatprep.subr.mxu0 0.0
    %2406 = vmatpush1.msra.mxu0 0.0
    %2407 = vmatprep.subr.mxu0 0.0
    %2408 = vmatpush1.msra.mxu0 0.0
    %2409 = vmatprep.subr.mxu0 0.0
    %2410 = vmatpush1.msra.mxu0 0.0
    %2411 = vmatprep.subr.mxu0 0.0
    %2412 = vmatpush1.msra.mxu0 0.0
    %2413 = vmatprep.subr.mxu0 0.0
    %2414 = vmatpush1.msra.mxu0 0.0
    %2415 = vmatprep.subr.mxu0 0.0
    %2416 = vmatpush1.msra.mxu0 0.0
    %2417 = vmatprep.subr.mxu0 0.0
    %2418 = vmatpush1.msra.mxu0 0.0
    %2419 = vmatprep.subr.mxu0 0.0
    %2420 = vmatpush1.msra.mxu0 0.0
    %2421 = vmatprep.subr.mxu0 0.0
    %2422 = vmatpush1.msra.mxu0 0.0
    %2423 = vmatprep.subr.mxu0 0.0
    %2424 = vmatpush1.msra.mxu0 0.0
    %2425 = vmatprep.subr.mxu0 0.0
    %2426 = vmatpush1.msra.mxu0 0.0
    %2427 = vmatprep.subr.mxu0 0.0
    %2428 = vmatpush1.msra.mxu0 0.0
    %2429 = vmatprep.subr.mxu0 0.0
    %2430 = vmatpush1.msra.mxu0 0.0
    %2431 = vmatprep.subr.mxu0 0.0
    %2432 = vmatpush1.msra.mxu0 0.0
    %2433 = vmatprep.subr.mxu0 0.0
    %2434 = vmatpush1.msra.mxu0 0.0
    %2435 = vmatprep.subr.mxu0 0.0
    %2436 = vmatpush1.msra.mxu0 0.0
    %2437 = vmatprep.subr.mxu0 0.0
    %2438 = vmatpush1.msra.mxu0 0.0
    %2439 = vmatprep.subr.mxu0 0.0
    %2440 = vmatpush1.msra.mxu0 0.0
    %2441 = vmatprep.subr.mxu0 0.0
    %2442 = vmatpush1.msra.mxu0 0.0
    %2443 = vmatprep.subr.mxu0 0.0
    %2444 = vmatpush1.msra.mxu0 0.0
    %2445 = vmatprep.subr.mxu0 0.0
    %2446 = vmatpush1.msra.mxu0 0.0
    %2447 = vmatprep.subr.mxu0 0.0
    %2448 = vmatpush1.msra.mxu0 0.0
    %2449 = vmatprep.subr.mxu0 0.0
    %2450 = vmatpush1.msra.mxu0 0.0
    %2451 = vmatprep.subr.mxu0 0.0
    %2452 = vmatpush1.msra.mxu0 0.0
    %2453 = vmatprep.subr.mxu0 0.0
    %2454 = vmatpush1.msra.mxu0 0.0
    %2455 = vmatprep.subr.mxu0 0.0
    %2456 = vmatpush1.msra.mxu0 0.0
    %2457 = vmatprep.mubr.f32.mxu0 0.0
    %2458 = vmatmul.mubr.f32.gmra.mrb[0].mxu0 %v2391
    %v2459 = vpop.f32.mrb[0].mxu0
    %v2460 = vadd.f32 0.0, %v2459
    %v2461 = vpop.f32.mrb[0].mxu0
    %2462 = vdwg.mxu0
    %v2463 = vadd.f32 %v2385, %v2460
    %v2464 = vld [vmem:[#allocation2 + $0x2e] sm:$0x3]
    %s2465 = scalar_lea.vmem %s3, 368
    %v2466 = vld [vmem:[%s2465] sm:$0xff]
    %v2467 = vld [vmem:[%s2465 + $0x8] sm:$0xff]
    %v2469 = vsel %vm656, %v2464, 0
    %2471 = vmatprep.subr.mxu0 0.0
    %2472 = vmatpush1.msra.mxu0 %v2466
    %2473 = vmatprep.subr.mxu0 0.0
    %2474 = vmatpush1.msra.mxu0 %v2467
    %2475 = vmatprep.subr.mxu0 0.0
    %2476 = vmatpush1.msra.mxu0 0.0
    %2477 = vmatprep.subr.mxu0 0.0
    %2478 = vmatpush1.msra.mxu0 0.0
    %2479 = vmatprep.subr.mxu0 0.0
    %2480 = vmatpush1.msra.mxu0 0.0
    %2481 = vmatprep.subr.mxu0 0.0
    %2482 = vmatpush1.msra.mxu0 0.0
    %2483 = vmatprep.subr.mxu0 0.0
    %2484 = vmatpush1.msra.mxu0 0.0
    %2485 = vmatprep.subr.mxu0 0.0
    %2486 = vmatpush1.msra.mxu0 0.0
    %2487 = vmatprep.subr.mxu0 0.0
    %2488 = vmatpush1.msra.mxu0 0.0
    %2489 = vmatprep.subr.mxu0 0.0
    %2490 = vmatpush1.msra.mxu0 0.0
    %2491 = vmatprep.subr.mxu0 0.0
    %2492 = vmatpush1.msra.mxu0 0.0
    %2493 = vmatprep.subr.mxu0 0.0
    %2494 = vmatpush1.msra.mxu0 0.0
    %2495 = vmatprep.subr.mxu0 0.0
    %2496 = vmatpush1.msra.mxu0 0.0
    %2497 = vmatprep.subr.mxu0 0.0
    %2498 = vmatpush1.msra.mxu0 0.0
    %2499 = vmatprep.subr.mxu0 0.0
    %2500 = vmatpush1.msra.mxu0 0.0
    %2501 = vmatprep.subr.mxu0 0.0
    %2502 = vmatpush1.msra.mxu0 0.0
    %2503 = vmatprep.subr.mxu0 0.0
    %2504 = vmatpush1.msra.mxu0 0.0
    %2505 = vmatprep.subr.mxu0 0.0
    %2506 = vmatpush1.msra.mxu0 0.0
    %2507 = vmatprep.subr.mxu0 0.0
    %2508 = vmatpush1.msra.mxu0 0.0
    %2509 = vmatprep.subr.mxu0 0.0
    %2510 = vmatpush1.msra.mxu0 0.0
    %2511 = vmatprep.subr.mxu0 0.0
    %2512 = vmatpush1.msra.mxu0 0.0
    %2513 = vmatprep.subr.mxu0 0.0
    %2514 = vmatpush1.msra.mxu0 0.0
    %2515 = vmatprep.subr.mxu0 0.0
    %2516 = vmatpush1.msra.mxu0 0.0
    %2517 = vmatprep.subr.mxu0 0.0
    %2518 = vmatpush1.msra.mxu0 0.0
    %2519 = vmatprep.subr.mxu0 0.0
    %2520 = vmatpush1.msra.mxu0 0.0
    %2521 = vmatprep.subr.mxu0 0.0
    %2522 = vmatpush1.msra.mxu0 0.0
    %2523 = vmatprep.subr.mxu0 0.0
    %2524 = vmatpush1.msra.mxu0 0.0
    %2525 = vmatprep.subr.mxu0 0.0
    %2526 = vmatpush1.msra.mxu0 0.0
    %2527 = vmatprep.subr.mxu0 0.0
    %2528 = vmatpush1.msra.mxu0 0.0
    %2529 = vmatprep.subr.mxu0 0.0
    %2530 = vmatpush1.msra.mxu0 0.0
    %2531 = vmatprep.subr.mxu0 0.0
    %2532 = vmatpush1.msra.mxu0 0.0
    %2533 = vmatprep.subr.mxu0 0.0
    %2534 = vmatpush1.msra.mxu0 0.0
    %2535 = vmatprep.mubr.f32.mxu0 0.0
    %2536 = vmatmul.mubr.f32.gmra.mrb[0].mxu0 %v2469
    %v2537 = vpop.f32.mrb[0].mxu0
    %v2538 = vadd.f32 0.0, %v2537
    %v2539 = vpop.f32.mrb[0].mxu0
    %2540 = vdwg.mxu0
    %v2541 = vadd.f32 %v2463, %v2538
    %v2542 = vld [vmem:[#allocation2 + $0x30] sm:$0x3]
    %s2543 = scalar_lea.vmem %s3, 384
    %v2544 = vld [vmem:[%s2543] sm:$0xff]
    %v2545 = vld [vmem:[%s2543 + $0x8] sm:$0xff]
    %v2547 = vsel %vm656, %v2542, 0
    %2549 = vmatprep.subr.mxu0 0.0
    %2550 = vmatpush1.msra.mxu0 %v2544
    %2551 = vmatprep.subr.mxu0 0.0
    %2552 = vmatpush1.msra.mxu0 %v2545
    %2553 = vmatprep.subr.mxu0 0.0
    %2554 = vmatpush1.msra.mxu0 0.0
    %2555 = vmatprep.subr.mxu0 0.0
    %2556 = vmatpush1.msra.mxu0 0.0
    %2557 = vmatprep.subr.mxu0 0.0
    %2558 = vmatpush1.msra.mxu0 0.0
    %2559 = vmatprep.subr.mxu0 0.0
    %2560 = vmatpush1.msra.mxu0 0.0
    %2561 = vmatprep.subr.mxu0 0.0
    %2562 = vmatpush1.msra.mxu0 0.0
    %2563 = vmatprep.subr.mxu0 0.0
    %2564 = vmatpush1.msra.mxu0 0.0
    %2565 = vmatprep.subr.mxu0 0.0
    %2566 = vmatpush1.msra.mxu0 0.0
    %2567 = vmatprep.subr.mxu0 0.0
    %2568 = vmatpush1.msra.mxu0 0.0
    %2569 = vmatprep.subr.mxu0 0.0
    %2570 = vmatpush1.msra.mxu0 0.0
    %2571 = vmatprep.subr.mxu0 0.0
    %2572 = vmatpush1.msra.mxu0 0.0
    %2573 = vmatprep.subr.mxu0 0.0
    %2574 = vmatpush1.msra.mxu0 0.0
    %2575 = vmatprep.subr.mxu0 0.0
    %2576 = vmatpush1.msra.mxu0 0.0
    %2577 = vmatprep.subr.mxu0 0.0
    %2578 = vmatpush1.msra.mxu0 0.0
    %2579 = vmatprep.subr.mxu0 0.0
    %2580 = vmatpush1.msra.mxu0 0.0
    %2581 = vmatprep.subr.mxu0 0.0
    %2582 = vmatpush1.msra.mxu0 0.0
    %2583 = vmatprep.subr.mxu0 0.0
    %2584 = vmatpush1.msra.mxu0 0.0
    %2585 = vmatprep.subr.mxu0 0.0
    %2586 = vmatpush1.msra.mxu0 0.0
    %2587 = vmatprep.subr.mxu0 0.0
    %2588 = vmatpush1.msra.mxu0 0.0
    %2589 = vmatprep.subr.mxu0 0.0
    %2590 = vmatpush1.msra.mxu0 0.0
    %2591 = vmatprep.subr.mxu0 0.0
    %2592 = vmatpush1.msra.mxu0 0.0
    %2593 = vmatprep.subr.mxu0 0.0
    %2594 = vmatpush1.msra.mxu0 0.0
    %2595 = vmatprep.subr.mxu0 0.0
    %2596 = vmatpush1.msra.mxu0 0.0
    %2597 = vmatprep.subr.mxu0 0.0
    %2598 = vmatpush1.msra.mxu0 0.0
    %2599 = vmatprep.subr.mxu0 0.0
    %2600 = vmatpush1.msra.mxu0 0.0
    %2601 = vmatprep.subr.mxu0 0.0
    %2602 = vmatpush1.msra.mxu0 0.0
    %2603 = vmatprep.subr.mxu0 0.0
    %2604 = vmatpush1.msra.mxu0 0.0
    %2605 = vmatprep.subr.mxu0 0.0
    %2606 = vmatpush1.msra.mxu0 0.0
    %2607 = vmatprep.subr.mxu0 0.0
    %2608 = vmatpush1.msra.mxu0 0.0
    %2609 = vmatprep.subr.mxu0 0.0
    %2610 = vmatpush1.msra.mxu0 0.0
    %2611 = vmatprep.subr.mxu0 0.0
    %2612 = vmatpush1.msra.mxu0 0.0
    %2613 = vmatprep.mubr.f32.mxu0 0.0
    %2614 = vmatmul.mubr.f32.gmra.mrb[0].mxu0 %v2547
    %v2615 = vpop.f32.mrb[0].mxu0
    %v2616 = vadd.f32 0.0, %v2615
    %v2617 = vpop.f32.mrb[0].mxu0
    %2618 = vdwg.mxu0
    %v2619 = vadd.f32 %v2541, %v2616
    %v2620 = vmax.f32 %v2619, 0.0
    %v2621 = vld [vmem:[%s5] sm:$0xff]
    %v2622 = vld [vmem:[%s5 + $0x8] sm:$0xff]
    %v2623 = vld [vmem:[%s5 + $0x10] sm:$0xff]
    %v2624 = vld [vmem:[%s5 + $0x18] sm:$0xff]
    %v2625 = vld [vmem:[%s5 + $0x20] sm:$0xff]
    %v2626 = vld [vmem:[%s5 + $0x28] sm:$0xff]
    %v2627 = vld [vmem:[%s5 + $0x30] sm:$0xff]
    %v2628 = vld [vmem:[%s5 + $0x38] sm:$0xff]
    %v2629 = vld [vmem:[%s5 + $0x40] sm:$0xff]
    %v2630 = vld [vmem:[%s5 + $0x48] sm:$0xff]
    %v2631 = vld [vmem:[%s5 + $0x50] sm:$0xff]
    %v2632 = vld [vmem:[%s5 + $0x58] sm:$0xff]
    %v2633 = vld [vmem:[%s5 + $0x60] sm:$0xff]
    %v2634 = vld [vmem:[%s5 + $0x68] sm:$0xff]
    %v2635 = vld [vmem:[%s5 + $0x70] sm:$0xff]
    %v2636 = vld [vmem:[%s6] sm:$0x1]
    %v2638 = vlaneseq
    %v2639 = vshrl.u32 %v2638, 7
    %v2640 = vsub.s32 0, %v2639
    %v2641 = vrot.slane %v2636, %v2640
    %vm2643 = vcmask 982016
    %v2645 = vsel %vm2643, %v2620, 0
    %2647 = vmatprep.subr.mxu0 0.0
    %2648 = vmatpush1.msra.mxu0 %v2621
    %2649 = vmatprep.subr.mxu0 0.0
    %2650 = vmatpush1.msra.mxu0 %v2622
    %2651 = vmatprep.subr.mxu0 0.0
    %2652 = vmatpush1.msra.mxu0 %v2623
    %2653 = vmatprep.subr.mxu0 0.0
    %2654 = vmatpush1.msra.mxu0 %v2624
    %2655 = vmatprep.subr.mxu0 0.0
    %2656 = vmatpush1.msra.mxu0 %v2625
    %2657 = vmatprep.subr.mxu0 0.0
    %2658 = vmatpush1.msra.mxu0 %v2626
    %2659 = vmatprep.subr.mxu0 0.0
    %2660 = vmatpush1.msra.mxu0 %v2627
    %2661 = vmatprep.subr.mxu0 0.0
    %2662 = vmatpush1.msra.mxu0 %v2628
    %2663 = vmatprep.subr.mxu0 0.0
    %2664 = vmatpush1.msra.mxu0 %v2629
    %2665 = vmatprep.subr.mxu0 0.0
    %2666 = vmatpush1.msra.mxu0 %v2630
    %2667 = vmatprep.subr.mxu0 0.0
    %2668 = vmatpush1.msra.mxu0 %v2631
    %2669 = vmatprep.subr.mxu0 0.0
    %2670 = vmatpush1.msra.mxu0 %v2632
    %2671 = vmatprep.subr.mxu0 0.0
    %2672 = vmatpush1.msra.mxu0 %v2633
    %2673 = vmatprep.subr.mxu0 0.0
    %2674 = vmatpush1.msra.mxu0 %v2634
    %2675 = vmatprep.subr.mxu0 0.0
    %2676 = vmatpush1.msra.mxu0 %v2635
    %2677 = vmatprep.subr.mxu0 0.0
    %2678 = vmatpush1.msra.mxu0 0.0
    %2679 = vmatprep.subr.mxu0 0.0
    %2680 = vmatpush1.msra.mxu0 0.0
    %2681 = vmatprep.subr.mxu0 0.0
    %2682 = vmatpush1.msra.mxu0 0.0
    %2683 = vmatprep.subr.mxu0 0.0
    %2684 = vmatpush1.msra.mxu0 0.0
    %2685 = vmatprep.subr.mxu0 0.0
    %2686 = vmatpush1.msra.mxu0 0.0
    %2687 = vmatprep.subr.mxu0 0.0
    %2688 = vmatpush1.msra.mxu0 0.0
    %2689 = vmatprep.subr.mxu0 0.0
    %2690 = vmatpush1.msra.mxu0 0.0
    %2691 = vmatprep.subr.mxu0 0.0
    %2692 = vmatpush1.msra.mxu0 0.0
    %2693 = vmatprep.subr.mxu0 0.0
    %2694 = vmatpush1.msra.mxu0 0.0
    %2695 = vmatprep.subr.mxu0 0.0
    %2696 = vmatpush1.msra.mxu0 0.0
    %2697 = vmatprep.subr.mxu0 0.0
    %2698 = vmatpush1.msra.mxu0 0.0
    %2699 = vmatprep.subr.mxu0 0.0
    %2700 = vmatpush1.msra.mxu0 0.0
    %2701 = vmatprep.subr.mxu0 0.0
    %2702 = vmatpush1.msra.mxu0 0.0
    %2703 = vmatprep.subr.mxu0 0.0
    %2704 = vmatpush1.msra.mxu0 0.0
    %2705 = vmatprep.subr.mxu0 0.0
    %2706 = vmatpush1.msra.mxu0 0.0
    %2707 = vmatprep.subr.mxu0 0.0
    %2708 = vmatpush1.msra.mxu0 0.0
    %2709 = vmatprep.subr.mxu0 0.0
    %2710 = vmatpush1.msra.mxu0 0.0
    %2711 = vmatprep.mubr.f32.mxu0 0.0
    %2712 = vmatmul.mubr.f32.gmra.mrb[0].mxu0 %v2645
    %v2713 = vpop.f32.mrb[0].mxu0
    %v2714 = vadd.f32 %v2641, %v2713
    %v2715 = vpop.f32.mrb[0].mxu0
    %2716 = vdwg.mxu0
    %v2717 = vmax.f32 %v2714, 0.0
    %v2718 = vld [vmem:[%s7] sm:$0xff]
    %v2719 = vld [vmem:[%s7 + $0x8] sm:$0xff]
    %v2720 = vld [vmem:[%s7 + $0x10] sm:$0xff]
    %v2721 = vld [vmem:[%s7 + $0x18] sm:$0xff]
    %v2722 = vld [vmem:[%s7 + $0x20] sm:$0xff]
    %v2723 = vld [vmem:[%s7 + $0x28] sm:$0xff]
    %v2724 = vld [vmem:[%s7 + $0x30] sm:$0xff]
    %v2725 = vld [vmem:[%s7 + $0x38] sm:$0xff]
    %v2726 = vld [vmem:[%s7 + $0x40] sm:$0xff]
    %v2727 = vld [vmem:[%s7 + $0x48] sm:$0xff]
    %v2728 = vld [vmem:[%s7 + $0x50] sm:$0xf]
    %v2729 = vld [vmem:[%s8] sm:$0x1]
    %v2731 = vlaneseq
    %v2732 = vshrl.u32 %v2731, 7
    %v2733 = vsub.s32 0, %v2732
    %v2734 = vrot.slane %v2729, %v2733
    %vm2736 = vcmask 687104
    %v2738 = vsel %vm2736, %v2717, 0
    %vm2740 = vcmask 1043456
    %v2742 = vsel %vm2740, %v2728, 0
    %2744 = vmatprep.subr.mxu0 0.0
    %2745 = vmatpush1.msra.mxu0 %v2718
    %2746 = vmatprep.subr.mxu0 0.0
    %2747 = vmatpush1.msra.mxu0 %v2719
    %2748 = vmatprep.subr.mxu0 0.0
    %2749 = vmatpush1.msra.mxu0 %v2720
    %2750 = vmatprep.subr.mxu0 0.0
    %2751 = vmatpush1.msra.mxu0 %v2721
    %2752 = vmatprep.subr.mxu0 0.0
    %2753 = vmatpush1.msra.mxu0 %v2722
    %2754 = vmatprep.subr.mxu0 0.0
    %2755 = vmatpush1.msra.mxu0 %v2723
    %2756 = vmatprep.subr.mxu0 0.0
    %2757 = vmatpush1.msra.mxu0 %v2724
    %2758 = vmatprep.subr.mxu0 0.0
    %2759 = vmatpush1.msra.mxu0 %v2725
    %2760 = vmatprep.subr.mxu0 0.0
    %2761 = vmatpush1.msra.mxu0 %v2726
    %2762 = vmatprep.subr.mxu0 0.0
    %2763 = vmatpush1.msra.mxu0 %v2727
    %2764 = vmatprep.subr.mxu0 0.0
    %2765 = vmatpush1.msra.mxu0 %v2742
    %2766 = vmatprep.subr.mxu0 0.0
    %2767 = vmatpush1.msra.mxu0 0.0
    %2768 = vmatprep.subr.mxu0 0.0
    %2769 = vmatpush1.msra.mxu0 0.0
    %2770 = vmatprep.subr.mxu0 0.0
    %2771 = vmatpush1.msra.mxu0 0.0
    %2772 = vmatprep.subr.mxu0 0.0
    %2773 = vmatpush1.msra.mxu0 0.0
    %2774 = vmatprep.subr.mxu0 0.0
    %2775 = vmatpush1.msra.mxu0 0.0
    %2776 = vmatprep.subr.mxu0 0.0
    %2777 = vmatpush1.msra.mxu0 0.0
    %2778 = vmatprep.subr.mxu0 0.0
    %2779 = vmatpush1.msra.mxu0 0.0
    %2780 = vmatprep.subr.mxu0 0.0
    %2781 = vmatpush1.msra.mxu0 0.0
    %2782 = vmatprep.subr.mxu0 0.0
    %2783 = vmatpush1.msra.mxu0 0.0
    %2784 = vmatprep.subr.mxu0 0.0
    %2785 = vmatpush1.msra.mxu0 0.0
    %2786 = vmatprep.subr.mxu0 0.0
    %2787 = vmatpush1.msra.mxu0 0.0
    %2788 = vmatprep.subr.mxu0 0.0
    %2789 = vmatpush1.msra.mxu0 0.0
    %2790 = vmatprep.subr.mxu0 0.0
    %2791 = vmatpush1.msra.mxu0 0.0
    %2792 = vmatprep.subr.mxu0 0.0
    %2793 = vmatpush1.msra.mxu0 0.0
    %2794 = vmatprep.subr.mxu0 0.0
    %2795 = vmatpush1.msra.mxu0 0.0
    %2796 = vmatprep.subr.mxu0 0.0
    %2797 = vmatpush1.msra.mxu0 0.0
    %2798 = vmatprep.subr.mxu0 0.0
    %2799 = vmatpush1.msra.mxu0 0.0
    %2800 = vmatprep.subr.mxu0 0.0
    %2801 = vmatpush1.msra.mxu0 0.0
    %2802 = vmatprep.subr.mxu0 0.0
    %2803 = vmatpush1.msra.mxu0 0.0
    %2804 = vmatprep.subr.mxu0 0.0
    %2805 = vmatpush1.msra.mxu0 0.0
    %2806 = vmatprep.subr.mxu0 0.0
    %2807 = vmatpush1.msra.mxu0 0.0
    %2808 = vmatprep.mubr.f32.mxu0 0.0
    %2809 = vmatmul.mubr.f32.gmra.mrb[0].mxu0 %v2738
    %v2810 = vpop.f32.mrb[0].mxu0
    %v2811 = vadd.f32 %v2734, %v2810
    %v2812 = vpop.f32.mrb[0].mxu0
    %2813 = vdwg.mxu0
    %vm2814 = vcmask 74752
    %2815 = vst.msk [vmem:[#allocation3] sm:$0x3] %vm2814, %v2811
    // Predicated region
    $region38: #{net_forward.3} parent=1 // pred_check
      _
    $region39: #{net_forward.3} parent=1 // pred_check_branch
      %2817 = sbr.rel (0) target = $region41
    $region40: #{net_forward.3} parent=1 // pred_region
      %s2819 = ssub.s32 32, 32
      %2820 = vsyncadd [#allocation4], %s2819
      %s2822 = sshll.u32 [#allocation3], 4
      %s2823 = int_to_ptr.vmem [resolvable:$true] %s2822
      %2825 = dma.vmem_to_hbm [thread:$0]  %s2823, 32, %s9, [#allocation4]
    $region41: #{net_forward.3} parent=1 // pred_fallthru
      _
    // Predicated region
    $region42: #{net_forward.3} parent=1 // pred_check
      _
    $region43: #{net_forward.3} parent=1 // pred_check_branch
      %2827 = sbr.rel (0) target = $region45
    $region44: #{net_forward.3} parent=1 // pred_region
      %2828 = dma.done [#allocation4], 32
    $region45: #{net_forward.3} parent=1 // pred_fallthru
      _
    %2829 = vsyncpa [#allocation4], 1

</llo_original>
